<compile_context>
chip_gen: v7x
topology: tpu7x:2x2x1
jax: 0.10.0
libtpu: 0.0.40
codegen_flags: <defaults>
</compile_context>

<pallas_src>
import functools

import jax
import jax.numpy as jnp
from jax.experimental import pallas as pl
from jax.experimental.pallas import tpu as pltpu

LANE = 128
EXPANSION = 4
_BN_EPS = 1e-5


def _round_up(v, m):
    return (v + m - 1) // m * m


# ---------------------------------------------------------------------------
# Fused bottleneck kernel: one grid step == one image (all layers fused).
# ---------------------------------------------------------------------------
def _bottleneck_kernel(*refs, stride, hs, ws, has_downsample):
    if has_downsample:
        (x_ref, w1_ref, b1_ref, w2_ref, b2_ref, w3_ref, b3_ref,
         wd_ref, bd_ref, out_ref, o1pad_ref, acc_ref) = refs
    else:
        (x_ref, w1_ref, b1_ref, w2_ref, b2_ref, w3_ref, b3_ref,
         out_ref, o1pad_ref, acc_ref) = refs
        wd_ref = bd_ref = None

    n_phase = stride * stride
    m = hs * ws
    pp = o1pad_ref.shape[-1]
    cin_p = x_ref.shape[-1]
    o1dt = o1pad_ref.dtype

    # Re-write only the 1-pixel zero border of the padded o1 scratch (this IS
    # conv2's zero padding).  The interior is fully overwritten by conv1 below,
    # so no full-buffer zeroing pass is needed.
    o1pad_ref[:, 0:1, :, :] = jnp.zeros((n_phase, 1, ws + 2, pp), o1dt)
    o1pad_ref[:, hs + 1:hs + 2, :, :] = jnp.zeros((n_phase, 1, ws + 2, pp), o1dt)
    o1pad_ref[:, :, 0:1, :] = jnp.zeros((n_phase, hs + 2, 1, pp), o1dt)
    o1pad_ref[:, :, ws + 1:ws + 2, :] = jnp.zeros((n_phase, hs + 2, 1, pp), o1dt)

    # --- conv1 (1x1) + bn1 + relu: ONE matmul over all stride phases --------
    a = x_ref[0].reshape(n_phase * m, cin_p)
    h1 = jnp.dot(a, w1_ref[...], preferred_element_type=jnp.float32)
    h1 = jnp.maximum(h1 + b1_ref[...], 0.0).astype(o1dt)
    for p in range(n_phase):
        o1pad_ref[p, 1:hs + 1, 1:ws + 1, :] = (
            h1[p * m:(p + 1) * m].reshape(hs, ws, pp))

    # --- conv2 (3x3, stride, pad 1) + bn2 + relu: 9 matmuls accumulating into
    #     a single f32 VMEM scratch accumulator ------------------------------
    first = True
    for dh in range(3):
        qh, ph = divmod(dh - 1, stride)       # row offset / row phase
        for dw in range(3):
            qw, pw = divmod(dw - 1, stride)   # col offset / col phase
            tap = o1pad_ref[ph * stride + pw,
                            1 + qh:1 + qh + hs,
                            1 + qw:1 + qw + ws, :]
            part = jnp.dot(tap.reshape(m, pp), w2_ref[dh * 3 + dw],
                           preferred_element_type=jnp.float32)
            if first:
                acc_ref[...] = part
                first = False
            else:
                acc_ref[...] += part
    o2 = jnp.maximum(acc_ref[...] + b2_ref[...], 0.0).astype(jnp.bfloat16)

    # --- conv3 (1x1) + bn3 ---------------------------------------------------
    h3 = jnp.dot(o2, w3_ref[...], preferred_element_type=jnp.float32)
    h3 = h3 + b3_ref[...]

    # --- identity path: strided x is exactly phase (0, 0) --------------------
    x0 = x_ref[0, 0].reshape(m, cin_p)
    if has_downsample:
        idn = jnp.dot(x0, wd_ref[...], preferred_element_type=jnp.float32)
        idn = idn + bd_ref[...]
    else:
        idn = x0.astype(jnp.float32)

    out = jnp.maximum(h3 + idn, 0.0)
    out_ref[...] = out.reshape(out_ref.shape).astype(out_ref.dtype)


def _fused_bottleneck_call(x_phases, w1, b1, w2, b2, w3, b3, wd, bd, *, stride):
    n, n_phase, hs, ws, cin_p = x_phases.shape
    pp = w1.shape[1]
    op = w3.shape[1]
    m = hs * ws
    has_downsample = wd is not None

    def resident(arr):
        zeros = (0,) * arr.ndim
        return pl.BlockSpec(arr.shape, lambda i, _z=zeros: _z)

    inputs = [x_phases, w1, b1, w2, b2, w3, b3]
    if has_downsample:
        inputs += [wd, bd]

    in_specs = [pl.BlockSpec((1, n_phase, hs, ws, cin_p),
                             lambda i: (i, 0, 0, 0, 0))]
    in_specs += [resident(a) for a in inputs[1:]]

    kernel = functools.partial(_bottleneck_kernel, stride=stride, hs=hs, ws=ws,
                               has_downsample=has_downsample)

    # Shape-derived VMEM budget: pipeline buffers + scratch + f32 temporaries,
    # with 2x headroom for Mosaic internal scratch, clamped to sane bounds.
    weight_bytes = sum(int(a.size) * int(a.dtype.itemsize) for a in inputs[1:])
    est = (2 * 2 * (n_phase * m * cin_p + m * op)           # bf16 x/out double buffers
           + 2 * weight_bytes                                # double-buffered weights
           + 2 * n_phase * (hs + 2) * (ws + 2) * pp          # bf16 o1pad scratch
           + 4 * m * pp                                      # f32 conv2 accumulator
           + 4 * (n_phase * m * pp + 3 * m * op + m * pp))   # in-flight temporaries
    vmem_limit = int(min(max(2 * est, 32 * 1024 * 1024), 96 * 1024 * 1024))

    return pl.pallas_call(
        kernel,
        out_shape=jax.ShapeDtypeStruct((n, hs, ws, op), jnp.bfloat16),
        grid=(n,),
        in_specs=in_specs,
        out_specs=pl.BlockSpec((1, hs, ws, op), lambda i: (i, 0, 0, 0)),
        scratch_shapes=[
            pltpu.VMEM((n_phase, hs + 2, ws + 2, pp), jnp.bfloat16),
            pltpu.VMEM((m, pp), jnp.float32),
        ],
        compiler_params=pltpu.CompilerParams(
            dimension_semantics=("parallel",),
            vmem_limit_bytes=vmem_limit),
    )(*inputs)


# ---------------------------------------------------------------------------
# One-time weight preparation (hoisted out of the per-forward hot path).
# ---------------------------------------------------------------------------
def prepare_bottleneck_params(params):
    """Fold BN into the conv weights, pad channels to the 128-lane grid and
    cast to bf16.  Call ONCE at model setup; the result is reused every call."""
    planes = params["conv1"].shape[0]
    inplanes = params["conv1"].shape[1]
    out_planes = params["conv3"].shape[0]
    assert out_planes == planes * EXPANSION
    has_downsample = "down_conv4" in params
    if not has_downsample:
        assert inplanes == out_planes, (
            "identity path needs inplanes == expansion*planes without downsample")

    cin_p = _round_up(inplanes, LANE)
    pp = _round_up(planes, LANE)
    op = _round_up(out_planes, LANE)

    def fold_bn(bn):
        gamma, beta, mean, var = bn
        scale = gamma * jax.lax.rsqrt(var + _BN_EPS)
        return scale, beta - mean * scale

    def pad2(mat, rows, cols):
        return jnp.pad(mat, ((0, rows - mat.shape[0]), (0, cols - mat.shape[1])))

    def pad_bias(b, c):
        return jnp.pad(b, (0, c - b.shape[0])).reshape(1, c).astype(jnp.float32)

    prep = {}
    # conv1: (planes, cin, 1, 1) -> (cin_p, pp), BN scale folded into columns.
    sc1, bi1 = fold_bn(params["bn1"])
    prep["w1"] = pad2(params["conv1"][:, :, 0, 0].T * sc1[None, :],
                      cin_p, pp).astype(jnp.bfloat16)
    prep["b1"] = pad_bias(bi1, pp)

    # conv2: (planes, planes, 3, 3) -> 9 tap matrices (9, pp, pp).
    sc2, bi2 = fold_bn(params["bn2"])
    w2 = jnp.transpose(params["conv2"], (2, 3, 1, 0)).reshape(9, planes, planes)
    w2 = w2 * sc2[None, None, :]
    prep["w2"] = jnp.pad(w2, ((0, 0), (0, pp - planes),
                              (0, pp - planes))).astype(jnp.bfloat16)
    prep["b2"] = pad_bias(bi2, pp)

    # conv3: (4p, planes, 1, 1) -> (pp, op).
    sc3, bi3 = fold_bn(params["bn3"])
    prep["w3"] = pad2(params["conv3"][:, :, 0, 0].T * sc3[None, :],
                      pp, op).astype(jnp.bfloat16)
    prep["b3"] = pad_bias(bi3, op)

    if has_downsample:
        scd, bid = fold_bn(params["down_bn4"])
        prep["wd"] = pad2(params["down_conv4"][:, :, 0, 0].T * scd[None, :],
                          cin_p, op).astype(jnp.bfloat16)
        prep["bd"] = pad_bias(bid, op)

    return prep, out_planes


# ---------------------------------------------------------------------------
# Forward wrappers.
# ---------------------------------------------------------------------------
@functools.partial(jax.jit, static_argnames=("stride",))
def bottleneck_apply_nhwc(x_nhwc, prep, *, stride):
    """NHWC bf16 fast path.  Output keeps the lane-padded channel count (the
    padded channels are exactly zero), so successive bottleneck blocks can be
    chained without any layout or padding round-trips."""
    n, h, w, cin = x_nhwc.shape
    assert h % stride == 0 and w % stride == 0, "spatial must be divisible by stride"
    cin_p = prep["w1"].shape[0]

    x = x_nhwc.astype(jnp.bfloat16)
    if cin_p != cin:
        x = jnp.pad(x, ((0, 0), (0, 0), (0, 0), (0, cin_p - cin)))

    s = stride
    hs, ws = h // s, w // s
    if s == 1:
        x_ph = x[:, None]
    else:
        # Phase decomposition: x_ph[n, a*s+b, i, j, c] = x[n, s*i+a, s*j+b, c]
        x_ph = x.reshape(n, hs, s, ws, s, cin_p)
        x_ph = jnp.transpose(x_ph, (0, 2, 4, 1, 3, 5)).reshape(
            n, s * s, hs, ws, cin_p)

    return _fused_bottleneck_call(
        x_ph, prep["w1"], prep["b1"], prep["w2"], prep["b2"],
        prep["w3"], prep["b3"], prep.get("wd"), prep.get("bd"), stride=stride)


def bottleneck_forward_nchw(x_nchw, prep, stride, out_planes):
    """PyTorch-compatible NCHW/f32 interface around the NHWC bf16 fast path."""
    x = jnp.transpose(x_nchw, (0, 2, 3, 1))
    out = bottleneck_apply_nhwc(x, prep, stride=stride)
    out = out[..., :out_planes].astype(jnp.float32)
    return jnp.transpose(out, (0, 3, 1, 2))


# ---------------------------------------------------------------------------
# Parameter init + pure-JAX reference (for a correctness cross-check)
# ---------------------------------------------------------------------------
def init_bottleneck_params(key, inplanes, planes, stride, with_downsample):
    ks = jax.random.split(key, 8)
    out_planes = planes * EXPANSION

    def conv_w(k, cout, cin, kh, kw):
        fan_in = cin * kh * kw
        return jax.random.normal(k, (cout, cin, kh, kw), jnp.float32) / jnp.sqrt(fan_in)

    def bn_p(k, c):
        g = 1.0 + 0.1 * jax.random.normal(k, (c,), jnp.float32)
        b = 0.1 * jax.random.normal(jax.random.fold_in(k, 1), (c,), jnp.float32)
        m = 0.05 * jax.random.normal(jax.random.fold_in(k, 2), (c,), jnp.float32)
        v = jnp.abs(1.0 + 0.1 * jax.random.normal(jax.random.fold_in(k, 3), (c,), jnp.float32))
        return g, b, m, v

    params = {
        "conv1": conv_w(ks[0], planes, inplanes, 1, 1),
        "bn1": bn_p(ks[1], planes),
        "conv2": conv_w(ks[2], planes, planes, 3, 3),
        "bn2": bn_p(ks[3], planes),
        "conv3": conv_w(ks[4], out_planes, planes, 1, 1),
        "bn3": bn_p(ks[5], out_planes),
    }
    if with_downsample:
        params["down_conv4"] = conv_w(ks[6], out_planes, inplanes, 1, 1)
        params["down_bn4"] = bn_p(ks[7], out_planes)
    return params


def _reference_forward(x, params, stride):
    def conv(a, w, s=1, p=0):
        return jax.lax.conv_general_dilated(
            a, w, (s, s), [(p, p), (p, p)],
            dimension_numbers=("NCHW", "OIHW", "NCHW"))

    def bn(a, bnp):
        g, b, m, v = bnp
        sc = g / jnp.sqrt(v + _BN_EPS)
        return a * sc[None, :, None, None] + (b - m * sc)[None, :, None, None]

    out = jax.nn.relu(bn(conv(x, params["conv1"]), params["bn1"]))
    out = jax.nn.relu(bn(conv(out, params["conv2"], stride, 1), params["bn2"]))
    out = bn(conv(out, params["conv3"]), params["bn3"])
    if "down_conv4" in params:
        identity = bn(conv(x, params["down_conv4"], stride), params["down_bn4"])
    else:
        identity = x[:, :, ::stride, ::stride]
    return jax.nn.relu(out + identity)


if __name__ == "__main__":
    key = jax.random.PRNGKey(0)

    def run_case(k, batch, inplanes, planes, spatial, stride, with_downsample):
        k_x, k_p = jax.random.split(k)
        x = jax.random.normal(k_x, (batch, inplanes, spatial, spatial), jnp.float32)
        params = init_bottleneck_params(k_p, inplanes, planes, stride,
                                        with_downsample)
        prep, out_planes = prepare_bottleneck_params(params)

        out = bottleneck_forward_nchw(x, prep, stride, out_planes)
        out = jax.block_until_ready(out)

        expected_shape = (batch, planes * EXPANSION,
                          spatial // stride, spatial // stride)
        assert out.shape == expected_shape, (out.shape, expected_shape)
        assert bool(jnp.all(jnp.isfinite(out)))
        assert bool(jnp.all(out >= 0.0))  # final ReLU

        ref = _reference_forward(x, params, stride)
        max_err = float(jnp.max(jnp.abs(out - ref)))
        tol = 5e-2 * max(1.0, float(jnp.max(jnp.abs(ref))))  # bf16 MXU tolerance
        assert max_err < tol, f"max abs error {max_err} exceeds tolerance {tol}"

    k1, k2 = jax.random.split(key)
    # Stride-2 bottleneck with a 1x1 downsample branch (e.g. stage transition).
    run_case(k1, batch=2, inplanes=8, planes=4, spatial=16, stride=2,
             with_downsample=True)
    # Stride-1 bottleneck with an identity residual (inplanes == 4 * planes).
    run_case(k2, batch=2, inplanes=16, planes=4, spatial=8, stride=1,
             with_downsample=False)

    print("KERNEL_OK")
</pallas_src>

<mosaic_0001>
module attributes {stable_mosaic.version = 11 : i64} {
  func.func @_bottleneck_kernel(%arg0: i32, %arg1: memref<1x4x8x8x128xbf16, #tpu.memory_space<vmem>>, %arg2: memref<128x128xbf16, #tpu.memory_space<vmem>>, %arg3: memref<1x128xf32, #tpu.memory_space<vmem>>, %arg4: memref<9x128x128xbf16, #tpu.memory_space<vmem>>, %arg5: memref<1x128xf32, #tpu.memory_space<vmem>>, %arg6: memref<128x128xbf16, #tpu.memory_space<vmem>>, %arg7: memref<1x128xf32, #tpu.memory_space<vmem>>, %arg8: memref<128x128xbf16, #tpu.memory_space<vmem>>, %arg9: memref<1x128xf32, #tpu.memory_space<vmem>>, %arg10: memref<1x8x8x128xbf16, #tpu.memory_space<vmem>>, %arg11: memref<4x10x10x128xbf16, #tpu.memory_space<vmem>>, %arg12: memref<64x128xf32, #tpu.memory_space<vmem>>) attributes {dimension_semantics = [#tpu.dimension_semantics<parallel>], iteration_bounds = array<i64: 2>, scalar_prefetch = 0 : i64, scratch_operands = 2 : i64, tpu.core_type = #tpu.core_type<tc>, window_params = [{transform_indices = @transform_0, window_bounds = array<i64: 1, 4, 8, 8, 128>}, {pipeline_mode = #tpu.pipeline_mode<synchronous>, transform_indices = @transform_1, window_bounds = array<i64: 128, 128>}, {pipeline_mode = #tpu.pipeline_mode<synchronous>, transform_indices = @transform_2, window_bounds = array<i64: 1, 128>}, {pipeline_mode = #tpu.pipeline_mode<synchronous>, transform_indices = @transform_3, window_bounds = array<i64: 9, 128, 128>}, {pipeline_mode = #tpu.pipeline_mode<synchronous>, transform_indices = @transform_4, window_bounds = array<i64: 1, 128>}, {pipeline_mode = #tpu.pipeline_mode<synchronous>, transform_indices = @transform_5, window_bounds = array<i64: 128, 128>}, {pipeline_mode = #tpu.pipeline_mode<synchronous>, transform_indices = @transform_6, window_bounds = array<i64: 1, 128>}, {pipeline_mode = #tpu.pipeline_mode<synchronous>, transform_indices = @transform_7, window_bounds = array<i64: 128, 128>}, {pipeline_mode = #tpu.pipeline_mode<synchronous>, transform_indices = @transform_8, window_bounds = array<i64: 1, 128>}, {transform_indices = @transform_9, window_bounds = array<i64: 1, 8, 8, 128>}]} {
    %cst = arith.constant 0.000000e+00 : bf16
    %0 = vector.broadcast %cst : bf16 to vector<4x1x10x128xbf16>
    %c0 = arith.constant 0 : index
    %c0_0 = arith.constant 0 : index
    %c0_1 = arith.constant 0 : index
    %c0_2 = arith.constant 0 : index
    %1 = vector.load %arg11[%c0, %c0_0, %c0_1, %c0_2] : memref<4x10x10x128xbf16, #tpu.memory_space<vmem>>, vector<4x1x10x128xbf16>
    tpu.vector_store %arg11[%c0, %c0_0, %c0_1, %c0_2], %0 {strides = array<i32>} : memref<4x10x10x128xbf16, #tpu.memory_space<vmem>>, vector<4x1x10x128xbf16>,
    %cst_3 = arith.constant 0.000000e+00 : bf16
    %2 = vector.broadcast %cst_3 : bf16 to vector<4x1x10x128xbf16>
    %c0_4 = arith.constant 0 : index
    %c9 = arith.constant 9 : index
    %c0_5 = arith.constant 0 : index
    %c0_6 = arith.constant 0 : index
    %3 = vector.load %arg11[%c0_4, %c9, %c0_5, %c0_6] : memref<4x10x10x128xbf16, #tpu.memory_space<vmem>>, vector<4x1x10x128xbf16>
    tpu.vector_store %arg11[%c0_4, %c9, %c0_5, %c0_6], %2 {strides = array<i32>} : memref<4x10x10x128xbf16, #tpu.memory_space<vmem>>, vector<4x1x10x128xbf16>,
    %cst_7 = arith.constant 0.000000e+00 : bf16
    %4 = vector.broadcast %cst_7 : bf16 to vector<4x10x1x128xbf16>
    %c0_8 = arith.constant 0 : index
    %c0_9 = arith.constant 0 : index
    %c0_10 = arith.constant 0 : index
    %c0_11 = arith.constant 0 : index
    %5 = vector.load %arg11[%c0_8, %c0_9, %c0_10, %c0_11] : memref<4x10x10x128xbf16, #tpu.memory_space<vmem>>, vector<4x10x1x128xbf16>
    tpu.vector_store %arg11[%c0_8, %c0_9, %c0_10, %c0_11], %4 {strides = array<i32>} : memref<4x10x10x128xbf16, #tpu.memory_space<vmem>>, vector<4x10x1x128xbf16>,
    %cst_12 = arith.constant 0.000000e+00 : bf16
    %6 = vector.broadcast %cst_12 : bf16 to vector<4x10x1x128xbf16>
    %c0_13 = arith.constant 0 : index
    %c0_14 = arith.constant 0 : index
    %c9_15 = arith.constant 9 : index
    %c0_16 = arith.constant 0 : index
    %7 = vector.load %arg11[%c0_13, %c0_14, %c9_15, %c0_16] : memref<4x10x10x128xbf16, #tpu.memory_space<vmem>>, vector<4x10x1x128xbf16>
    tpu.vector_store %arg11[%c0_13, %c0_14, %c9_15, %c0_16], %6 {strides = array<i32>} : memref<4x10x10x128xbf16, #tpu.memory_space<vmem>>, vector<4x10x1x128xbf16>,
    %c0_17 = arith.constant 0 : index
    %c0_18 = arith.constant 0 : index
    %c0_19 = arith.constant 0 : index
    %c0_20 = arith.constant 0 : index
    %c0_21 = arith.constant 0 : index
    %8 = vector.load %arg1[%c0_17, %c0_18, %c0_19, %c0_20, %c0_21] : memref<1x4x8x8x128xbf16, #tpu.memory_space<vmem>>, vector<1x4x8x8x128xbf16>
    %9 = vector.shape_cast %8 : vector<1x4x8x8x128xbf16> to vector<4x8x8x128xbf16>
    %10 = vector.shape_cast %9 : vector<4x8x8x128xbf16> to vector<256x128xbf16>
    %c0_22 = arith.constant 0 : index
    %c0_23 = arith.constant 0 : index
    %11 = vector.load %arg2[%c0_22, %c0_23] : memref<128x128xbf16, #tpu.memory_space<vmem>>, vector<128x128xbf16>
    %cst_24 = arith.constant dense<0.000000e+00> : vector<256x128xf32>
    %12 = tpu.matmul %10, %11, %cst_24 {dimension_numbers = #tpu.dot_dimension_numbers<[1], [0], [0], [1], [0, 0, 1, 1], [], []>} : vector<256x128xbf16>, vector<128x128xbf16>, vector<256x128xf32> -> vector<256x128xf32>
    %c0_25 = arith.constant 0 : index
    %c0_26 = arith.constant 0 : index
    %13 = vector.load %arg3[%c0_25, %c0_26] : memref<1x128xf32, #tpu.memory_space<vmem>>, vector<1x128xf32>
    %14 = vector.broadcast %13 : vector<1x128xf32> to vector<256x128xf32>
    %15 = arith.addf %12, %14 : vector<256x128xf32>
    %cst_27 = arith.constant 0.000000e+00 : f32
    %16 = vector.broadcast %cst_27 : f32 to vector<256x128xf32>
    %17 = arith.maximumf %15, %16 : vector<256x128xf32>
    %18 = arith.truncf %17 : vector<256x128xf32> to vector<256x128xbf16>
    %19 = vector.extract_strided_slice %18 {offsets = [0, 0], sizes = [64, 128], strides = [1, 1]} : vector<256x128xbf16> to vector<64x128xbf16>
    %20 = vector.shape_cast %19 : vector<64x128xbf16> to vector<8x8x128xbf16>
    %c0_28 = arith.constant 0 : index
    %c1 = arith.constant 1 : index
    %c1_29 = arith.constant 1 : index
    %c0_30 = arith.constant 0 : index
    %21 = vector.load %arg11[%c0_28, %c1, %c1_29, %c0_30] : memref<4x10x10x128xbf16, #tpu.memory_space<vmem>>, vector<1x8x8x128xbf16>
    %22 = vector.shape_cast %21 : vector<1x8x8x128xbf16> to vector<8x8x128xbf16>
    %23 = vector.shape_cast %20 : vector<8x8x128xbf16> to vector<1x8x8x128xbf16>
    tpu.vector_store %arg11[%c0_28, %c1, %c1_29, %c0_30], %23 {strides = array<i32>} : memref<4x10x10x128xbf16, #tpu.memory_space<vmem>>, vector<1x8x8x128xbf16>,
    %24 = vector.extract_strided_slice %18 {offsets = [64, 0], sizes = [64, 128], strides = [1, 1]} : vector<256x128xbf16> to vector<64x128xbf16>
    %25 = vector.shape_cast %24 : vector<64x128xbf16> to vector<8x8x128xbf16>
    %c1_31 = arith.constant 1 : index
    %c1_32 = arith.constant 1 : index
    %c1_33 = arith.constant 1 : index
    %c0_34 = arith.constant 0 : index
    %26 = vector.load %arg11[%c1_31, %c1_32, %c1_33, %c0_34] : memref<4x10x10x128xbf16, #tpu.memory_space<vmem>>, vector<1x8x8x128xbf16>
    %27 = vector.shape_cast %26 : vector<1x8x8x128xbf16> to vector<8x8x128xbf16>
    %28 = vector.shape_cast %25 : vector<8x8x128xbf16> to vector<1x8x8x128xbf16>
    tpu.vector_store %arg11[%c1_31, %c1_32, %c1_33, %c0_34], %28 {strides = array<i32>} : memref<4x10x10x128xbf16, #tpu.memory_space<vmem>>, vector<1x8x8x128xbf16>,
    %29 = vector.extract_strided_slice %18 {offsets = [128, 0], sizes = [64, 128], strides = [1, 1]} : vector<256x128xbf16> to vector<64x128xbf16>
    %30 = vector.shape_cast %29 : vector<64x128xbf16> to vector<8x8x128xbf16>
    %c2 = arith.constant 2 : index
    %c1_35 = arith.constant 1 : index
    %c1_36 = arith.constant 1 : index
    %c0_37 = arith.constant 0 : index
    %31 = vector.load %arg11[%c2, %c1_35, %c1_36, %c0_37] : memref<4x10x10x128xbf16, #tpu.memory_space<vmem>>, vector<1x8x8x128xbf16>
    %32 = vector.shape_cast %31 : vector<1x8x8x128xbf16> to vector<8x8x128xbf16>
    %33 = vector.shape_cast %30 : vector<8x8x128xbf16> to vector<1x8x8x128xbf16>
    tpu.vector_store %arg11[%c2, %c1_35, %c1_36, %c0_37], %33 {strides = array<i32>} : memref<4x10x10x128xbf16, #tpu.memory_space<vmem>>, vector<1x8x8x128xbf16>,
    %34 = vector.extract_strided_slice %18 {offsets = [192, 0], sizes = [64, 128], strides = [1, 1]} : vector<256x128xbf16> to vector<64x128xbf16>
    %35 = vector.shape_cast %34 : vector<64x128xbf16> to vector<8x8x128xbf16>
    %c3 = arith.constant 3 : index
    %c1_38 = arith.constant 1 : index
    %c1_39 = arith.constant 1 : index
    %c0_40 = arith.constant 0 : index
    %36 = vector.load %arg11[%c3, %c1_38, %c1_39, %c0_40] : memref<4x10x10x128xbf16, #tpu.memory_space<vmem>>, vector<1x8x8x128xbf16>
    %37 = vector.shape_cast %36 : vector<1x8x8x128xbf16> to vector<8x8x128xbf16>
    %38 = vector.shape_cast %35 : vector<8x8x128xbf16> to vector<1x8x8x128xbf16>
    tpu.vector_store %arg11[%c3, %c1_38, %c1_39, %c0_40], %38 {strides = array<i32>} : memref<4x10x10x128xbf16, #tpu.memory_space<vmem>>, vector<1x8x8x128xbf16>,
    %c3_41 = arith.constant 3 : index
    %c0_42 = arith.constant 0 : index
    %c0_43 = arith.constant 0 : index
    %c0_44 = arith.constant 0 : index
    %39 = vector.load %arg11[%c3_41, %c0_42, %c0_43, %c0_44] : memref<4x10x10x128xbf16, #tpu.memory_space<vmem>>, vector<1x8x8x128xbf16>
    %40 = vector.shape_cast %39 : vector<1x8x8x128xbf16> to vector<8x8x128xbf16>
    %41 = vector.shape_cast %40 : vector<8x8x128xbf16> to vector<64x128xbf16>
    %c0_45 = arith.constant 0 : index
    %c0_46 = arith.constant 0 : index
    %c0_47 = arith.constant 0 : index
    %42 = vector.load %arg4[%c0_45, %c0_46, %c0_47] : memref<9x128x128xbf16, #tpu.memory_space<vmem>>, vector<1x128x128xbf16>
    %43 = vector.shape_cast %42 : vector<1x128x128xbf16> to vector<128x128xbf16>
    %cst_48 = arith.constant dense<0.000000e+00> : vector<64x128xf32>
    %44 = tpu.matmul %41, %43, %cst_48 {dimension_numbers = #tpu.dot_dimension_numbers<[1], [0], [0], [1], [0, 0, 1, 1], [], []>} : vector<64x128xbf16>, vector<128x128xbf16>, vector<64x128xf32> -> vector<64x128xf32>
    %c0_49 = arith.constant 0 : index
    %c0_50 = arith.constant 0 : index
    %45 = vector.load %arg12[%c0_49, %c0_50] : memref<64x128xf32, #tpu.memory_space<vmem>>, vector<64x128xf32>
    tpu.vector_store %arg12[%c0_49, %c0_50], %44 {strides = array<i32>} : memref<64x128xf32, #tpu.memory_space<vmem>>, vector<64x128xf32>,
    %c2_51 = arith.constant 2 : index
    %c0_52 = arith.constant 0 : index
    %c1_53 = arith.constant 1 : index
    %c0_54 = arith.constant 0 : index
    %46 = vector.load %arg11[%c2_51, %c0_52, %c1_53, %c0_54] : memref<4x10x10x128xbf16, #tpu.memory_space<vmem>>, vector<1x8x8x128xbf16>
    %47 = vector.shape_cast %46 : vector<1x8x8x128xbf16> to vector<8x8x128xbf16>
    %48 = vector.shape_cast %47 : vector<8x8x128xbf16> to vector<64x128xbf16>
    %c1_55 = arith.constant 1 : index
    %c0_56 = arith.constant 0 : index
    %c0_57 = arith.constant 0 : index
    %49 = vector.load %arg4[%c1_55, %c0_56, %c0_57] : memref<9x128x128xbf16, #tpu.memory_space<vmem>>, vector<1x128x128xbf16>
    %50 = vector.shape_cast %49 : vector<1x128x128xbf16> to vector<128x128xbf16>
    %cst_58 = arith.constant dense<0.000000e+00> : vector<64x128xf32>
    %51 = tpu.matmul %48, %50, %cst_58 {dimension_numbers = #tpu.dot_dimension_numbers<[1], [0], [0], [1], [0, 0, 1, 1], [], []>} : vector<64x128xbf16>, vector<128x128xbf16>, vector<64x128xf32> -> vector<64x128xf32>
    %c0_59 = arith.constant 0 : index
    %c0_60 = arith.constant 0 : index
    %52 = vector.load %arg12[%c0_59, %c0_60] : memref<64x128xf32, #tpu.memory_space<vmem>>, vector<64x128xf32>
    %53 = arith.addf %52, %51 : vector<64x128xf32>
    %c0_61 = arith.constant 0 : index
    %c0_62 = arith.constant 0 : index
    %54 = vector.load %arg12[%c0_61, %c0_62] : memref<64x128xf32, #tpu.memory_space<vmem>>, vector<64x128xf32>
    tpu.vector_store %arg12[%c0_61, %c0_62], %53 {strides = array<i32>} : memref<64x128xf32, #tpu.memory_space<vmem>>, vector<64x128xf32>,
    %c3_63 = arith.constant 3 : index
    %c0_64 = arith.constant 0 : index
    %c1_65 = arith.constant 1 : index
    %c0_66 = arith.constant 0 : index
    %55 = vector.load %arg11[%c3_63, %c0_64, %c1_65, %c0_66] : memref<4x10x10x128xbf16, #tpu.memory_space<vmem>>, vector<1x8x8x128xbf16>
    %56 = vector.shape_cast %55 : vector<1x8x8x128xbf16> to vector<8x8x128xbf16>
    %57 = vector.shape_cast %56 : vector<8x8x128xbf16> to vector<64x128xbf16>
    %c2_67 = arith.constant 2 : index
    %c0_68 = arith.constant 0 : index
    %c0_69 = arith.constant 0 : index
    %58 = vector.load %arg4[%c2_67, %c0_68, %c0_69] : memref<9x128x128xbf16, #tpu.memory_space<vmem>>, vector<1x128x128xbf16>
    %59 = vector.shape_cast %58 : vector<1x128x128xbf16> to vector<128x128xbf16>
    %cst_70 = arith.constant dense<0.000000e+00> : vector<64x128xf32>
    %60 = tpu.matmul %57, %59, %cst_70 {dimension_numbers = #tpu.dot_dimension_numbers<[1], [0], [0], [1], [0, 0, 1, 1], [], []>} : vector<64x128xbf16>, vector<128x128xbf16>, vector<64x128xf32> -> vector<64x128xf32>
    %c0_71 = arith.constant 0 : index
    %c0_72 = arith.constant 0 : index
    %61 = vector.load %arg12[%c0_71, %c0_72] : memref<64x128xf32, #tpu.memory_space<vmem>>, vector<64x128xf32>
    %62 = arith.addf %61, %60 : vector<64x128xf32>
    %c0_73 = arith.constant 0 : index
    %c0_74 = arith.constant 0 : index
    %63 = vector.load %arg12[%c0_73, %c0_74] : memref<64x128xf32, #tpu.memory_space<vmem>>, vector<64x128xf32>
    tpu.vector_store %arg12[%c0_73, %c0_74], %62 {strides = array<i32>} : memref<64x128xf32, #tpu.memory_space<vmem>>, vector<64x128xf32>,
    %c1_75 = arith.constant 1 : index
    %c1_76 = arith.constant 1 : index
    %c0_77 = arith.constant 0 : index
    %c0_78 = arith.constant 0 : index
    %64 = vector.load %arg11[%c1_75, %c1_76, %c0_77, %c0_78] : memref<4x10x10x128xbf16, #tpu.memory_space<vmem>>, vector<1x8x8x128xbf16>
    %65 = vector.shape_cast %64 : vector<1x8x8x128xbf16> to vector<8x8x128xbf16>
    %66 = vector.shape_cast %65 : vector<8x8x128xbf16> to vector<64x128xbf16>
    %c3_79 = arith.constant 3 : index
    %c0_80 = arith.constant 0 : index
    %c0_81 = arith.constant 0 : index
    %67 = vector.load %arg4[%c3_79, %c0_80, %c0_81] : memref<9x128x128xbf16, #tpu.memory_space<vmem>>, vector<1x128x128xbf16>
    %68 = vector.shape_cast %67 : vector<1x128x128xbf16> to vector<128x128xbf16>
    %cst_82 = arith.constant dense<0.000000e+00> : vector<64x128xf32>
    %69 = tpu.matmul %66, %68, %cst_82 {dimension_numbers = #tpu.dot_dimension_numbers<[1], [0], [0], [1], [0, 0, 1, 1], [], []>} : vector<64x128xbf16>, vector<128x128xbf16>, vector<64x128xf32> -> vector<64x128xf32>
    %c0_83 = arith.constant 0 : index
    %c0_84 = arith.constant 0 : index
    %70 = vector.load %arg12[%c0_83, %c0_84] : memref<64x128xf32, #tpu.memory_space<vmem>>, vector<64x128xf32>
    %71 = arith.addf %70, %69 : vector<64x128xf32>
    %c0_85 = arith.constant 0 : index
    %c0_86 = arith.constant 0 : index
    %72 = vector.load %arg12[%c0_85, %c0_86] : memref<64x128xf32, #tpu.memory_space<vmem>>, vector<64x128xf32>
    tpu.vector_store %arg12[%c0_85, %c0_86], %71 {strides = array<i32>} : memref<64x128xf32, #tpu.memory_space<vmem>>, vector<64x128xf32>,
    %c0_87 = arith.constant 0 : index
    %c1_88 = arith.constant 1 : index
    %c1_89 = arith.constant 1 : index
    %c0_90 = arith.constant 0 : index
    %73 = vector.load %arg11[%c0_87, %c1_88, %c1_89, %c0_90] : memref<4x10x10x128xbf16, #tpu.memory_space<vmem>>, vector<1x8x8x128xbf16>
    %74 = vector.shape_cast %73 : vector<1x8x8x128xbf16> to vector<8x8x128xbf16>
    %75 = vector.shape_cast %74 : vector<8x8x128xbf16> to vector<64x128xbf16>
    %c4 = arith.constant 4 : index
    %c0_91 = arith.constant 0 : index
    %c0_92 = arith.constant 0 : index
    %76 = vector.load %arg4[%c4, %c0_91, %c0_92] : memref<9x128x128xbf16, #tpu.memory_space<vmem>>, vector<1x128x128xbf16>
    %77 = vector.shape_cast %76 : vector<1x128x128xbf16> to vector<128x128xbf16>
    %cst_93 = arith.constant dense<0.000000e+00> : vector<64x128xf32>
    %78 = tpu.matmul %75, %77, %cst_93 {dimension_numbers = #tpu.dot_dimension_numbers<[1], [0], [0], [1], [0, 0, 1, 1], [], []>} : vector<64x128xbf16>, vector<128x128xbf16>, vector<64x128xf32> -> vector<64x128xf32>
    %c0_94 = arith.constant 0 : index
    %c0_95 = arith.constant 0 : index
    %79 = vector.load %arg12[%c0_94, %c0_95] : memref<64x128xf32, #tpu.memory_space<vmem>>, vector<64x128xf32>
    %80 = arith.addf %79, %78 : vector<64x128xf32>
    %c0_96 = arith.constant 0 : index
    %c0_97 = arith.constant 0 : index
    %81 = vector.load %arg12[%c0_96, %c0_97] : memref<64x128xf32, #tpu.memory_space<vmem>>, vector<64x128xf32>
    tpu.vector_store %arg12[%c0_96, %c0_97], %80 {strides = array<i32>} : memref<64x128xf32, #tpu.memory_space<vmem>>, vector<64x128xf32>,
    %c1_98 = arith.constant 1 : index
    %c1_99 = arith.constant 1 : index
    %c1_100 = arith.constant 1 : index
    %c0_101 = arith.constant 0 : index
    %82 = vector.load %arg11[%c1_98, %c1_99, %c1_100, %c0_101] : memref<4x10x10x128xbf16, #tpu.memory_space<vmem>>, vector<1x8x8x128xbf16>
    %83 = vector.shape_cast %82 : vector<1x8x8x128xbf16> to vector<8x8x128xbf16>
    %84 = vector.shape_cast %83 : vector<8x8x128xbf16> to vector<64x128xbf16>
    %c5 = arith.constant 5 : index
    %c0_102 = arith.constant 0 : index
    %c0_103 = arith.constant 0 : index
    %85 = vector.load %arg4[%c5, %c0_102, %c0_103] : memref<9x128x128xbf16, #tpu.memory_space<vmem>>, vector<1x128x128xbf16>
    %86 = vector.shape_cast %85 : vector<1x128x128xbf16> to vector<128x128xbf16>
    %cst_104 = arith.constant dense<0.000000e+00> : vector<64x128xf32>
    %87 = tpu.matmul %84, %86, %cst_104 {dimension_numbers = #tpu.dot_dimension_numbers<[1], [0], [0], [1], [0, 0, 1, 1], [], []>} : vector<64x128xbf16>, vector<128x128xbf16>, vector<64x128xf32> -> vector<64x128xf32>
    %c0_105 = arith.constant 0 : index
    %c0_106 = arith.constant 0 : index
    %88 = vector.load %arg12[%c0_105, %c0_106] : memref<64x128xf32, #tpu.memory_space<vmem>>, vector<64x128xf32>
    %89 = arith.addf %88, %87 : vector<64x128xf32>
    %c0_107 = arith.constant 0 : index
    %c0_108 = arith.constant 0 : index
    %90 = vector.load %arg12[%c0_107, %c0_108] : memref<64x128xf32, #tpu.memory_space<vmem>>, vector<64x128xf32>
    tpu.vector_store %arg12[%c0_107, %c0_108], %89 {strides = array<i32>} : memref<64x128xf32, #tpu.memory_space<vmem>>, vector<64x128xf32>,
    %c3_109 = arith.constant 3 : index
    %c1_110 = arith.constant 1 : index
    %c0_111 = arith.constant 0 : index
    %c0_112 = arith.constant 0 : index
    %91 = vector.load %arg11[%c3_109, %c1_110, %c0_111, %c0_112] : memref<4x10x10x128xbf16, #tpu.memory_space<vmem>>, vector<1x8x8x128xbf16>
    %92 = vector.shape_cast %91 : vector<1x8x8x128xbf16> to vector<8x8x128xbf16>
    %93 = vector.shape_cast %92 : vector<8x8x128xbf16> to vector<64x128xbf16>
    %c6 = arith.constant 6 : index
    %c0_113 = arith.constant 0 : index
    %c0_114 = arith.constant 0 : index
    %94 = vector.load %arg4[%c6, %c0_113, %c0_114] : memref<9x128x128xbf16, #tpu.memory_space<vmem>>, vector<1x128x128xbf16>
    %95 = vector.shape_cast %94 : vector<1x128x128xbf16> to vector<128x128xbf16>
    %cst_115 = arith.constant dense<0.000000e+00> : vector<64x128xf32>
    %96 = tpu.matmul %93, %95, %cst_115 {dimension_numbers = #tpu.dot_dimension_numbers<[1], [0], [0], [1], [0, 0, 1, 1], [], []>} : vector<64x128xbf16>, vector<128x128xbf16>, vector<64x128xf32> -> vector<64x128xf32>
    %c0_116 = arith.constant 0 : index
    %c0_117 = arith.constant 0 : index
    %97 = vector.load %arg12[%c0_116, %c0_117] : memref<64x128xf32, #tpu.memory_space<vmem>>, vector<64x128xf32>
    %98 = arith.addf %97, %96 : vector<64x128xf32>
    %c0_118 = arith.constant 0 : index
    %c0_119 = arith.constant 0 : index
    %99 = vector.load %arg12[%c0_118, %c0_119] : memref<64x128xf32, #tpu.memory_space<vmem>>, vector<64x128xf32>
    tpu.vector_store %arg12[%c0_118, %c0_119], %98 {strides = array<i32>} : memref<64x128xf32, #tpu.memory_space<vmem>>, vector<64x128xf32>,
    %c2_120 = arith.constant 2 : index
    %c1_121 = arith.constant 1 : index
    %c1_122 = arith.constant 1 : index
    %c0_123 = arith.constant 0 : index
    %100 = vector.load %arg11[%c2_120, %c1_121, %c1_122, %c0_123] : memref<4x10x10x128xbf16, #tpu.memory_space<vmem>>, vector<1x8x8x128xbf16>
    %101 = vector.shape_cast %100 : vector<1x8x8x128xbf16> to vector<8x8x128xbf16>
    %102 = vector.shape_cast %101 : vector<8x8x128xbf16> to vector<64x128xbf16>
    %c7 = arith.constant 7 : index
    %c0_124 = arith.constant 0 : index
    %c0_125 = arith.constant 0 : index
    %103 = vector.load %arg4[%c7, %c0_124, %c0_125] : memref<9x128x128xbf16, #tpu.memory_space<vmem>>, vector<1x128x128xbf16>
    %104 = vector.shape_cast %103 : vector<1x128x128xbf16> to vector<128x128xbf16>
    %cst_126 = arith.constant dense<0.000000e+00> : vector<64x128xf32>
    %105 = tpu.matmul %102, %104, %cst_126 {dimension_numbers = #tpu.dot_dimension_numbers<[1], [0], [0], [1], [0, 0, 1, 1], [], []>} : vector<64x128xbf16>, vector<128x128xbf16>, vector<64x128xf32> -> vector<64x128xf32>
    %c0_127 = arith.constant 0 : index
    %c0_128 = arith.constant 0 : index
    %106 = vector.load %arg12[%c0_127, %c0_128] : memref<64x128xf32, #tpu.memory_space<vmem>>, vector<64x128xf32>
    %107 = arith.addf %106, %105 : vector<64x128xf32>
    %c0_129 = arith.constant 0 : index
    %c0_130 = arith.constant 0 : index
    %108 = vector.load %arg12[%c0_129, %c0_130] : memref<64x128xf32, #tpu.memory_space<vmem>>, vector<64x128xf32>
    tpu.vector_store %arg12[%c0_129, %c0_130], %107 {strides = array<i32>} : memref<64x128xf32, #tpu.memory_space<vmem>>, vector<64x128xf32>,
    %c3_131 = arith.constant 3 : index
    %c1_132 = arith.constant 1 : index
    %c1_133 = arith.constant 1 : index
    %c0_134 = arith.constant 0 : index
    %109 = vector.load %arg11[%c3_131, %c1_132, %c1_133, %c0_134] : memref<4x10x10x128xbf16, #tpu.memory_space<vmem>>, vector<1x8x8x128xbf16>
    %110 = vector.shape_cast %109 : vector<1x8x8x128xbf16> to vector<8x8x128xbf16>
    %111 = vector.shape_cast %110 : vector<8x8x128xbf16> to vector<64x128xbf16>
    %c8 = arith.constant 8 : index
    %c0_135 = arith.constant 0 : index
    %c0_136 = arith.constant 0 : index
    %112 = vector.load %arg4[%c8, %c0_135, %c0_136] : memref<9x128x128xbf16, #tpu.memory_space<vmem>>, vector<1x128x128xbf16>
    %113 = vector.shape_cast %112 : vector<1x128x128xbf16> to vector<128x128xbf16>
    %cst_137 = arith.constant dense<0.000000e+00> : vector<64x128xf32>
    %114 = tpu.matmul %111, %113, %cst_137 {dimension_numbers = #tpu.dot_dimension_numbers<[1], [0], [0], [1], [0, 0, 1, 1], [], []>} : vector<64x128xbf16>, vector<128x128xbf16>, vector<64x128xf32> -> vector<64x128xf32>
    %c0_138 = arith.constant 0 : index
    %c0_139 = arith.constant 0 : index
    %115 = vector.load %arg12[%c0_138, %c0_139] : memref<64x128xf32, #tpu.memory_space<vmem>>, vector<64x128xf32>
    %116 = arith.addf %115, %114 : vector<64x128xf32>
    %c0_140 = arith.constant 0 : index
    %c0_141 = arith.constant 0 : index
    %117 = vector.load %arg12[%c0_140, %c0_141] : memref<64x128xf32, #tpu.memory_space<vmem>>, vector<64x128xf32>
    tpu.vector_store %arg12[%c0_140, %c0_141], %116 {strides = array<i32>} : memref<64x128xf32, #tpu.memory_space<vmem>>, vector<64x128xf32>,
    %c0_142 = arith.constant 0 : index
    %c0_143 = arith.constant 0 : index
    %118 = vector.load %arg12[%c0_142, %c0_143] : memref<64x128xf32, #tpu.memory_space<vmem>>, vector<64x128xf32>
    %c0_144 = arith.constant 0 : index
    %c0_145 = arith.constant 0 : index
    %119 = vector.load %arg5[%c0_144, %c0_145] : memref<1x128xf32, #tpu.memory_space<vmem>>, vector<1x128xf32>
    %120 = vector.broadcast %119 : vector<1x128xf32> to vector<64x128xf32>
    %121 = arith.addf %118, %120 : vector<64x128xf32>
    %cst_146 = arith.constant 0.000000e+00 : f32
    %122 = vector.broadcast %cst_146 : f32 to vector<64x128xf32>
    %123 = arith.maximumf %121, %122 : vector<64x128xf32>
    %124 = arith.truncf %123 : vector<64x128xf32> to vector<64x128xbf16>
    %c0_147 = arith.constant 0 : index
    %c0_148 = arith.constant 0 : index
    %125 = vector.load %arg6[%c0_147, %c0_148] : memref<128x128xbf16, #tpu.memory_space<vmem>>, vector<128x128xbf16>
    %cst_149 = arith.constant dense<0.000000e+00> : vector<64x128xf32>
    %126 = tpu.matmul %124, %125, %cst_149 {dimension_numbers = #tpu.dot_dimension_numbers<[1], [0], [0], [1], [0, 0, 1, 1], [], []>} : vector<64x128xbf16>, vector<128x128xbf16>, vector<64x128xf32> -> vector<64x128xf32>
    %c0_150 = arith.constant 0 : index
    %c0_151 = arith.constant 0 : index
    %127 = vector.load %arg7[%c0_150, %c0_151] : memref<1x128xf32, #tpu.memory_space<vmem>>, vector<1x128xf32>
    %128 = vector.broadcast %127 : vector<1x128xf32> to vector<64x128xf32>
    %129 = arith.addf %126, %128 : vector<64x128xf32>
    %c0_152 = arith.constant 0 : index
    %c0_153 = arith.constant 0 : index
    %c0_154 = arith.constant 0 : index
    %c0_155 = arith.constant 0 : index
    %c0_156 = arith.constant 0 : index
    %130 = vector.load %arg1[%c0_152, %c0_153, %c0_154, %c0_155, %c0_156] : memref<1x4x8x8x128xbf16, #tpu.memory_space<vmem>>, vector<1x1x8x8x128xbf16>
    %131 = vector.shape_cast %130 : vector<1x1x8x8x128xbf16> to vector<8x8x128xbf16>
    %132 = vector.shape_cast %131 : vector<8x8x128xbf16> to vector<64x128xbf16>
    %c0_157 = arith.constant 0 : index
    %c0_158 = arith.constant 0 : index
    %133 = vector.load %arg8[%c0_157, %c0_158] : memref<128x128xbf16, #tpu.memory_space<vmem>>, vector<128x128xbf16>
    %cst_159 = arith.constant dense<0.000000e+00> : vector<64x128xf32>
    %134 = tpu.matmul %132, %133, %cst_159 {dimension_numbers = #tpu.dot_dimension_numbers<[1], [0], [0], [1], [0, 0, 1, 1], [], []>} : vector<64x128xbf16>, vector<128x128xbf16>, vector<64x128xf32> -> vector<64x128xf32>
    %c0_160 = arith.constant 0 : index
    %c0_161 = arith.constant 0 : index
    %135 = vector.load %arg9[%c0_160, %c0_161] : memref<1x128xf32, #tpu.memory_space<vmem>>, vector<1x128xf32>
    %136 = vector.broadcast %135 : vector<1x128xf32> to vector<64x128xf32>
    %137 = arith.addf %134, %136 : vector<64x128xf32>
    %138 = arith.addf %129, %137 : vector<64x128xf32>
    %cst_162 = arith.constant 0.000000e+00 : f32
    %139 = vector.broadcast %cst_162 : f32 to vector<64x128xf32>
    %140 = arith.maximumf %138, %139 : vector<64x128xf32>
    %141 = vector.shape_cast %140 : vector<64x128xf32> to vector<1x8x8x128xf32>
    %142 = arith.truncf %141 : vector<1x8x8x128xf32> to vector<1x8x8x128xbf16>
    %c0_163 = arith.constant 0 : index
    %c0_164 = arith.constant 0 : index
    %c0_165 = arith.constant 0 : index
    %c0_166 = arith.constant 0 : index
    %143 = vector.load %arg10[%c0_163, %c0_164, %c0_165, %c0_166] : memref<1x8x8x128xbf16, #tpu.memory_space<vmem>>, vector<1x8x8x128xbf16>
    tpu.vector_store %arg10[%c0_163, %c0_164, %c0_165, %c0_166], %142 {strides = array<i32>} : memref<1x8x8x128xbf16, #tpu.memory_space<vmem>>, vector<1x8x8x128xbf16>,
    return
  }
  func.func @transform_0(%arg0: i32) -> (i32, i32, i32, i32, i32) {
    %c0_i32 = arith.constant 0 : i32
    %c0_i32_0 = arith.constant 0 : i32
    %c0_i32_1 = arith.constant 0 : i32
    %c0_i32_2 = arith.constant 0 : i32
    %c0_i32_3 = arith.constant 0 : i32
    return %arg0, %c0_i32, %c0_i32_0, %c0_i32_1, %c0_i32_2 : i32, i32, i32, i32, i32
  }
  func.func @transform_1(%arg0: i32) -> (i32, i32) {
    %c0_i32 = arith.constant 0 : i32
    %c0_i32_0 = arith.constant 0 : i32
    %c0_i32_1 = arith.constant 0 : i32
    return %c0_i32, %c0_i32_0 : i32, i32
  }
  func.func @transform_2(%arg0: i32) -> (i32, i32) {
    %c0_i32 = arith.constant 0 : i32
    %c0_i32_0 = arith.constant 0 : i32
    %c0_i32_1 = arith.constant 0 : i32
    return %c0_i32, %c0_i32_0 : i32, i32
  }
  func.func @transform_3(%arg0: i32) -> (i32, i32, i32) {
    %c0_i32 = arith.constant 0 : i32
    %c0_i32_0 = arith.constant 0 : i32
    %c0_i32_1 = arith.constant 0 : i32
    %c0_i32_2 = arith.constant 0 : i32
    return %c0_i32, %c0_i32_0, %c0_i32_1 : i32, i32, i32
  }
  func.func @transform_4(%arg0: i32) -> (i32, i32) {
    %c0_i32 = arith.constant 0 : i32
    %c0_i32_0 = arith.constant 0 : i32
    %c0_i32_1 = arith.constant 0 : i32
    return %c0_i32, %c0_i32_0 : i32, i32
  }
  func.func @transform_5(%arg0: i32) -> (i32, i32) {
    %c0_i32 = arith.constant 0 : i32
    %c0_i32_0 = arith.constant 0 : i32
    %c0_i32_1 = arith.constant 0 : i32
    return %c0_i32, %c0_i32_0 : i32, i32
  }
  func.func @transform_6(%arg0: i32) -> (i32, i32) {
    %c0_i32 = arith.constant 0 : i32
    %c0_i32_0 = arith.constant 0 : i32
    %c0_i32_1 = arith.constant 0 : i32
    return %c0_i32, %c0_i32_0 : i32, i32
  }
  func.func @transform_7(%arg0: i32) -> (i32, i32) {
    %c0_i32 = arith.constant 0 : i32
    %c0_i32_0 = arith.constant 0 : i32
    %c0_i32_1 = arith.constant 0 : i32
    return %c0_i32, %c0_i32_0 : i32, i32
  }
  func.func @transform_8(%arg0: i32) -> (i32, i32) {
    %c0_i32 = arith.constant 0 : i32
    %c0_i32_0 = arith.constant 0 : i32
    %c0_i32_1 = arith.constant 0 : i32
    return %c0_i32, %c0_i32_0 : i32, i32
  }
  func.func @transform_9(%arg0: i32) -> (i32, i32, i32, i32) {
    %c0_i32 = arith.constant 0 : i32
    %c0_i32_0 = arith.constant 0 : i32
    %c0_i32_1 = arith.constant 0 : i32
    %c0_i32_2 = arith.constant 0 : i32
    return %arg0, %c0_i32, %c0_i32_0, %c0_i32_1 : i32, i32, i32, i32
  }
}

</mosaic_0001>

<llo_original>
// kernel: bottleneck_apply_nhwc.1
$region0: #{bottleneck_apply_nhwc.1}
  #allocation0 [shape = 'u32[]', space=smem, size = 0x4, offset = 0x4, fixed_abs, tag = 'smem constant byte address 0x4 - core index']
  #allocation1 [shape = 'u32[144,128]{1,0:T(1,128)}', space=vmem, size = 0x12000, scoped, tag = 'internal scratch']
  #allocation2 [shape = 'bf16[4,10,10,128]{3,2,1,0:T(8,128)(2,1)}', space=vmem, size = 0x28000, scoped, tag = 'scratch operand']
  #allocation3 [shape = 'f32[64,128]{1,0:T(8,128)}', space=vmem, size = 0x8000, scoped, tag = 'scratch operand']
  %s0 = inlined_call_operand.vmem [shape: bf16[2,4,8,8,128], index: 0, kind: input, shape index: {}]
  %s1 = inlined_call_operand.vmem [shape: bf16[128,128], index: 1, kind: input, shape index: {}]
  %s2 = inlined_call_operand.vmem [shape: f32[1,128], index: 2, kind: input, shape index: {}]
  %s3 = inlined_call_operand.vmem [shape: bf16[9,128,128], index: 3, kind: input, shape index: {}]
  %s4 = inlined_call_operand.vmem [shape: f32[1,128], index: 4, kind: input, shape index: {}]
  %s5 = inlined_call_operand.vmem [shape: bf16[128,128], index: 5, kind: input, shape index: {}]
  %s6 = inlined_call_operand.vmem [shape: f32[1,128], index: 6, kind: input, shape index: {}]
  %s7 = inlined_call_operand.vmem [shape: bf16[128,128], index: 7, kind: input, shape index: {}]
  %s8 = inlined_call_operand.vmem [shape: f32[1,128], index: 8, kind: input, shape index: {}]
  %s9 = inlined_call_operand.hbm [shape: bf16[2,8,8,128], index: 9, kind: output, shape index: {}]
  %s10 = sld [smem:[#allocation0]]
  $region69: #{bottleneck_apply_nhwc.1} parent=0
    _
  %s12 = ssub.s32 1, %s10
  %s13 = scalar_select 0, %s12, %s10
  $region1: #{bottleneck_apply_nhwc.1} parent=0
    #allocation4 [shape = 'u8[32768]{0}', space=vmem, size = 0x8000, scoped, tag = 'output window, operand 0']
    #allocation5 [shape = 's32[2]{0}', space=sflag, size = 0x8, scoped, tag = 'scoped memory for bottleneck_apply_nhwc.1']
    %14 = vsyncpa [#allocation5], 0
    %s15 = scalar_lea.sflag [#allocation5], 1
    %16 = vsyncpa %s15, 0
    loop: start=0, step=1, limit=4
    $region2: #{bottleneck_apply_nhwc.1} parent=1 // loop_pre_header
      _
    $region3: #{bottleneck_apply_nhwc.1} parent=1 // loop_header
      %s18 = sphi 0, %s22
      %p19 = scmp.ge.s32.totalorder %s18, 4
      %s28 = sphi 0, %s30
      %s31 = sphi 0, %s28
      %s32 = sphi 0, %s31
      %s48 = sphi 0, %s32
      %s52 = sphi 0, %s52
      %s54 = sphi 0, %s52
      %s55 = sphi 0, %s54
      %s69 = sphi 0, %s55
      %s73 = sphi 0, %s73
      %s75 = sphi 0, %s73
      %s76 = sphi 0, %s75
      %s90 = sphi 0, %s76
      %s94 = sphi 0, %s94
      %s96 = sphi 0, %s94
      %s97 = sphi 0, %s96
      %s111 = sphi 0, %s97
      %s115 = sphi 0, %s115
      %s117 = sphi 0, %s115
      %s118 = sphi 0, %s117
      %s132 = sphi 0, %s118
      %s136 = sphi 0, %s136
      %s138 = sphi 0, %s136
      %s139 = sphi 0, %s138
      %s153 = sphi 0, %s139
      %s157 = sphi 0, %s157
      %s159 = sphi 0, %s157
      %s160 = sphi 0, %s159
      %s174 = sphi 0, %s160
      %s178 = sphi 0, %s178
      %s180 = sphi 0, %s178
      %s181 = sphi 0, %s180
      %s195 = sphi 0, %s181
      %s199 = sphi 0, %s199
      %s201 = sphi 0, %s199
      %s202 = sphi 0, %s201
      %s216 = sphi 0, %s202
      %s222 = sphi 0, %s224
      %s225 = sphi 0, %s222
      %s226 = sphi 0, %s225
      %s242 = sphi 0, %s226
    $region4: #{bottleneck_apply_nhwc.1} parent=1 // loop_header_branch
      %21 = sbr.rel (%p19) target = $region8
    $region5: #{bottleneck_apply_nhwc.1} parent=1 // loop_body
      %s23 = ssub.s32 %s18, 1
      %s24 = ssub.s32 %s18, 2
      %s25 = sadd.s32 %s18, 1
      %s26 = ssub.s32 %s18, %s25
      %p27 = scmp.eq.s32.totalorder %s26, 0
      %s29 = sadd.s32 %s28, 1
      %s30 = scalar_select %p27, %s28, %s29
      %p33 = pneg %p27
      %p34 = scmp.eq.s32.totalorder %s18, 1
      %p35 = por %p33, %p34
      %p36 = scmp.ne.s32.totalorder %s28, %s31
      %p37 = scmp.eq.s32.totalorder %s18, 0
      %p38 = por %p36, %p37
      %p39 = scmp.ne.s32.totalorder %s28, %s31
      %p40 = scmp.eq.s32.totalorder %s23, 1
      %p41 = por %p39, %p40
      %p42 = scmp.ne.s32.totalorder %s31, %s32
      %p43 = scmp.eq.s32.totalorder %s23, 0
      %p44 = por %p42, %p43
      %p45 = scmp.ne.s32.totalorder %s31, %s32
      %p46 = scmp.eq.s32.totalorder %s24, 1
      %p47 = por %p45, %p46
      %p49 = scmp.ne.s32.totalorder %s32, %s48
      %p50 = scmp.eq.s32.totalorder %s24, 0
      %p51 = por %p49, %p50
      %s53 = sadd.s32 %s52, 1
      %p56 = scmp.eq.s32.totalorder %s18, 1
      %p57 = scmp.ne.s32.totalorder %s52, %s54
      %p58 = scmp.eq.s32.totalorder %s18, 0
      %p59 = por %p57, %p58
      %p60 = scmp.ne.s32.totalorder %s52, %s54
      %p61 = scmp.eq.s32.totalorder %s23, 1
      %p62 = por %p60, %p61
      %p63 = scmp.ne.s32.totalorder %s54, %s55
      %p64 = scmp.eq.s32.totalorder %s23, 0
      %p65 = por %p63, %p64
      %p66 = scmp.ne.s32.totalorder %s54, %s55
      %p67 = scmp.eq.s32.totalorder %s24, 1
      %p68 = por %p66, %p67
      %p70 = scmp.ne.s32.totalorder %s55, %s69
      %p71 = scmp.eq.s32.totalorder %s24, 0
      %p72 = por %p70, %p71
      %s74 = sadd.s32 %s73, 1
      %p77 = scmp.eq.s32.totalorder %s18, 1
      %p78 = scmp.ne.s32.totalorder %s73, %s75
      %p79 = scmp.eq.s32.totalorder %s18, 0
      %p80 = por %p78, %p79
      %p81 = scmp.ne.s32.totalorder %s73, %s75
      %p82 = scmp.eq.s32.totalorder %s23, 1
      %p83 = por %p81, %p82
      %p84 = scmp.ne.s32.totalorder %s75, %s76
      %p85 = scmp.eq.s32.totalorder %s23, 0
      %p86 = por %p84, %p85
      %p87 = scmp.ne.s32.totalorder %s75, %s76
      %p88 = scmp.eq.s32.totalorder %s24, 1
      %p89 = por %p87, %p88
      %p91 = scmp.ne.s32.totalorder %s76, %s90
      %p92 = scmp.eq.s32.totalorder %s24, 0
      %p93 = por %p91, %p92
      %s95 = sadd.s32 %s94, 1
      %p98 = scmp.eq.s32.totalorder %s18, 1
      %p99 = scmp.ne.s32.totalorder %s94, %s96
      %p100 = scmp.eq.s32.totalorder %s18, 0
      %p101 = por %p99, %p100
      %p102 = scmp.ne.s32.totalorder %s94, %s96
      %p103 = scmp.eq.s32.totalorder %s23, 1
      %p104 = por %p102, %p103
      %p105 = scmp.ne.s32.totalorder %s96, %s97
      %p106 = scmp.eq.s32.totalorder %s23, 0
      %p107 = por %p105, %p106
      %p108 = scmp.ne.s32.totalorder %s96, %s97
      %p109 = scmp.eq.s32.totalorder %s24, 1
      %p110 = por %p108, %p109
      %p112 = scmp.ne.s32.totalorder %s97, %s111
      %p113 = scmp.eq.s32.totalorder %s24, 0
      %p114 = por %p112, %p113
      %s116 = sadd.s32 %s115, 1
      %p119 = scmp.eq.s32.totalorder %s18, 1
      %p120 = scmp.ne.s32.totalorder %s115, %s117
      %p121 = scmp.eq.s32.totalorder %s18, 0
      %p122 = por %p120, %p121
      %p123 = scmp.ne.s32.totalorder %s115, %s117
      %p124 = scmp.eq.s32.totalorder %s23, 1
      %p125 = por %p123, %p124
      %p126 = scmp.ne.s32.totalorder %s117, %s118
      %p127 = scmp.eq.s32.totalorder %s23, 0
      %p128 = por %p126, %p127
      %p129 = scmp.ne.s32.totalorder %s117, %s118
      %p130 = scmp.eq.s32.totalorder %s24, 1
      %p131 = por %p129, %p130
      %p133 = scmp.ne.s32.totalorder %s118, %s132
      %p134 = scmp.eq.s32.totalorder %s24, 0
      %p135 = por %p133, %p134
      %s137 = sadd.s32 %s136, 1
      %p140 = scmp.eq.s32.totalorder %s18, 1
      %p141 = scmp.ne.s32.totalorder %s136, %s138
      %p142 = scmp.eq.s32.totalorder %s18, 0
      %p143 = por %p141, %p142
      %p144 = scmp.ne.s32.totalorder %s136, %s138
      %p145 = scmp.eq.s32.totalorder %s23, 1
      %p146 = por %p144, %p145
      %p147 = scmp.ne.s32.totalorder %s138, %s139
      %p148 = scmp.eq.s32.totalorder %s23, 0
      %p149 = por %p147, %p148
      %p150 = scmp.ne.s32.totalorder %s138, %s139
      %p151 = scmp.eq.s32.totalorder %s24, 1
      %p152 = por %p150, %p151
      %p154 = scmp.ne.s32.totalorder %s139, %s153
      %p155 = scmp.eq.s32.totalorder %s24, 0
      %p156 = por %p154, %p155
      %s158 = sadd.s32 %s157, 1
      %p161 = scmp.eq.s32.totalorder %s18, 1
      %p162 = scmp.ne.s32.totalorder %s157, %s159
      %p163 = scmp.eq.s32.totalorder %s18, 0
      %p164 = por %p162, %p163
      %p165 = scmp.ne.s32.totalorder %s157, %s159
      %p166 = scmp.eq.s32.totalorder %s23, 1
      %p167 = por %p165, %p166
      %p168 = scmp.ne.s32.totalorder %s159, %s160
      %p169 = scmp.eq.s32.totalorder %s23, 0
      %p170 = por %p168, %p169
      %p171 = scmp.ne.s32.totalorder %s159, %s160
      %p172 = scmp.eq.s32.totalorder %s24, 1
      %p173 = por %p171, %p172
      %p175 = scmp.ne.s32.totalorder %s160, %s174
      %p176 = scmp.eq.s32.totalorder %s24, 0
      %p177 = por %p175, %p176
      %s179 = sadd.s32 %s178, 1
      %p182 = scmp.eq.s32.totalorder %s18, 1
      %p183 = scmp.ne.s32.totalorder %s178, %s180
      %p184 = scmp.eq.s32.totalorder %s18, 0
      %p185 = por %p183, %p184
      %p186 = scmp.ne.s32.totalorder %s178, %s180
      %p187 = scmp.eq.s32.totalorder %s23, 1
      %p188 = por %p186, %p187
      %p189 = scmp.ne.s32.totalorder %s180, %s181
      %p190 = scmp.eq.s32.totalorder %s23, 0
      %p191 = por %p189, %p190
      %p192 = scmp.ne.s32.totalorder %s180, %s181
      %p193 = scmp.eq.s32.totalorder %s24, 1
      %p194 = por %p192, %p193
      %p196 = scmp.ne.s32.totalorder %s181, %s195
      %p197 = scmp.eq.s32.totalorder %s24, 0
      %p198 = por %p196, %p197
      %s200 = sadd.s32 %s199, 1
      %p203 = scmp.eq.s32.totalorder %s18, 1
      %p204 = scmp.ne.s32.totalorder %s199, %s201
      %p205 = scmp.eq.s32.totalorder %s18, 0
      %p206 = por %p204, %p205
      %p207 = scmp.ne.s32.totalorder %s199, %s201
      %p208 = scmp.eq.s32.totalorder %s23, 1
      %p209 = por %p207, %p208
      %p210 = scmp.ne.s32.totalorder %s201, %s202
      %p211 = scmp.eq.s32.totalorder %s23, 0
      %p212 = por %p210, %p211
      %p213 = scmp.ne.s32.totalorder %s201, %s202
      %p214 = scmp.eq.s32.totalorder %s24, 1
      %p215 = por %p213, %p214
      %p217 = scmp.ne.s32.totalorder %s202, %s216
      %p218 = scmp.eq.s32.totalorder %s24, 0
      %p219 = por %p217, %p218
      %s220 = ssub.s32 %s18, %s25
      %p221 = scmp.eq.s32.totalorder %s220, 0
      %s223 = sadd.s32 %s222, 1
      %s224 = scalar_select %p221, %s222, %s223
      %p227 = pneg %p221
      %p228 = scmp.eq.s32.totalorder %s18, 1
      %p229 = por %p227, %p228
      %p230 = scmp.ne.s32.totalorder %s222, %s225
      %p231 = scmp.eq.s32.totalorder %s18, 0
      %p232 = por %p230, %p231
      %p233 = scmp.ne.s32.totalorder %s222, %s225
      %p234 = scmp.eq.s32.totalorder %s23, 1
      %p235 = por %p233, %p234
      %p236 = scmp.ne.s32.totalorder %s225, %s226
      %p237 = scmp.eq.s32.totalorder %s23, 0
      %p238 = por %p236, %p237
      %p239 = scmp.ne.s32.totalorder %s225, %s226
      %p240 = scmp.eq.s32.totalorder %s24, 1
      %p241 = por %p239, %p240
      %p243 = scmp.ne.s32.totalorder %s226, %s242
      %p244 = scmp.eq.s32.totalorder %s24, 0
      %p245 = por %p243, %p244
      %p246 = scmp.le.s32.totalorder 1, %s18
      %p247 = scmp.lt.s32.totalorder %s18, 3
      %p248 = pnand %p246, %p247
      %p249 = pneg %p248
      // Predicated region
      $region9: #{bottleneck_apply_nhwc.1} parent=5 // pred_check
        _
      $region10: #{bottleneck_apply_nhwc.1} parent=5 // pred_check_branch
        %251 = sbr.rel (%p248) target = $region12
      $region11: #{bottleneck_apply_nhwc.1} parent=5 // pred_region
        %s252 = ssub.s32 %s18, 1
        // Predicated region
        $region13: #{bottleneck_apply_nhwc.1} parent=11 // pred_check
          %p253 = pneg %p65
        $region14: #{bottleneck_apply_nhwc.1} parent=11 // pred_check_branch
          %255 = sbr.rel (%p253) target = $region16
        $region15: #{bottleneck_apply_nhwc.1} parent=11 // pred_region
          _
        $region16: #{bottleneck_apply_nhwc.1} parent=11 // pred_fallthru
          _
        // Predicated region
        $region17: #{bottleneck_apply_nhwc.1} parent=11 // pred_check
          %p256 = pneg %p86
        $region18: #{bottleneck_apply_nhwc.1} parent=11 // pred_check_branch
          %258 = sbr.rel (%p256) target = $region20
        $region19: #{bottleneck_apply_nhwc.1} parent=11 // pred_region
          _
        $region20: #{bottleneck_apply_nhwc.1} parent=11 // pred_fallthru
          _
        // Predicated region
        $region21: #{bottleneck_apply_nhwc.1} parent=11 // pred_check
          %p259 = pneg %p107
        $region22: #{bottleneck_apply_nhwc.1} parent=11 // pred_check_branch
          %261 = sbr.rel (%p259) target = $region24
        $region23: #{bottleneck_apply_nhwc.1} parent=11 // pred_region
          _
        $region24: #{bottleneck_apply_nhwc.1} parent=11 // pred_fallthru
          _
        // Predicated region
        $region25: #{bottleneck_apply_nhwc.1} parent=11 // pred_check
          %p262 = pneg %p128
        $region26: #{bottleneck_apply_nhwc.1} parent=11 // pred_check_branch
          %264 = sbr.rel (%p262) target = $region28
        $region27: #{bottleneck_apply_nhwc.1} parent=11 // pred_region
          _
        $region28: #{bottleneck_apply_nhwc.1} parent=11 // pred_fallthru
          _
        // Predicated region
        $region29: #{bottleneck_apply_nhwc.1} parent=11 // pred_check
          %p265 = pneg %p149
        $region30: #{bottleneck_apply_nhwc.1} parent=11 // pred_check_branch
          %267 = sbr.rel (%p265) target = $region32
        $region31: #{bottleneck_apply_nhwc.1} parent=11 // pred_region
          _
        $region32: #{bottleneck_apply_nhwc.1} parent=11 // pred_fallthru
          _
        // Predicated region
        $region33: #{bottleneck_apply_nhwc.1} parent=11 // pred_check
          %p268 = pneg %p170
        $region34: #{bottleneck_apply_nhwc.1} parent=11 // pred_check_branch
          %270 = sbr.rel (%p268) target = $region36
        $region35: #{bottleneck_apply_nhwc.1} parent=11 // pred_region
          _
        $region36: #{bottleneck_apply_nhwc.1} parent=11 // pred_fallthru
          _
        // Predicated region
        $region37: #{bottleneck_apply_nhwc.1} parent=11 // pred_check
          %p271 = pneg %p191
        $region38: #{bottleneck_apply_nhwc.1} parent=11 // pred_check_branch
          %273 = sbr.rel (%p271) target = $region40
        $region39: #{bottleneck_apply_nhwc.1} parent=11 // pred_region
          _
        $region40: #{bottleneck_apply_nhwc.1} parent=11 // pred_fallthru
          _
        // Predicated region
        $region41: #{bottleneck_apply_nhwc.1} parent=11 // pred_check
          %p274 = pneg %p212
        $region42: #{bottleneck_apply_nhwc.1} parent=11 // pred_check_branch
          %276 = sbr.rel (%p274) target = $region44
        $region43: #{bottleneck_apply_nhwc.1} parent=11 // pred_region
          _
        $region44: #{bottleneck_apply_nhwc.1} parent=11 // pred_fallthru
          _
      $region12: #{bottleneck_apply_nhwc.1} parent=5 // pred_fallthru
        _
      %p277 = scmp.lt.s32.totalorder %s18, 2
      // Predicated region
      $region45: #{bottleneck_apply_nhwc.1} parent=5 // pred_check
        %p278 = pneg %p277
      $region46: #{bottleneck_apply_nhwc.1} parent=5 // pred_check_branch
        %280 = sbr.rel (%p278) target = $region48
      $region47: #{bottleneck_apply_nhwc.1} parent=5 // pred_region
        // Predicated region
        $region49: #{bottleneck_apply_nhwc.1} parent=47 // pred_check
          %p281 = pneg %p38
        $region50: #{bottleneck_apply_nhwc.1} parent=47 // pred_check_branch
          %283 = sbr.rel (%p281) target = $region52
        $region51: #{bottleneck_apply_nhwc.1} parent=47 // pred_region
          %p284 = scmp.lt.s32.totalorder %s18, 1
          %s285 = scalar_select %p284, %s18, 1
          %s286 = smul.addr %s285, 32
          %s287 = smul.addr %s286, 4
          %s288 = scalar_lea.vmem %s0, %s287
        $region52: #{bottleneck_apply_nhwc.1} parent=47 // pred_fallthru
          _
      $region48: #{bottleneck_apply_nhwc.1} parent=5 // pred_fallthru
        _
      %p289 = scmp.le.s32.totalorder 1, %s18
      %p290 = scmp.lt.s32.totalorder %s18, 3
      %p291 = pnand %p289, %p290
      %p292 = pneg %p291
      // Predicated region
      $region53: #{bottleneck_apply_nhwc.1} parent=5 // pred_check
        _
      $region54: #{bottleneck_apply_nhwc.1} parent=5 // pred_check_branch
        %294 = sbr.rel (%p291) target = $region56
      $region55: #{bottleneck_apply_nhwc.1} parent=5 // pred_region
        %s295 = ssub.s32 %s18, 1
        %p296 = scmp.lt.s32.totalorder %s23, 1
        %s297 = scalar_select %p296, %s23, 1
        %s298 = smul.addr %s297, 32
        %s299 = smul.addr %s298, 4
        %s300 = scalar_lea.vmem %s0, %s299
        %p301 = pneg %p44
        %p302 = pneg %p41
        %p303 = pneg %p65
        %p304 = pneg %p62
        %p305 = pneg %p86
        %p306 = pneg %p83
        %p307 = pneg %p107
        %p308 = pneg %p104
        %p309 = pneg %p128
        %p310 = pneg %p125
        %p311 = pneg %p149
        %p312 = pneg %p146
        %p313 = pneg %p170
        %p314 = pneg %p167
        %p315 = pneg %p191
        %p316 = pneg %p188
        %p317 = pneg %p212
        %p318 = pneg %p209
        %p319 = pneg %p238
        %p320 = pneg %p235
        %s321 = sand.u32 %s225, 1
        %s322 = scalar_lea.sflag [#allocation5], %s321
        %s323 = sand.u32 %s225, 1
        %s324 = smul.addr %s323, 32
        %s325 = scalar_lea.vmem [#allocation4], %s324
        %p326 = scmp.lt.s32.totalorder %s23, 1
        %s327 = scalar_select %p326, %s23, 1
        %s328 = smul.addr %s327, 32
        %s329 = smul.addr %s328, 4
        %s330 = scalar_lea.vmem %s0, %s329
        %332 = vst [vmem:[#allocation2] sm:$0xf] 0
        %333 = vst [vmem:[#allocation2 + $0x4] sm:$0x1] 0
        %334 = vst [vmem:[#allocation2 + $0x50] sm:$0xf] 0
        %335 = vst [vmem:[#allocation2 + $0x54] sm:$0x1] 0
        %336 = vst [vmem:[#allocation2 + $0xa0] sm:$0xf] 0
        %337 = vst [vmem:[#allocation2 + $0xa4] sm:$0x1] 0
        %338 = vst [vmem:[#allocation2 + $0xf0] sm:$0xf] 0
        %339 = vst [vmem:[#allocation2 + $0xf4] sm:$0x1] 0
        %s340 = scalar_lea.vmem [#allocation2], 72
        %341 = vst [vmem:[%s340] sm:$0xf] 0
        %342 = vst [vmem:[%s340 + $0x4] sm:$0x1] 0
        %343 = vst [vmem:[%s340 + $0x50] sm:$0xf] 0
        %344 = vst [vmem:[%s340 + $0x54] sm:$0x1] 0
        %345 = vst [vmem:[%s340 + $0xa0] sm:$0xf] 0
        %346 = vst [vmem:[%s340 + $0xa4] sm:$0x1] 0
        %347 = vst [vmem:[%s340 + $0xf0] sm:$0xf] 0
        %348 = vst [vmem:[%s340 + $0xf4] sm:$0x1] 0
        %vm349 = vcmask 1040384
        %vm350 = vsmask.f32 256
        %vm351 = vmand %vm349, %vm350
        %v352 = vld [vmem:[#allocation2] sm:$0x1]
        %v353 = vsel %vm351, 0, %v352
        %354 = vst [vmem:[#allocation2] sm:$0x1] %v353
        %v355 = vld [vmem:[#allocation2 + $0x8] sm:$0x1]
        %v356 = vsel %vm351, 0, %v355
        %357 = vst [vmem:[#allocation2 + $0x8] sm:$0x1] %v356
        %v358 = vld [vmem:[#allocation2 + $0x10] sm:$0x1]
        %v359 = vsel %vm351, 0, %v358
        %360 = vst [vmem:[#allocation2 + $0x10] sm:$0x1] %v359
        %v361 = vld [vmem:[#allocation2 + $0x18] sm:$0x1]
        %v362 = vsel %vm351, 0, %v361
        %363 = vst [vmem:[#allocation2 + $0x18] sm:$0x1] %v362
        %v364 = vld [vmem:[#allocation2 + $0x20] sm:$0x1]
        %v365 = vsel %vm351, 0, %v364
        %366 = vst [vmem:[#allocation2 + $0x20] sm:$0x1] %v365
        %v367 = vld [vmem:[#allocation2 + $0x28] sm:$0x1]
        %v368 = vsel %vm351, 0, %v367
        %369 = vst [vmem:[#allocation2 + $0x28] sm:$0x1] %v368
        %v370 = vld [vmem:[#allocation2 + $0x30] sm:$0x1]
        %v371 = vsel %vm351, 0, %v370
        %372 = vst [vmem:[#allocation2 + $0x30] sm:$0x1] %v371
        %v373 = vld [vmem:[#allocation2 + $0x38] sm:$0x1]
        %v374 = vsel %vm351, 0, %v373
        %375 = vst [vmem:[#allocation2 + $0x38] sm:$0x1] %v374
        %v376 = vld [vmem:[#allocation2 + $0x40] sm:$0x1]
        %v377 = vsel %vm351, 0, %v376
        %378 = vst [vmem:[#allocation2 + $0x40] sm:$0x1] %v377
        %v379 = vld [vmem:[#allocation2 + $0x48] sm:$0x1]
        %v380 = vsel %vm351, 0, %v379
        %381 = vst [vmem:[#allocation2 + $0x48] sm:$0x1] %v380
        %v382 = vld [vmem:[#allocation2 + $0x50] sm:$0x1]
        %v383 = vsel %vm351, 0, %v382
        %384 = vst [vmem:[#allocation2 + $0x50] sm:$0x1] %v383
        %v385 = vld [vmem:[#allocation2 + $0x58] sm:$0x1]
        %v386 = vsel %vm351, 0, %v385
        %387 = vst [vmem:[#allocation2 + $0x58] sm:$0x1] %v386
        %v388 = vld [vmem:[#allocation2 + $0x60] sm:$0x1]
        %v389 = vsel %vm351, 0, %v388
        %390 = vst [vmem:[#allocation2 + $0x60] sm:$0x1] %v389
        %v391 = vld [vmem:[#allocation2 + $0x68] sm:$0x1]
        %v392 = vsel %vm351, 0, %v391
        %393 = vst [vmem:[#allocation2 + $0x68] sm:$0x1] %v392
        %v394 = vld [vmem:[#allocation2 + $0x70] sm:$0x1]
        %v395 = vsel %vm351, 0, %v394
        %396 = vst [vmem:[#allocation2 + $0x70] sm:$0x1] %v395
        %v397 = vld [vmem:[#allocation2 + $0x78] sm:$0x1]
        %v398 = vsel %vm351, 0, %v397
        %399 = vst [vmem:[#allocation2 + $0x78] sm:$0x1] %v398
        %v400 = vld [vmem:[#allocation2 + $0x80] sm:$0x1]
        %v401 = vsel %vm351, 0, %v400
        %402 = vst [vmem:[#allocation2 + $0x80] sm:$0x1] %v401
        %v403 = vld [vmem:[#allocation2 + $0x88] sm:$0x1]
        %v404 = vsel %vm351, 0, %v403
        %405 = vst [vmem:[#allocation2 + $0x88] sm:$0x1] %v404
        %v406 = vld [vmem:[#allocation2 + $0x90] sm:$0x1]
        %v407 = vsel %vm351, 0, %v406
        %408 = vst [vmem:[#allocation2 + $0x90] sm:$0x1] %v407
        %v409 = vld [vmem:[#allocation2 + $0x98] sm:$0x1]
        %v410 = vsel %vm351, 0, %v409
        %411 = vst [vmem:[#allocation2 + $0x98] sm:$0x1] %v410
        %v412 = vld [vmem:[#allocation2 + $0xa0] sm:$0x1]
        %v413 = vsel %vm351, 0, %v412
        %414 = vst [vmem:[#allocation2 + $0xa0] sm:$0x1] %v413
        %v415 = vld [vmem:[#allocation2 + $0xa8] sm:$0x1]
        %v416 = vsel %vm351, 0, %v415
        %417 = vst [vmem:[#allocation2 + $0xa8] sm:$0x1] %v416
        %v418 = vld [vmem:[#allocation2 + $0xb0] sm:$0x1]
        %v419 = vsel %vm351, 0, %v418
        %420 = vst [vmem:[#allocation2 + $0xb0] sm:$0x1] %v419
        %v421 = vld [vmem:[#allocation2 + $0xb8] sm:$0x1]
        %v422 = vsel %vm351, 0, %v421
        %423 = vst [vmem:[#allocation2 + $0xb8] sm:$0x1] %v422
        %v424 = vld [vmem:[#allocation2 + $0xc0] sm:$0x1]
        %v425 = vsel %vm351, 0, %v424
        %426 = vst [vmem:[#allocation2 + $0xc0] sm:$0x1] %v425
        %v427 = vld [vmem:[#allocation2 + $0xc8] sm:$0x1]
        %v428 = vsel %vm351, 0, %v427
        %429 = vst [vmem:[#allocation2 + $0xc8] sm:$0x1] %v428
        %v430 = vld [vmem:[#allocation2 + $0xd0] sm:$0x1]
        %v431 = vsel %vm351, 0, %v430
        %432 = vst [vmem:[#allocation2 + $0xd0] sm:$0x1] %v431
        %v433 = vld [vmem:[#allocation2 + $0xd8] sm:$0x1]
        %v434 = vsel %vm351, 0, %v433
        %435 = vst [vmem:[#allocation2 + $0xd8] sm:$0x1] %v434
        %v436 = vld [vmem:[#allocation2 + $0xe0] sm:$0x1]
        %v437 = vsel %vm351, 0, %v436
        %438 = vst [vmem:[#allocation2 + $0xe0] sm:$0x1] %v437
        %v439 = vld [vmem:[#allocation2 + $0xe8] sm:$0x1]
        %v440 = vsel %vm351, 0, %v439
        %441 = vst [vmem:[#allocation2 + $0xe8] sm:$0x1] %v440
        %v442 = vld [vmem:[#allocation2 + $0xf0] sm:$0x1]
        %v443 = vsel %vm351, 0, %v442
        %444 = vst [vmem:[#allocation2 + $0xf0] sm:$0x1] %v443
        %v445 = vld [vmem:[#allocation2 + $0xf8] sm:$0x1]
        %v446 = vsel %vm351, 0, %v445
        %447 = vst [vmem:[#allocation2 + $0xf8] sm:$0x1] %v446
        %v448 = vld [vmem:[#allocation2 + $0x100] sm:$0x1]
        %v449 = vsel %vm351, 0, %v448
        %450 = vst [vmem:[#allocation2 + $0x100] sm:$0x1] %v449
        %v451 = vld [vmem:[#allocation2 + $0x108] sm:$0x1]
        %v452 = vsel %vm351, 0, %v451
        %453 = vst [vmem:[#allocation2 + $0x108] sm:$0x1] %v452
        %v454 = vld [vmem:[#allocation2 + $0x110] sm:$0x1]
        %v455 = vsel %vm351, 0, %v454
        %456 = vst [vmem:[#allocation2 + $0x110] sm:$0x1] %v455
        %v457 = vld [vmem:[#allocation2 + $0x118] sm:$0x1]
        %v458 = vsel %vm351, 0, %v457
        %459 = vst [vmem:[#allocation2 + $0x118] sm:$0x1] %v458
        %v460 = vld [vmem:[#allocation2 + $0x120] sm:$0x1]
        %v461 = vsel %vm351, 0, %v460
        %462 = vst [vmem:[#allocation2 + $0x120] sm:$0x1] %v461
        %v463 = vld [vmem:[#allocation2 + $0x128] sm:$0x1]
        %v464 = vsel %vm351, 0, %v463
        %465 = vst [vmem:[#allocation2 + $0x128] sm:$0x1] %v464
        %v466 = vld [vmem:[#allocation2 + $0x130] sm:$0x1]
        %v467 = vsel %vm351, 0, %v466
        %468 = vst [vmem:[#allocation2 + $0x130] sm:$0x1] %v467
        %v469 = vld [vmem:[#allocation2 + $0x138] sm:$0x1]
        %v470 = vsel %vm351, 0, %v469
        %471 = vst [vmem:[#allocation2 + $0x138] sm:$0x1] %v470
        %vm472 = vsmask.f32 7938
        %vm473 = vmand %vm349, %vm472
        %v474 = vld [vmem:[#allocation2 + $0x4] sm:$0x1]
        %v475 = vsel %vm473, 0, %v474
        %476 = vst [vmem:[#allocation2 + $0x4] sm:$0x1] %v475
        %v477 = vld [vmem:[#allocation2 + $0xc] sm:$0x1]
        %v478 = vsel %vm473, 0, %v477
        %479 = vst [vmem:[#allocation2 + $0xc] sm:$0x1] %v478
        %v480 = vld [vmem:[#allocation2 + $0x14] sm:$0x1]
        %v481 = vsel %vm473, 0, %v480
        %482 = vst [vmem:[#allocation2 + $0x14] sm:$0x1] %v481
        %v483 = vld [vmem:[#allocation2 + $0x1c] sm:$0x1]
        %v484 = vsel %vm473, 0, %v483
        %485 = vst [vmem:[#allocation2 + $0x1c] sm:$0x1] %v484
        %v486 = vld [vmem:[#allocation2 + $0x24] sm:$0x1]
        %v487 = vsel %vm473, 0, %v486
        %488 = vst [vmem:[#allocation2 + $0x24] sm:$0x1] %v487
        %v489 = vld [vmem:[#allocation2 + $0x2c] sm:$0x1]
        %v490 = vsel %vm473, 0, %v489
        %491 = vst [vmem:[#allocation2 + $0x2c] sm:$0x1] %v490
        %v492 = vld [vmem:[#allocation2 + $0x34] sm:$0x1]
        %v493 = vsel %vm473, 0, %v492
        %494 = vst [vmem:[#allocation2 + $0x34] sm:$0x1] %v493
        %v495 = vld [vmem:[#allocation2 + $0x3c] sm:$0x1]
        %v496 = vsel %vm473, 0, %v495
        %497 = vst [vmem:[#allocation2 + $0x3c] sm:$0x1] %v496
        %v498 = vld [vmem:[#allocation2 + $0x44] sm:$0x1]
        %v499 = vsel %vm473, 0, %v498
        %500 = vst [vmem:[#allocation2 + $0x44] sm:$0x1] %v499
        %v501 = vld [vmem:[#allocation2 + $0x4c] sm:$0x1]
        %v502 = vsel %vm473, 0, %v501
        %503 = vst [vmem:[#allocation2 + $0x4c] sm:$0x1] %v502
        %v504 = vld [vmem:[#allocation2 + $0x54] sm:$0x1]
        %v505 = vsel %vm473, 0, %v504
        %506 = vst [vmem:[#allocation2 + $0x54] sm:$0x1] %v505
        %v507 = vld [vmem:[#allocation2 + $0x5c] sm:$0x1]
        %v508 = vsel %vm473, 0, %v507
        %509 = vst [vmem:[#allocation2 + $0x5c] sm:$0x1] %v508
        %v510 = vld [vmem:[#allocation2 + $0x64] sm:$0x1]
        %v511 = vsel %vm473, 0, %v510
        %512 = vst [vmem:[#allocation2 + $0x64] sm:$0x1] %v511
        %v513 = vld [vmem:[#allocation2 + $0x6c] sm:$0x1]
        %v514 = vsel %vm473, 0, %v513
        %515 = vst [vmem:[#allocation2 + $0x6c] sm:$0x1] %v514
        %v516 = vld [vmem:[#allocation2 + $0x74] sm:$0x1]
        %v517 = vsel %vm473, 0, %v516
        %518 = vst [vmem:[#allocation2 + $0x74] sm:$0x1] %v517
        %v519 = vld [vmem:[#allocation2 + $0x7c] sm:$0x1]
        %v520 = vsel %vm473, 0, %v519
        %521 = vst [vmem:[#allocation2 + $0x7c] sm:$0x1] %v520
        %v522 = vld [vmem:[#allocation2 + $0x84] sm:$0x1]
        %v523 = vsel %vm473, 0, %v522
        %524 = vst [vmem:[#allocation2 + $0x84] sm:$0x1] %v523
        %v525 = vld [vmem:[#allocation2 + $0x8c] sm:$0x1]
        %v526 = vsel %vm473, 0, %v525
        %527 = vst [vmem:[#allocation2 + $0x8c] sm:$0x1] %v526
        %v528 = vld [vmem:[#allocation2 + $0x94] sm:$0x1]
        %v529 = vsel %vm473, 0, %v528
        %530 = vst [vmem:[#allocation2 + $0x94] sm:$0x1] %v529
        %v531 = vld [vmem:[#allocation2 + $0x9c] sm:$0x1]
        %v532 = vsel %vm473, 0, %v531
        %533 = vst [vmem:[#allocation2 + $0x9c] sm:$0x1] %v532
        %v534 = vld [vmem:[#allocation2 + $0xa4] sm:$0x1]
        %v535 = vsel %vm473, 0, %v534
        %536 = vst [vmem:[#allocation2 + $0xa4] sm:$0x1] %v535
        %v537 = vld [vmem:[#allocation2 + $0xac] sm:$0x1]
        %v538 = vsel %vm473, 0, %v537
        %539 = vst [vmem:[#allocation2 + $0xac] sm:$0x1] %v538
        %v540 = vld [vmem:[#allocation2 + $0xb4] sm:$0x1]
        %v541 = vsel %vm473, 0, %v540
        %542 = vst [vmem:[#allocation2 + $0xb4] sm:$0x1] %v541
        %v543 = vld [vmem:[#allocation2 + $0xbc] sm:$0x1]
        %v544 = vsel %vm473, 0, %v543
        %545 = vst [vmem:[#allocation2 + $0xbc] sm:$0x1] %v544
        %v546 = vld [vmem:[#allocation2 + $0xc4] sm:$0x1]
        %v547 = vsel %vm473, 0, %v546
        %548 = vst [vmem:[#allocation2 + $0xc4] sm:$0x1] %v547
        %v549 = vld [vmem:[#allocation2 + $0xcc] sm:$0x1]
        %v550 = vsel %vm473, 0, %v549
        %551 = vst [vmem:[#allocation2 + $0xcc] sm:$0x1] %v550
        %v552 = vld [vmem:[#allocation2 + $0xd4] sm:$0x1]
        %v553 = vsel %vm473, 0, %v552
        %554 = vst [vmem:[#allocation2 + $0xd4] sm:$0x1] %v553
        %v555 = vld [vmem:[#allocation2 + $0xdc] sm:$0x1]
        %v556 = vsel %vm473, 0, %v555
        %557 = vst [vmem:[#allocation2 + $0xdc] sm:$0x1] %v556
        %v558 = vld [vmem:[#allocation2 + $0xe4] sm:$0x1]
        %v559 = vsel %vm473, 0, %v558
        %560 = vst [vmem:[#allocation2 + $0xe4] sm:$0x1] %v559
        %v561 = vld [vmem:[#allocation2 + $0xec] sm:$0x1]
        %v562 = vsel %vm473, 0, %v561
        %563 = vst [vmem:[#allocation2 + $0xec] sm:$0x1] %v562
        %v564 = vld [vmem:[#allocation2 + $0xf4] sm:$0x1]
        %v565 = vsel %vm473, 0, %v564
        %566 = vst [vmem:[#allocation2 + $0xf4] sm:$0x1] %v565
        %v567 = vld [vmem:[#allocation2 + $0xfc] sm:$0x1]
        %v568 = vsel %vm473, 0, %v567
        %569 = vst [vmem:[#allocation2 + $0xfc] sm:$0x1] %v568
        %v570 = vld [vmem:[#allocation2 + $0x104] sm:$0x1]
        %v571 = vsel %vm473, 0, %v570
        %572 = vst [vmem:[#allocation2 + $0x104] sm:$0x1] %v571
        %v573 = vld [vmem:[#allocation2 + $0x10c] sm:$0x1]
        %v574 = vsel %vm473, 0, %v573
        %575 = vst [vmem:[#allocation2 + $0x10c] sm:$0x1] %v574
        %v576 = vld [vmem:[#allocation2 + $0x114] sm:$0x1]
        %v577 = vsel %vm473, 0, %v576
        %578 = vst [vmem:[#allocation2 + $0x114] sm:$0x1] %v577
        %v579 = vld [vmem:[#allocation2 + $0x11c] sm:$0x1]
        %v580 = vsel %vm473, 0, %v579
        %581 = vst [vmem:[#allocation2 + $0x11c] sm:$0x1] %v580
        %v582 = vld [vmem:[#allocation2 + $0x124] sm:$0x1]
        %v583 = vsel %vm473, 0, %v582
        %584 = vst [vmem:[#allocation2 + $0x124] sm:$0x1] %v583
        %v585 = vld [vmem:[#allocation2 + $0x12c] sm:$0x1]
        %v586 = vsel %vm473, 0, %v585
        %587 = vst [vmem:[#allocation2 + $0x12c] sm:$0x1] %v586
        %v588 = vld [vmem:[#allocation2 + $0x134] sm:$0x1]
        %v589 = vsel %vm473, 0, %v588
        %590 = vst [vmem:[#allocation2 + $0x134] sm:$0x1] %v589
        %v591 = vld [vmem:[#allocation2 + $0x13c] sm:$0x1]
        %v592 = vsel %vm473, 0, %v591
        %593 = vst [vmem:[#allocation2 + $0x13c] sm:$0x1] %v592
        %v594 = vld [vmem:[%s330] sm:$0xf]
        %v595 = vld [vmem:[%s330 + $0x4] sm:$0xf]
        %v596 = vld [vmem:[%s330 + $0x8] sm:$0xf]
        %v597 = vld [vmem:[%s330 + $0xc] sm:$0xf]
        %v598 = vld [vmem:[%s330 + $0x10] sm:$0xf]
        %v599 = vld [vmem:[%s330 + $0x14] sm:$0xf]
        %v600 = vld [vmem:[%s330 + $0x18] sm:$0xf]
        %v601 = vld [vmem:[%s330 + $0x1c] sm:$0xf]
        %v602 = vld [vmem:[%s330 + $0x20] sm:$0xf]
        %v603 = vld [vmem:[%s330 + $0x24] sm:$0xf]
        %v604 = vld [vmem:[%s330 + $0x28] sm:$0xf]
        %v605 = vld [vmem:[%s330 + $0x2c] sm:$0xf]
        %v606 = vld [vmem:[%s330 + $0x30] sm:$0xf]
        %v607 = vld [vmem:[%s330 + $0x34] sm:$0xf]
        %v608 = vld [vmem:[%s330 + $0x38] sm:$0xf]
        %v609 = vld [vmem:[%s330 + $0x3c] sm:$0xf]
        %v610 = vld [vmem:[%s330 + $0x40] sm:$0xf]
        %v611 = vld [vmem:[%s330 + $0x44] sm:$0xf]
        %v612 = vld [vmem:[%s330 + $0x48] sm:$0xf]
        %v613 = vld [vmem:[%s330 + $0x4c] sm:$0xf]
        %v614 = vld [vmem:[%s330 + $0x50] sm:$0xf]
        %v615 = vld [vmem:[%s330 + $0x54] sm:$0xf]
        %v616 = vld [vmem:[%s330 + $0x58] sm:$0xf]
        %v617 = vld [vmem:[%s330 + $0x5c] sm:$0xf]
        %v618 = vld [vmem:[%s330 + $0x60] sm:$0xf]
        %v619 = vld [vmem:[%s330 + $0x64] sm:$0xf]
        %v620 = vld [vmem:[%s330 + $0x68] sm:$0xf]
        %v621 = vld [vmem:[%s330 + $0x6c] sm:$0xf]
        %v622 = vld [vmem:[%s330 + $0x70] sm:$0xf]
        %v623 = vld [vmem:[%s330 + $0x74] sm:$0xf]
        %v624 = vld [vmem:[%s330 + $0x78] sm:$0xf]
        %v625 = vld [vmem:[%s330 + $0x7c] sm:$0xf]
        %v626 = vld [vmem:[%s1] sm:$0xf]
        %v627 = vld [vmem:[%s1 + $0x4] sm:$0xf]
        %v628 = vld [vmem:[%s1 + $0x8] sm:$0xf]
        %v629 = vld [vmem:[%s1 + $0xc] sm:$0xf]
        %v630 = vld [vmem:[%s1 + $0x10] sm:$0xf]
        %v631 = vld [vmem:[%s1 + $0x14] sm:$0xf]
        %v632 = vld [vmem:[%s1 + $0x18] sm:$0xf]
        %v633 = vld [vmem:[%s1 + $0x1c] sm:$0xf]
        %v634 = vld [vmem:[%s1 + $0x20] sm:$0xf]
        %v635 = vld [vmem:[%s1 + $0x24] sm:$0xf]
        %v636 = vld [vmem:[%s1 + $0x28] sm:$0xf]
        %v637 = vld [vmem:[%s1 + $0x2c] sm:$0xf]
        %v638 = vld [vmem:[%s1 + $0x30] sm:$0xf]
        %v639 = vld [vmem:[%s1 + $0x34] sm:$0xf]
        %v640 = vld [vmem:[%s1 + $0x38] sm:$0xf]
        %v641 = vld [vmem:[%s1 + $0x3c] sm:$0xf]
        %v642 = vld [vmem:[%s2] sm:$0x1]
        %v644 = vlaneseq
        %v645 = vshrl.u32 %v644, 7
        %v646 = vsub.s32 0, %v645
        %v647 = vrot.slane %v642, %v646
        %v681 = vunpack.c.l.b16 %v594
        %v682 = vunpack.c.l.b16 %v595
        %v683 = vunpack.c.l.b16 %v596
        %v684 = vunpack.c.l.b16 %v597
        %v685 = vunpack.c.l.b16 %v598
        %v686 = vunpack.c.l.b16 %v599
        %v687 = vunpack.c.l.b16 %v600
        %v688 = vunpack.c.l.b16 %v601
        %v689 = vunpack.c.l.b16 %v602
        %v690 = vunpack.c.l.b16 %v603
        %v691 = vunpack.c.l.b16 %v604
        %v692 = vunpack.c.l.b16 %v605
        %v693 = vunpack.c.l.b16 %v606
        %v694 = vunpack.c.l.b16 %v607
        %v695 = vunpack.c.l.b16 %v608
        %v696 = vunpack.c.l.b16 %v609
        %v697 = vunpack.c.l.b16 %v610
        %v698 = vunpack.c.l.b16 %v611
        %v699 = vunpack.c.l.b16 %v612
        %v700 = vunpack.c.l.b16 %v613
        %v701 = vunpack.c.l.b16 %v614
        %v702 = vunpack.c.l.b16 %v615
        %v703 = vunpack.c.l.b16 %v616
        %v704 = vunpack.c.l.b16 %v617
        %v705 = vunpack.c.l.b16 %v618
        %v706 = vunpack.c.l.b16 %v619
        %v707 = vunpack.c.l.b16 %v620
        %v708 = vunpack.c.l.b16 %v621
        %v709 = vunpack.c.l.b16 %v622
        %v710 = vunpack.c.l.b16 %v623
        %v711 = vunpack.c.l.b16 %v624
        %v712 = vunpack.c.l.b16 %v625
        %v713 = vpack.c.b16 %v682, %v681
        %v714 = vpack.c.b16 %v684, %v683
        %v715 = vpack.c.b16 %v686, %v685
        %v716 = vpack.c.b16 %v688, %v687
        %v717 = vpack.c.b16 %v690, %v689
        %v718 = vpack.c.b16 %v692, %v691
        %v719 = vpack.c.b16 %v694, %v693
        %v720 = vpack.c.b16 %v696, %v695
        %v721 = vpack.c.b16 %v698, %v697
        %v722 = vpack.c.b16 %v700, %v699
        %v723 = vpack.c.b16 %v702, %v701
        %v724 = vpack.c.b16 %v704, %v703
        %v725 = vpack.c.b16 %v706, %v705
        %v726 = vpack.c.b16 %v708, %v707
        %v727 = vpack.c.b16 %v710, %v709
        %v728 = vpack.c.b16 %v712, %v711
        %v761 = vunpack.c.l.b16 %v626
        %v762 = vunpack.c.l.b16 %v627
        %v763 = vunpack.c.l.b16 %v628
        %v764 = vunpack.c.l.b16 %v629
        %v765 = vunpack.c.l.b16 %v630
        %v766 = vunpack.c.l.b16 %v631
        %v767 = vunpack.c.l.b16 %v632
        %v768 = vunpack.c.l.b16 %v633
        %v769 = vunpack.c.l.b16 %v634
        %v770 = vunpack.c.l.b16 %v635
        %v771 = vunpack.c.l.b16 %v636
        %v772 = vunpack.c.l.b16 %v637
        %v773 = vunpack.c.l.b16 %v638
        %v774 = vunpack.c.l.b16 %v639
        %v775 = vunpack.c.l.b16 %v640
        %v776 = vunpack.c.l.b16 %v641
        %v777 = vpack.c.b16 %v762, %v761
        %v778 = vpack.c.b16 %v764, %v763
        %v779 = vpack.c.b16 %v766, %v765
        %v780 = vpack.c.b16 %v768, %v767
        %v781 = vpack.c.b16 %v770, %v769
        %v782 = vpack.c.b16 %v772, %v771
        %v783 = vpack.c.b16 %v774, %v773
        %v784 = vpack.c.b16 %v776, %v775
        %793 = vmatprep.subr.bf16.mxu0 0
        %794 = vmatpush1.bf16.msra.mxu0 %v777
        %795 = vmatprep.subr.bf16.mxu0 0
        %796 = vmatpush1.bf16.msra.mxu0 %v778
        %797 = vmatprep.subr.bf16.mxu0 0
        %798 = vmatpush1.bf16.msra.mxu0 %v779
        %799 = vmatprep.subr.bf16.mxu0 0
        %800 = vmatpush1.bf16.msra.mxu0 %v780
        %801 = vmatprep.subr.bf16.mxu0 0
        %802 = vmatpush1.bf16.msra.mxu0 %v781
        %803 = vmatprep.subr.bf16.mxu0 0
        %804 = vmatpush1.bf16.msra.mxu0 %v782
        %805 = vmatprep.subr.bf16.mxu0 0
        %806 = vmatpush1.bf16.msra.mxu0 %v783
        %807 = vmatprep.subr.bf16.mxu0 0
        %808 = vmatpush1.bf16.msra.mxu0 %v784
        %809 = vmatprep.subr.bf16.mxu0 0
        %810 = vmatpush1.bf16.msra.mxu0 0
        %811 = vmatprep.subr.bf16.mxu0 0
        %812 = vmatpush1.bf16.msra.mxu0 0
        %813 = vmatprep.subr.bf16.mxu0 0
        %814 = vmatpush1.bf16.msra.mxu0 0
        %815 = vmatprep.subr.bf16.mxu0 0
        %816 = vmatpush1.bf16.msra.mxu0 0
        %817 = vmatprep.subr.bf16.mxu0 0
        %818 = vmatpush1.bf16.msra.mxu0 0
        %819 = vmatprep.subr.bf16.mxu0 0
        %820 = vmatpush1.bf16.msra.mxu0 0
        %821 = vmatprep.subr.bf16.mxu0 0
        %822 = vmatpush1.bf16.msra.mxu0 0
        %823 = vmatprep.subr.bf16.mxu0 0
        %824 = vmatpush1.bf16.msra.mxu0 0
        %825 = vmatprep.mubr.bf16.mxu0 0
        %826 = vmatmul.mubr.bf16.gmra.mrb[0].mxu0 %v713
        %v827 = vpop.f32.mrb[0].mxu0
        %v828 = vadd.f32 %v647, %v827
        %v829 = vpop.f32.mrb[0].mxu0
        %v830 = vpop.f32.mrb[0].mxu0
        %v831 = vadd.f32 %v647, %v830
        %v832 = vpop.f32.mrb[0].mxu0
        %833 = vmatprep.mubr.bf16.mxu0 0
        %834 = vmatmul.mubr.bf16.gmra.mrb[0].mxu0 %v714
        %v835 = vpop.f32.mrb[0].mxu0
        %v836 = vadd.f32 %v647, %v835
        %v837 = vpop.f32.mrb[0].mxu0
        %v838 = vpop.f32.mrb[0].mxu0
        %v839 = vadd.f32 %v647, %v838
        %v840 = vpop.f32.mrb[0].mxu0
        %841 = vmatprep.mubr.bf16.mxu0 0
        %842 = vmatmul.mubr.bf16.gmra.mrb[0].mxu0 %v715
        %v843 = vpop.f32.mrb[0].mxu0
        %v844 = vadd.f32 %v647, %v843
        %v845 = vpop.f32.mrb[0].mxu0
        %v846 = vpop.f32.mrb[0].mxu0
        %v847 = vadd.f32 %v647, %v846
        %v848 = vpop.f32.mrb[0].mxu0
        %849 = vmatprep.mubr.bf16.mxu0 0
        %850 = vmatmul.mubr.bf16.gmra.mrb[0].mxu0 %v716
        %v851 = vpop.f32.mrb[0].mxu0
        %v852 = vadd.f32 %v647, %v851
        %v853 = vpop.f32.mrb[0].mxu0
        %v854 = vpop.f32.mrb[0].mxu0
        %v855 = vadd.f32 %v647, %v854
        %v856 = vpop.f32.mrb[0].mxu0
        %857 = vmatprep.mubr.bf16.mxu0 0
        %858 = vmatmul.mubr.bf16.gmra.mrb[0].mxu0 %v717
        %v859 = vpop.f32.mrb[0].mxu0
        %v860 = vadd.f32 %v647, %v859
        %v861 = vpop.f32.mrb[0].mxu0
        %v862 = vpop.f32.mrb[0].mxu0
        %v863 = vadd.f32 %v647, %v862
        %v864 = vpop.f32.mrb[0].mxu0
        %865 = vmatprep.mubr.bf16.mxu0 0
        %866 = vmatmul.mubr.bf16.gmra.mrb[0].mxu0 %v718
        %v867 = vpop.f32.mrb[0].mxu0
        %v868 = vadd.f32 %v647, %v867
        %v869 = vpop.f32.mrb[0].mxu0
        %v870 = vpop.f32.mrb[0].mxu0
        %v871 = vadd.f32 %v647, %v870
        %v872 = vpop.f32.mrb[0].mxu0
        %873 = vmatprep.mubr.bf16.mxu0 0
        %874 = vmatmul.mubr.bf16.gmra.mrb[0].mxu0 %v719
        %v875 = vpop.f32.mrb[0].mxu0
        %v876 = vadd.f32 %v647, %v875
        %v877 = vpop.f32.mrb[0].mxu0
        %v878 = vpop.f32.mrb[0].mxu0
        %v879 = vadd.f32 %v647, %v878
        %v880 = vpop.f32.mrb[0].mxu0
        %881 = vmatprep.mubr.bf16.mxu0 0
        %882 = vmatmul.mubr.bf16.gmra.mrb[0].mxu0 %v720
        %v883 = vpop.f32.mrb[0].mxu0
        %v884 = vadd.f32 %v647, %v883
        %v885 = vpop.f32.mrb[0].mxu0
        %v886 = vpop.f32.mrb[0].mxu0
        %v887 = vadd.f32 %v647, %v886
        %v888 = vpop.f32.mrb[0].mxu0
        %889 = vmatprep.mubr.bf16.mxu0 0
        %890 = vmatmul.mubr.bf16.gmra.mrb[0].mxu0 %v721
        %v891 = vpop.f32.mrb[0].mxu0
        %v892 = vadd.f32 %v647, %v891
        %v893 = vpop.f32.mrb[0].mxu0
        %v894 = vpop.f32.mrb[0].mxu0
        %v895 = vadd.f32 %v647, %v894
        %v896 = vpop.f32.mrb[0].mxu0
        %897 = vmatprep.mubr.bf16.mxu0 0
        %898 = vmatmul.mubr.bf16.gmra.mrb[0].mxu0 %v722
        %v899 = vpop.f32.mrb[0].mxu0
        %v900 = vadd.f32 %v647, %v899
        %v901 = vpop.f32.mrb[0].mxu0
        %v902 = vpop.f32.mrb[0].mxu0
        %v903 = vadd.f32 %v647, %v902
        %v904 = vpop.f32.mrb[0].mxu0
        %905 = vmatprep.mubr.bf16.mxu0 0
        %906 = vmatmul.mubr.bf16.gmra.mrb[0].mxu0 %v723
        %v907 = vpop.f32.mrb[0].mxu0
        %v908 = vadd.f32 %v647, %v907
        %v909 = vpop.f32.mrb[0].mxu0
        %v910 = vpop.f32.mrb[0].mxu0
        %v911 = vadd.f32 %v647, %v910
        %v912 = vpop.f32.mrb[0].mxu0
        %913 = vmatprep.mubr.bf16.mxu0 0
        %914 = vmatmul.mubr.bf16.gmra.mrb[0].mxu0 %v724
        %v915 = vpop.f32.mrb[0].mxu0
        %v916 = vadd.f32 %v647, %v915
        %v917 = vpop.f32.mrb[0].mxu0
        %v918 = vpop.f32.mrb[0].mxu0
        %v919 = vadd.f32 %v647, %v918
        %v920 = vpop.f32.mrb[0].mxu0
        %921 = vmatprep.mubr.bf16.mxu0 0
        %922 = vmatmul.mubr.bf16.gmra.mrb[0].mxu0 %v725
        %v923 = vpop.f32.mrb[0].mxu0
        %v924 = vadd.f32 %v647, %v923
        %v925 = vpop.f32.mrb[0].mxu0
        %v926 = vpop.f32.mrb[0].mxu0
        %v927 = vadd.f32 %v647, %v926
        %v928 = vpop.f32.mrb[0].mxu0
        %929 = vmatprep.mubr.bf16.mxu0 0
        %930 = vmatmul.mubr.bf16.gmra.mrb[0].mxu0 %v726
        %v931 = vpop.f32.mrb[0].mxu0
        %v932 = vadd.f32 %v647, %v931
        %v933 = vpop.f32.mrb[0].mxu0
        %v934 = vpop.f32.mrb[0].mxu0
        %v935 = vadd.f32 %v647, %v934
        %v936 = vpop.f32.mrb[0].mxu0
        %937 = vmatprep.mubr.bf16.mxu0 0
        %938 = vmatmul.mubr.bf16.gmra.mrb[0].mxu0 %v727
        %v939 = vpop.f32.mrb[0].mxu0
        %v940 = vadd.f32 %v647, %v939
        %v941 = vpop.f32.mrb[0].mxu0
        %v942 = vpop.f32.mrb[0].mxu0
        %v943 = vadd.f32 %v647, %v942
        %v944 = vpop.f32.mrb[0].mxu0
        %945 = vmatprep.mubr.bf16.mxu0 0
        %946 = vmatmul.mubr.bf16.gmra.mrb[0].mxu0 %v728
        %v947 = vpop.f32.mrb[0].mxu0
        %v948 = vadd.f32 %v647, %v947
        %v949 = vpop.f32.mrb[0].mxu0
        %v950 = vpop.f32.mrb[0].mxu0
        %v951 = vadd.f32 %v647, %v950
        %v952 = vpop.f32.mrb[0].mxu0
        %953 = vdwg.mxu0
        %v954 = vmax.f32 %v828, 0.0
        %v955 = vmax.f32 %v831, 0.0
        %v956 = vmax.f32 %v836, 0.0
        %v957 = vmax.f32 %v839, 0.0
        %v958 = vmax.f32 %v844, 0.0
        %v959 = vmax.f32 %v847, 0.0
        %v960 = vmax.f32 %v852, 0.0
        %v961 = vmax.f32 %v855, 0.0
        %v962 = vmax.f32 %v860, 0.0
        %v963 = vmax.f32 %v863, 0.0
        %v964 = vmax.f32 %v868, 0.0
        %v965 = vmax.f32 %v871, 0.0
        %v966 = vmax.f32 %v876, 0.0
        %v967 = vmax.f32 %v879, 0.0
        %v968 = vmax.f32 %v884, 0.0
        %v969 = vmax.f32 %v887, 0.0
        %v970 = vmax.f32 %v892, 0.0
        %v971 = vmax.f32 %v895, 0.0
        %v972 = vmax.f32 %v900, 0.0
        %v973 = vmax.f32 %v903, 0.0
        %v974 = vmax.f32 %v908, 0.0
        %v975 = vmax.f32 %v911, 0.0
        %v976 = vmax.f32 %v916, 0.0
        %v977 = vmax.f32 %v919, 0.0
        %v978 = vmax.f32 %v924, 0.0
        %v979 = vmax.f32 %v927, 0.0
        %v980 = vmax.f32 %v932, 0.0
        %v981 = vmax.f32 %v935, 0.0
        %v982 = vmax.f32 %v940, 0.0
        %v983 = vmax.f32 %v943, 0.0
        %v984 = vmax.f32 %v948, 0.0
        %v985 = vmax.f32 %v951, 0.0
        %v986 = vpack.c.bf16 %v955, %v954
        %v987 = vpack.c.bf16 %v957, %v956
        %v988 = vpack.c.bf16 %v959, %v958
        %v989 = vpack.c.bf16 %v961, %v960
        %v990 = vpack.c.bf16 %v963, %v962
        %v991 = vpack.c.bf16 %v965, %v964
        %v992 = vpack.c.bf16 %v967, %v966
        %v993 = vpack.c.bf16 %v969, %v968
        %v994 = vpack.c.bf16 %v971, %v970
        %v995 = vpack.c.bf16 %v973, %v972
        %v996 = vpack.c.bf16 %v975, %v974
        %v997 = vpack.c.bf16 %v977, %v976
        %v998 = vpack.c.bf16 %v979, %v978
        %v999 = vpack.c.bf16 %v981, %v980
        %v1000 = vpack.c.bf16 %v983, %v982
        %v1001 = vpack.c.bf16 %v985, %v984
        %v1006 = vunpack.c.l.b16 %v986
        %v1007 = vunpack.c.h.b16 %v986
        %v1008 = vunpack.c.l.b16 %v987
        %v1009 = vunpack.c.h.b16 %v987
        %v1010 = vunpack.c.l.b16 %v988
        %v1011 = vunpack.c.h.b16 %v988
        %v1012 = vunpack.c.l.b16 %v989
        %v1013 = vunpack.c.h.b16 %v989
        %v1014 = vpack.c.b16 %v1006, %v1006
        %v1015 = vpack.c.b16 %v1007, %v1007
        %v1016 = vpack.c.b16 %v1008, %v1008
        %v1017 = vpack.c.b16 %v1009, %v1009
        %v1018 = vpack.c.b16 %v1010, %v1010
        %v1019 = vpack.c.b16 %v1011, %v1011
        %v1020 = vpack.c.b16 %v1012, %v1012
        %v1021 = vpack.c.b16 %v1013, %v1013
        %v1023 = vshrl.u32 %v1014, 16
        %v1025 = vrot.slane %v1023, 7
        %v1026 = vshll.u32 %v1014, 16
        %v1028 = vor.u32 %v1025, %v1026
        %v1029 = vrot.slane %v1025, 4
        %v1031 = vshrl.u32 %v1015, 16
        %v1033 = vrot.slane %v1031, 7
        %v1034 = vshll.u32 %v1015, 16
        %v1036 = vor.u32 %v1033, %v1034
        %v1037 = vrot.slane %v1033, 4
        %v1039 = vshrl.u32 %v1016, 16
        %v1041 = vrot.slane %v1039, 7
        %v1042 = vshll.u32 %v1016, 16
        %v1044 = vor.u32 %v1041, %v1042
        %v1045 = vrot.slane %v1041, 4
        %v1047 = vshrl.u32 %v1017, 16
        %v1049 = vrot.slane %v1047, 7
        %v1050 = vshll.u32 %v1017, 16
        %v1052 = vor.u32 %v1049, %v1050
        %v1053 = vrot.slane %v1049, 4
        %v1055 = vshrl.u32 %v1018, 16
        %v1057 = vrot.slane %v1055, 7
        %v1058 = vshll.u32 %v1018, 16
        %v1060 = vor.u32 %v1057, %v1058
        %v1061 = vrot.slane %v1057, 4
        %v1063 = vshrl.u32 %v1019, 16
        %v1065 = vrot.slane %v1063, 7
        %v1066 = vshll.u32 %v1019, 16
        %v1068 = vor.u32 %v1065, %v1066
        %v1069 = vrot.slane %v1065, 4
        %v1071 = vshrl.u32 %v1020, 16
        %v1073 = vrot.slane %v1071, 7
        %v1074 = vshll.u32 %v1020, 16
        %v1076 = vor.u32 %v1073, %v1074
        %v1077 = vrot.slane %v1073, 4
        %v1079 = vshrl.u32 %v1021, 16
        %v1081 = vrot.slane %v1079, 7
        %v1082 = vshll.u32 %v1021, 16
        %v1084 = vor.u32 %v1081, %v1082
        %v1085 = vrot.slane %v1081, 4
        %s1102 = scalar_lea.vmem [#allocation2], 8
        %vm1103 = vcmask 1043456
        %vm1104 = vmand %vm1103, %vm472
        %v1105 = vld [vmem:[%s1102] sm:$0xf]
        %v1106 = vsel %vm1104, %v1028, %v1105
        %1107 = vst [vmem:[%s1102] sm:$0xf] %v1106
        %v1108 = vld [vmem:[%s1102 + $0x4] sm:$0x1]
        %v1109 = vsel %vm351, %v1029, %v1108
        %1110 = vst [vmem:[%s1102 + $0x4] sm:$0x1] %v1109
        %v1111 = vld [vmem:[%s1102 + $0x8] sm:$0xf]
        %v1112 = vsel %vm1104, %v1036, %v1111
        %1113 = vst [vmem:[%s1102 + $0x8] sm:$0xf] %v1112
        %v1114 = vld [vmem:[%s1102 + $0xc] sm:$0x1]
        %v1115 = vsel %vm351, %v1037, %v1114
        %1116 = vst [vmem:[%s1102 + $0xc] sm:$0x1] %v1115
        %v1117 = vld [vmem:[%s1102 + $0x10] sm:$0xf]
        %v1118 = vsel %vm1104, %v1044, %v1117
        %1119 = vst [vmem:[%s1102 + $0x10] sm:$0xf] %v1118
        %v1120 = vld [vmem:[%s1102 + $0x14] sm:$0x1]
        %v1121 = vsel %vm351, %v1045, %v1120
        %1122 = vst [vmem:[%s1102 + $0x14] sm:$0x1] %v1121
        %v1123 = vld [vmem:[%s1102 + $0x18] sm:$0xf]
        %v1124 = vsel %vm1104, %v1052, %v1123
        %1125 = vst [vmem:[%s1102 + $0x18] sm:$0xf] %v1124
        %v1126 = vld [vmem:[%s1102 + $0x1c] sm:$0x1]
        %v1127 = vsel %vm351, %v1053, %v1126
        %1128 = vst [vmem:[%s1102 + $0x1c] sm:$0x1] %v1127
        %v1129 = vld [vmem:[%s1102 + $0x20] sm:$0xf]
        %v1130 = vsel %vm1104, %v1060, %v1129
        %1131 = vst [vmem:[%s1102 + $0x20] sm:$0xf] %v1130
        %v1132 = vld [vmem:[%s1102 + $0x24] sm:$0x1]
        %v1133 = vsel %vm351, %v1061, %v1132
        %1134 = vst [vmem:[%s1102 + $0x24] sm:$0x1] %v1133
        %v1135 = vld [vmem:[%s1102 + $0x28] sm:$0xf]
        %v1136 = vsel %vm1104, %v1068, %v1135
        %1137 = vst [vmem:[%s1102 + $0x28] sm:$0xf] %v1136
        %v1138 = vld [vmem:[%s1102 + $0x2c] sm:$0x1]
        %v1139 = vsel %vm351, %v1069, %v1138
        %1140 = vst [vmem:[%s1102 + $0x2c] sm:$0x1] %v1139
        %v1141 = vld [vmem:[%s1102 + $0x30] sm:$0xf]
        %v1142 = vsel %vm1104, %v1076, %v1141
        %1143 = vst [vmem:[%s1102 + $0x30] sm:$0xf] %v1142
        %v1144 = vld [vmem:[%s1102 + $0x34] sm:$0x1]
        %v1145 = vsel %vm351, %v1077, %v1144
        %1146 = vst [vmem:[%s1102 + $0x34] sm:$0x1] %v1145
        %v1147 = vld [vmem:[%s1102 + $0x38] sm:$0xf]
        %v1148 = vsel %vm1104, %v1084, %v1147
        %1149 = vst [vmem:[%s1102 + $0x38] sm:$0xf] %v1148
        %v1150 = vld [vmem:[%s1102 + $0x3c] sm:$0x1]
        %v1151 = vsel %vm351, %v1085, %v1150
        %1152 = vst [vmem:[%s1102 + $0x3c] sm:$0x1] %v1151
        %v1157 = vunpack.c.l.b16 %v990
        %v1158 = vunpack.c.h.b16 %v990
        %v1159 = vunpack.c.l.b16 %v991
        %v1160 = vunpack.c.h.b16 %v991
        %v1161 = vunpack.c.l.b16 %v992
        %v1162 = vunpack.c.h.b16 %v992
        %v1163 = vunpack.c.l.b16 %v993
        %v1164 = vunpack.c.h.b16 %v993
        %v1165 = vpack.c.b16 %v1157, %v1157
        %v1166 = vpack.c.b16 %v1158, %v1158
        %v1167 = vpack.c.b16 %v1159, %v1159
        %v1168 = vpack.c.b16 %v1160, %v1160
        %v1169 = vpack.c.b16 %v1161, %v1161
        %v1170 = vpack.c.b16 %v1162, %v1162
        %v1171 = vpack.c.b16 %v1163, %v1163
        %v1172 = vpack.c.b16 %v1164, %v1164
        %v1174 = vshrl.u32 %v1165, 16
        %v1176 = vrot.slane %v1174, 7
        %v1177 = vshll.u32 %v1165, 16
        %v1179 = vor.u32 %v1176, %v1177
        %v1180 = vrot.slane %v1176, 4
        %v1182 = vshrl.u32 %v1166, 16
        %v1184 = vrot.slane %v1182, 7
        %v1185 = vshll.u32 %v1166, 16
        %v1187 = vor.u32 %v1184, %v1185
        %v1188 = vrot.slane %v1184, 4
        %v1190 = vshrl.u32 %v1167, 16
        %v1192 = vrot.slane %v1190, 7
        %v1193 = vshll.u32 %v1167, 16
        %v1195 = vor.u32 %v1192, %v1193
        %v1196 = vrot.slane %v1192, 4
        %v1198 = vshrl.u32 %v1168, 16
        %v1200 = vrot.slane %v1198, 7
        %v1201 = vshll.u32 %v1168, 16
        %v1203 = vor.u32 %v1200, %v1201
        %v1204 = vrot.slane %v1200, 4
        %v1206 = vshrl.u32 %v1169, 16
        %v1208 = vrot.slane %v1206, 7
        %v1209 = vshll.u32 %v1169, 16
        %v1211 = vor.u32 %v1208, %v1209
        %v1212 = vrot.slane %v1208, 4
        %v1214 = vshrl.u32 %v1170, 16
        %v1216 = vrot.slane %v1214, 7
        %v1217 = vshll.u32 %v1170, 16
        %v1219 = vor.u32 %v1216, %v1217
        %v1220 = vrot.slane %v1216, 4
        %v1222 = vshrl.u32 %v1171, 16
        %v1224 = vrot.slane %v1222, 7
        %v1225 = vshll.u32 %v1171, 16
        %v1227 = vor.u32 %v1224, %v1225
        %v1228 = vrot.slane %v1224, 4
        %v1230 = vshrl.u32 %v1172, 16
        %v1232 = vrot.slane %v1230, 7
        %v1233 = vshll.u32 %v1172, 16
        %v1235 = vor.u32 %v1232, %v1233
        %v1236 = vrot.slane %v1232, 4
        %s1253 = scalar_lea.vmem [#allocation2], 88
        %v1254 = vld [vmem:[%s1253] sm:$0xf]
        %v1255 = vsel %vm1104, %v1179, %v1254
        %1256 = vst [vmem:[%s1253] sm:$0xf] %v1255
        %v1257 = vld [vmem:[%s1253 + $0x4] sm:$0x1]
        %v1258 = vsel %vm351, %v1180, %v1257
        %1259 = vst [vmem:[%s1253 + $0x4] sm:$0x1] %v1258
        %v1260 = vld [vmem:[%s1253 + $0x8] sm:$0xf]
        %v1261 = vsel %vm1104, %v1187, %v1260
        %1262 = vst [vmem:[%s1253 + $0x8] sm:$0xf] %v1261
        %v1263 = vld [vmem:[%s1253 + $0xc] sm:$0x1]
        %v1264 = vsel %vm351, %v1188, %v1263
        %1265 = vst [vmem:[%s1253 + $0xc] sm:$0x1] %v1264
        %v1266 = vld [vmem:[%s1253 + $0x10] sm:$0xf]
        %v1267 = vsel %vm1104, %v1195, %v1266
        %1268 = vst [vmem:[%s1253 + $0x10] sm:$0xf] %v1267
        %v1269 = vld [vmem:[%s1253 + $0x14] sm:$0x1]
        %v1270 = vsel %vm351, %v1196, %v1269
        %1271 = vst [vmem:[%s1253 + $0x14] sm:$0x1] %v1270
        %v1272 = vld [vmem:[%s1253 + $0x18] sm:$0xf]
        %v1273 = vsel %vm1104, %v1203, %v1272
        %1274 = vst [vmem:[%s1253 + $0x18] sm:$0xf] %v1273
        %v1275 = vld [vmem:[%s1253 + $0x1c] sm:$0x1]
        %v1276 = vsel %vm351, %v1204, %v1275
        %1277 = vst [vmem:[%s1253 + $0x1c] sm:$0x1] %v1276
        %v1278 = vld [vmem:[%s1253 + $0x20] sm:$0xf]
        %v1279 = vsel %vm1104, %v1211, %v1278
        %1280 = vst [vmem:[%s1253 + $0x20] sm:$0xf] %v1279
        %v1281 = vld [vmem:[%s1253 + $0x24] sm:$0x1]
        %v1282 = vsel %vm351, %v1212, %v1281
        %1283 = vst [vmem:[%s1253 + $0x24] sm:$0x1] %v1282
        %v1284 = vld [vmem:[%s1253 + $0x28] sm:$0xf]
        %v1285 = vsel %vm1104, %v1219, %v1284
        %1286 = vst [vmem:[%s1253 + $0x28] sm:$0xf] %v1285
        %v1287 = vld [vmem:[%s1253 + $0x2c] sm:$0x1]
        %v1288 = vsel %vm351, %v1220, %v1287
        %1289 = vst [vmem:[%s1253 + $0x2c] sm:$0x1] %v1288
        %v1290 = vld [vmem:[%s1253 + $0x30] sm:$0xf]
        %v1291 = vsel %vm1104, %v1227, %v1290
        %1292 = vst [vmem:[%s1253 + $0x30] sm:$0xf] %v1291
        %v1293 = vld [vmem:[%s1253 + $0x34] sm:$0x1]
        %v1294 = vsel %vm351, %v1228, %v1293
        %1295 = vst [vmem:[%s1253 + $0x34] sm:$0x1] %v1294
        %v1296 = vld [vmem:[%s1253 + $0x38] sm:$0xf]
        %v1297 = vsel %vm1104, %v1235, %v1296
        %1298 = vst [vmem:[%s1253 + $0x38] sm:$0xf] %v1297
        %v1299 = vld [vmem:[%s1253 + $0x3c] sm:$0x1]
        %v1300 = vsel %vm351, %v1236, %v1299
        %1301 = vst [vmem:[%s1253 + $0x3c] sm:$0x1] %v1300
        %v1306 = vunpack.c.l.b16 %v994
        %v1307 = vunpack.c.h.b16 %v994
        %v1308 = vunpack.c.l.b16 %v995
        %v1309 = vunpack.c.h.b16 %v995
        %v1310 = vunpack.c.l.b16 %v996
        %v1311 = vunpack.c.h.b16 %v996
        %v1312 = vunpack.c.l.b16 %v997
        %v1313 = vunpack.c.h.b16 %v997
        %v1314 = vpack.c.b16 %v1306, %v1306
        %v1315 = vpack.c.b16 %v1307, %v1307
        %v1316 = vpack.c.b16 %v1308, %v1308
        %v1317 = vpack.c.b16 %v1309, %v1309
        %v1318 = vpack.c.b16 %v1310, %v1310
        %v1319 = vpack.c.b16 %v1311, %v1311
        %v1320 = vpack.c.b16 %v1312, %v1312
        %v1321 = vpack.c.b16 %v1313, %v1313
        %v1323 = vshrl.u32 %v1314, 16
        %v1325 = vrot.slane %v1323, 7
        %v1326 = vshll.u32 %v1314, 16
        %v1328 = vor.u32 %v1325, %v1326
        %v1329 = vrot.slane %v1325, 4
        %v1331 = vshrl.u32 %v1315, 16
        %v1333 = vrot.slane %v1331, 7
        %v1334 = vshll.u32 %v1315, 16
        %v1336 = vor.u32 %v1333, %v1334
        %v1337 = vrot.slane %v1333, 4
        %v1339 = vshrl.u32 %v1316, 16
        %v1341 = vrot.slane %v1339, 7
        %v1342 = vshll.u32 %v1316, 16
        %v1344 = vor.u32 %v1341, %v1342
        %v1345 = vrot.slane %v1341, 4
        %v1347 = vshrl.u32 %v1317, 16
        %v1349 = vrot.slane %v1347, 7
        %v1350 = vshll.u32 %v1317, 16
        %v1352 = vor.u32 %v1349, %v1350
        %v1353 = vrot.slane %v1349, 4
        %v1355 = vshrl.u32 %v1318, 16
        %v1357 = vrot.slane %v1355, 7
        %v1358 = vshll.u32 %v1318, 16
        %v1360 = vor.u32 %v1357, %v1358
        %v1361 = vrot.slane %v1357, 4
        %v1363 = vshrl.u32 %v1319, 16
        %v1365 = vrot.slane %v1363, 7
        %v1366 = vshll.u32 %v1319, 16
        %v1368 = vor.u32 %v1365, %v1366
        %v1369 = vrot.slane %v1365, 4
        %v1371 = vshrl.u32 %v1320, 16
        %v1373 = vrot.slane %v1371, 7
        %v1374 = vshll.u32 %v1320, 16
        %v1376 = vor.u32 %v1373, %v1374
        %v1377 = vrot.slane %v1373, 4
        %v1379 = vshrl.u32 %v1321, 16
        %v1381 = vrot.slane %v1379, 7
        %v1382 = vshll.u32 %v1321, 16
        %v1384 = vor.u32 %v1381, %v1382
        %v1385 = vrot.slane %v1381, 4
        %s1402 = scalar_lea.vmem [#allocation2], 168
        %v1403 = vld [vmem:[%s1402] sm:$0xf]
        %v1404 = vsel %vm1104, %v1328, %v1403
        %1405 = vst [vmem:[%s1402] sm:$0xf] %v1404
        %v1406 = vld [vmem:[%s1402 + $0x4] sm:$0x1]
        %v1407 = vsel %vm351, %v1329, %v1406
        %1408 = vst [vmem:[%s1402 + $0x4] sm:$0x1] %v1407
        %v1409 = vld [vmem:[%s1402 + $0x8] sm:$0xf]
        %v1410 = vsel %vm1104, %v1336, %v1409
        %1411 = vst [vmem:[%s1402 + $0x8] sm:$0xf] %v1410
        %v1412 = vld [vmem:[%s1402 + $0xc] sm:$0x1]
        %v1413 = vsel %vm351, %v1337, %v1412
        %1414 = vst [vmem:[%s1402 + $0xc] sm:$0x1] %v1413
        %v1415 = vld [vmem:[%s1402 + $0x10] sm:$0xf]
        %v1416 = vsel %vm1104, %v1344, %v1415
        %1417 = vst [vmem:[%s1402 + $0x10] sm:$0xf] %v1416
        %v1418 = vld [vmem:[%s1402 + $0x14] sm:$0x1]
        %v1419 = vsel %vm351, %v1345, %v1418
        %1420 = vst [vmem:[%s1402 + $0x14] sm:$0x1] %v1419
        %v1421 = vld [vmem:[%s1402 + $0x18] sm:$0xf]
        %v1422 = vsel %vm1104, %v1352, %v1421
        %1423 = vst [vmem:[%s1402 + $0x18] sm:$0xf] %v1422
        %v1424 = vld [vmem:[%s1402 + $0x1c] sm:$0x1]
        %v1425 = vsel %vm351, %v1353, %v1424
        %1426 = vst [vmem:[%s1402 + $0x1c] sm:$0x1] %v1425
        %v1427 = vld [vmem:[%s1402 + $0x20] sm:$0xf]
        %v1428 = vsel %vm1104, %v1360, %v1427
        %1429 = vst [vmem:[%s1402 + $0x20] sm:$0xf] %v1428
        %v1430 = vld [vmem:[%s1402 + $0x24] sm:$0x1]
        %v1431 = vsel %vm351, %v1361, %v1430
        %1432 = vst [vmem:[%s1402 + $0x24] sm:$0x1] %v1431
        %v1433 = vld [vmem:[%s1402 + $0x28] sm:$0xf]
        %v1434 = vsel %vm1104, %v1368, %v1433
        %1435 = vst [vmem:[%s1402 + $0x28] sm:$0xf] %v1434
        %v1436 = vld [vmem:[%s1402 + $0x2c] sm:$0x1]
        %v1437 = vsel %vm351, %v1369, %v1436
        %1438 = vst [vmem:[%s1402 + $0x2c] sm:$0x1] %v1437
        %v1439 = vld [vmem:[%s1402 + $0x30] sm:$0xf]
        %v1440 = vsel %vm1104, %v1376, %v1439
        %1441 = vst [vmem:[%s1402 + $0x30] sm:$0xf] %v1440
        %v1442 = vld [vmem:[%s1402 + $0x34] sm:$0x1]
        %v1443 = vsel %vm351, %v1377, %v1442
        %1444 = vst [vmem:[%s1402 + $0x34] sm:$0x1] %v1443
        %v1445 = vld [vmem:[%s1402 + $0x38] sm:$0xf]
        %v1446 = vsel %vm1104, %v1384, %v1445
        %1447 = vst [vmem:[%s1402 + $0x38] sm:$0xf] %v1446
        %v1448 = vld [vmem:[%s1402 + $0x3c] sm:$0x1]
        %v1449 = vsel %vm351, %v1385, %v1448
        %1450 = vst [vmem:[%s1402 + $0x3c] sm:$0x1] %v1449
        %v1455 = vunpack.c.l.b16 %v998
        %v1456 = vunpack.c.h.b16 %v998
        %v1457 = vunpack.c.l.b16 %v999
        %v1458 = vunpack.c.h.b16 %v999
        %v1459 = vunpack.c.l.b16 %v1000
        %v1460 = vunpack.c.h.b16 %v1000
        %v1461 = vunpack.c.l.b16 %v1001
        %v1462 = vunpack.c.h.b16 %v1001
        %v1463 = vpack.c.b16 %v1455, %v1455
        %v1464 = vpack.c.b16 %v1456, %v1456
        %v1465 = vpack.c.b16 %v1457, %v1457
        %v1466 = vpack.c.b16 %v1458, %v1458
        %v1467 = vpack.c.b16 %v1459, %v1459
        %v1468 = vpack.c.b16 %v1460, %v1460
        %v1469 = vpack.c.b16 %v1461, %v1461
        %v1470 = vpack.c.b16 %v1462, %v1462
        %v1472 = vshrl.u32 %v1463, 16
        %v1474 = vrot.slane %v1472, 7
        %v1475 = vshll.u32 %v1463, 16
        %v1477 = vor.u32 %v1474, %v1475
        %v1478 = vrot.slane %v1474, 4
        %v1480 = vshrl.u32 %v1464, 16
        %v1482 = vrot.slane %v1480, 7
        %v1483 = vshll.u32 %v1464, 16
        %v1485 = vor.u32 %v1482, %v1483
        %v1486 = vrot.slane %v1482, 4
        %v1488 = vshrl.u32 %v1465, 16
        %v1490 = vrot.slane %v1488, 7
        %v1491 = vshll.u32 %v1465, 16
        %v1493 = vor.u32 %v1490, %v1491
        %v1494 = vrot.slane %v1490, 4
        %v1496 = vshrl.u32 %v1466, 16
        %v1498 = vrot.slane %v1496, 7
        %v1499 = vshll.u32 %v1466, 16
        %v1501 = vor.u32 %v1498, %v1499
        %v1502 = vrot.slane %v1498, 4
        %v1504 = vshrl.u32 %v1467, 16
        %v1506 = vrot.slane %v1504, 7
        %v1507 = vshll.u32 %v1467, 16
        %v1509 = vor.u32 %v1506, %v1507
        %v1510 = vrot.slane %v1506, 4
        %v1512 = vshrl.u32 %v1468, 16
        %v1514 = vrot.slane %v1512, 7
        %v1515 = vshll.u32 %v1468, 16
        %v1517 = vor.u32 %v1514, %v1515
        %v1518 = vrot.slane %v1514, 4
        %v1520 = vshrl.u32 %v1469, 16
        %v1522 = vrot.slane %v1520, 7
        %v1523 = vshll.u32 %v1469, 16
        %v1525 = vor.u32 %v1522, %v1523
        %v1526 = vrot.slane %v1522, 4
        %v1528 = vshrl.u32 %v1470, 16
        %v1530 = vrot.slane %v1528, 7
        %v1531 = vshll.u32 %v1470, 16
        %v1533 = vor.u32 %v1530, %v1531
        %v1534 = vrot.slane %v1530, 4
        %s1551 = scalar_lea.vmem [#allocation2], 248
        %v1552 = vld [vmem:[%s1551] sm:$0xf]
        %v1553 = vsel %vm1104, %v1477, %v1552
        %1554 = vst [vmem:[%s1551] sm:$0xf] %v1553
        %v1555 = vld [vmem:[%s1551 + $0x4] sm:$0x1]
        %v1556 = vsel %vm351, %v1478, %v1555
        %1557 = vst [vmem:[%s1551 + $0x4] sm:$0x1] %v1556
        %v1558 = vld [vmem:[%s1551 + $0x8] sm:$0xf]
        %v1559 = vsel %vm1104, %v1485, %v1558
        %1560 = vst [vmem:[%s1551 + $0x8] sm:$0xf] %v1559
        %v1561 = vld [vmem:[%s1551 + $0xc] sm:$0x1]
        %v1562 = vsel %vm351, %v1486, %v1561
        %1563 = vst [vmem:[%s1551 + $0xc] sm:$0x1] %v1562
        %v1564 = vld [vmem:[%s1551 + $0x10] sm:$0xf]
        %v1565 = vsel %vm1104, %v1493, %v1564
        %1566 = vst [vmem:[%s1551 + $0x10] sm:$0xf] %v1565
        %v1567 = vld [vmem:[%s1551 + $0x14] sm:$0x1]
        %v1568 = vsel %vm351, %v1494, %v1567
        %1569 = vst [vmem:[%s1551 + $0x14] sm:$0x1] %v1568
        %v1570 = vld [vmem:[%s1551 + $0x18] sm:$0xf]
        %v1571 = vsel %vm1104, %v1501, %v1570
        %1572 = vst [vmem:[%s1551 + $0x18] sm:$0xf] %v1571
        %v1573 = vld [vmem:[%s1551 + $0x1c] sm:$0x1]
        %v1574 = vsel %vm351, %v1502, %v1573
        %1575 = vst [vmem:[%s1551 + $0x1c] sm:$0x1] %v1574
        %v1576 = vld [vmem:[%s1551 + $0x20] sm:$0xf]
        %v1577 = vsel %vm1104, %v1509, %v1576
        %1578 = vst [vmem:[%s1551 + $0x20] sm:$0xf] %v1577
        %v1579 = vld [vmem:[%s1551 + $0x24] sm:$0x1]
        %v1580 = vsel %vm351, %v1510, %v1579
        %1581 = vst [vmem:[%s1551 + $0x24] sm:$0x1] %v1580
        %v1582 = vld [vmem:[%s1551 + $0x28] sm:$0xf]
        %v1583 = vsel %vm1104, %v1517, %v1582
        %1584 = vst [vmem:[%s1551 + $0x28] sm:$0xf] %v1583
        %v1585 = vld [vmem:[%s1551 + $0x2c] sm:$0x1]
        %v1586 = vsel %vm351, %v1518, %v1585
        %1587 = vst [vmem:[%s1551 + $0x2c] sm:$0x1] %v1586
        %v1588 = vld [vmem:[%s1551 + $0x30] sm:$0xf]
        %v1589 = vsel %vm1104, %v1525, %v1588
        %1590 = vst [vmem:[%s1551 + $0x30] sm:$0xf] %v1589
        %v1591 = vld [vmem:[%s1551 + $0x34] sm:$0x1]
        %v1592 = vsel %vm351, %v1526, %v1591
        %1593 = vst [vmem:[%s1551 + $0x34] sm:$0x1] %v1592
        %v1594 = vld [vmem:[%s1551 + $0x38] sm:$0xf]
        %v1595 = vsel %vm1104, %v1533, %v1594
        %1596 = vst [vmem:[%s1551 + $0x38] sm:$0xf] %v1595
        %v1597 = vld [vmem:[%s1551 + $0x3c] sm:$0x1]
        %v1598 = vsel %vm351, %v1534, %v1597
        %1599 = vst [vmem:[%s1551 + $0x3c] sm:$0x1] %v1598
        %s1600 = scalar_lea.vmem [#allocation2], 240
        %v1601 = vld [vmem:[%s1600] sm:$0xf]
        %v1602 = vld [vmem:[%s1600 + $0x8] sm:$0xf]
        %v1603 = vld [vmem:[%s1600 + $0x10] sm:$0xf]
        %v1604 = vld [vmem:[%s1600 + $0x18] sm:$0xf]
        %v1605 = vld [vmem:[%s1600 + $0x20] sm:$0xf]
        %v1606 = vld [vmem:[%s1600 + $0x28] sm:$0xf]
        %v1607 = vld [vmem:[%s1600 + $0x30] sm:$0xf]
        %v1608 = vld [vmem:[%s1600 + $0x38] sm:$0xf]
        %v1609 = vld [vmem:[%s3] sm:$0xf]
        %v1610 = vld [vmem:[%s3 + $0x4] sm:$0xf]
        %v1611 = vld [vmem:[%s3 + $0x8] sm:$0xf]
        %v1612 = vld [vmem:[%s3 + $0xc] sm:$0xf]
        %v1613 = vld [vmem:[%s3 + $0x10] sm:$0xf]
        %v1614 = vld [vmem:[%s3 + $0x14] sm:$0xf]
        %v1615 = vld [vmem:[%s3 + $0x18] sm:$0xf]
        %v1616 = vld [vmem:[%s3 + $0x1c] sm:$0xf]
        %v1617 = vld [vmem:[%s3 + $0x20] sm:$0xf]
        %v1618 = vld [vmem:[%s3 + $0x24] sm:$0xf]
        %v1619 = vld [vmem:[%s3 + $0x28] sm:$0xf]
        %v1620 = vld [vmem:[%s3 + $0x2c] sm:$0xf]
        %v1621 = vld [vmem:[%s3 + $0x30] sm:$0xf]
        %v1622 = vld [vmem:[%s3 + $0x34] sm:$0xf]
        %v1623 = vld [vmem:[%s3 + $0x38] sm:$0xf]
        %v1624 = vld [vmem:[%s3 + $0x3c] sm:$0xf]
        %v1633 = vunpack.c.l.b16 %v1601
        %v1634 = vunpack.c.l.b16 %v1602
        %v1635 = vunpack.c.l.b16 %v1603
        %v1636 = vunpack.c.l.b16 %v1604
        %v1637 = vunpack.c.l.b16 %v1605
        %v1638 = vunpack.c.l.b16 %v1606
        %v1639 = vunpack.c.l.b16 %v1607
        %v1640 = vunpack.c.l.b16 %v1608
        %v1641 = vpack.c.b16 %v1634, %v1633
        %v1642 = vpack.c.b16 %v1636, %v1635
        %v1643 = vpack.c.b16 %v1638, %v1637
        %v1644 = vpack.c.b16 %v1640, %v1639
        %v1665 = vunpack.c.l.b16 %v1609
        %v1666 = vunpack.c.l.b16 %v1610
        %v1667 = vunpack.c.l.b16 %v1611
        %v1668 = vunpack.c.l.b16 %v1612
        %v1669 = vunpack.c.l.b16 %v1613
        %v1670 = vunpack.c.l.b16 %v1614
        %v1671 = vunpack.c.l.b16 %v1615
        %v1672 = vunpack.c.l.b16 %v1616
        %v1673 = vunpack.c.l.b16 %v1617
        %v1674 = vunpack.c.l.b16 %v1618
        %v1675 = vunpack.c.l.b16 %v1619
        %v1676 = vunpack.c.l.b16 %v1620
        %v1677 = vunpack.c.l.b16 %v1621
        %v1678 = vunpack.c.l.b16 %v1622
        %v1679 = vunpack.c.l.b16 %v1623
        %v1680 = vunpack.c.l.b16 %v1624
        %v1681 = vpack.c.b16 %v1666, %v1665
        %v1682 = vpack.c.b16 %v1668, %v1667
        %v1683 = vpack.c.b16 %v1670, %v1669
        %v1684 = vpack.c.b16 %v1672, %v1671
        %v1685 = vpack.c.b16 %v1674, %v1673
        %v1686 = vpack.c.b16 %v1676, %v1675
        %v1687 = vpack.c.b16 %v1678, %v1677
        %v1688 = vpack.c.b16 %v1680, %v1679
        %1697 = vmatprep.subr.bf16.mxu0 0
        %1698 = vmatpush1.bf16.msra.mxu0 %v1681
        %1699 = vmatprep.subr.bf16.mxu0 0
        %1700 = vmatpush1.bf16.msra.mxu0 %v1682
        %1701 = vmatprep.subr.bf16.mxu0 0
        %1702 = vmatpush1.bf16.msra.mxu0 %v1683
        %1703 = vmatprep.subr.bf16.mxu0 0
        %1704 = vmatpush1.bf16.msra.mxu0 %v1684
        %1705 = vmatprep.subr.bf16.mxu0 0
        %1706 = vmatpush1.bf16.msra.mxu0 %v1685
        %1707 = vmatprep.subr.bf16.mxu0 0
        %1708 = vmatpush1.bf16.msra.mxu0 %v1686
        %1709 = vmatprep.subr.bf16.mxu0 0
        %1710 = vmatpush1.bf16.msra.mxu0 %v1687
        %1711 = vmatprep.subr.bf16.mxu0 0
        %1712 = vmatpush1.bf16.msra.mxu0 %v1688
        %1713 = vmatprep.subr.bf16.mxu0 0
        %1714 = vmatpush1.bf16.msra.mxu0 0
        %1715 = vmatprep.subr.bf16.mxu0 0
        %1716 = vmatpush1.bf16.msra.mxu0 0
        %1717 = vmatprep.subr.bf16.mxu0 0
        %1718 = vmatpush1.bf16.msra.mxu0 0
        %1719 = vmatprep.subr.bf16.mxu0 0
        %1720 = vmatpush1.bf16.msra.mxu0 0
        %1721 = vmatprep.subr.bf16.mxu0 0
        %1722 = vmatpush1.bf16.msra.mxu0 0
        %1723 = vmatprep.subr.bf16.mxu0 0
        %1724 = vmatpush1.bf16.msra.mxu0 0
        %1725 = vmatprep.subr.bf16.mxu0 0
        %1726 = vmatpush1.bf16.msra.mxu0 0
        %1727 = vmatprep.subr.bf16.mxu0 0
        %1728 = vmatpush1.bf16.msra.mxu0 0
        %1729 = vmatprep.mubr.bf16.mxu0 0
        %1730 = vmatmul.mubr.bf16.gmra.mrb[0].mxu0 %v1641
        %v1731 = vpop.f32.mrb[0].mxu0
        %v1732 = vadd.f32 0.0, %v1731
        %v1733 = vpop.f32.mrb[0].mxu0
        %v1734 = vpop.f32.mrb[0].mxu0
        %v1735 = vadd.f32 0.0, %v1734
        %v1736 = vpop.f32.mrb[0].mxu0
        %1737 = vmatprep.mubr.bf16.mxu0 0
        %1738 = vmatmul.mubr.bf16.gmra.mrb[0].mxu0 %v1642
        %v1739 = vpop.f32.mrb[0].mxu0
        %v1740 = vadd.f32 0.0, %v1739
        %v1741 = vpop.f32.mrb[0].mxu0
        %v1742 = vpop.f32.mrb[0].mxu0
        %v1743 = vadd.f32 0.0, %v1742
        %v1744 = vpop.f32.mrb[0].mxu0
        %1745 = vmatprep.mubr.bf16.mxu0 0
        %1746 = vmatmul.mubr.bf16.gmra.mrb[0].mxu0 %v1643
        %v1747 = vpop.f32.mrb[0].mxu0
        %v1748 = vadd.f32 0.0, %v1747
        %v1749 = vpop.f32.mrb[0].mxu0
        %v1750 = vpop.f32.mrb[0].mxu0
        %v1751 = vadd.f32 0.0, %v1750
        %v1752 = vpop.f32.mrb[0].mxu0
        %1753 = vmatprep.mubr.bf16.mxu0 0
        %1754 = vmatmul.mubr.bf16.gmra.mrb[0].mxu0 %v1644
        %v1755 = vpop.f32.mrb[0].mxu0
        %v1756 = vadd.f32 0.0, %v1755
        %v1757 = vpop.f32.mrb[0].mxu0
        %v1758 = vpop.f32.mrb[0].mxu0
        %v1759 = vadd.f32 0.0, %v1758
        %v1760 = vpop.f32.mrb[0].mxu0
        %1761 = vdwg.mxu0
        %1762 = vst [vmem:[#allocation3] sm:$0xff] %v1732
        %1763 = vst [vmem:[#allocation3 + $0x8] sm:$0xff] %v1735
        %1764 = vst [vmem:[#allocation3 + $0x10] sm:$0xff] %v1740
        %1765 = vst [vmem:[#allocation3 + $0x18] sm:$0xff] %v1743
        %1766 = vst [vmem:[#allocation3 + $0x20] sm:$0xff] %v1748
        %1767 = vst [vmem:[#allocation3 + $0x28] sm:$0xff] %v1751
        %1768 = vst [vmem:[#allocation3 + $0x30] sm:$0xff] %v1756
        %1769 = vst [vmem:[#allocation3 + $0x38] sm:$0xff] %v1759
        %s1770 = scalar_lea.vmem [#allocation2], 160
        %v1771 = vld [vmem:[%s1770] sm:$0xf]
        %v1772 = vld [vmem:[%s1770 + $0x4] sm:$0x1]
        %v1773 = vld [vmem:[%s1770 + $0x8] sm:$0xf]
        %v1774 = vld [vmem:[%s1770 + $0xc] sm:$0x1]
        %v1775 = vld [vmem:[%s1770 + $0x10] sm:$0xf]
        %v1776 = vld [vmem:[%s1770 + $0x14] sm:$0x1]
        %v1777 = vld [vmem:[%s1770 + $0x18] sm:$0xf]
        %v1778 = vld [vmem:[%s1770 + $0x1c] sm:$0x1]
        %v1779 = vld [vmem:[%s1770 + $0x20] sm:$0xf]
        %v1780 = vld [vmem:[%s1770 + $0x24] sm:$0x1]
        %v1781 = vld [vmem:[%s1770 + $0x28] sm:$0xf]
        %v1782 = vld [vmem:[%s1770 + $0x2c] sm:$0x1]
        %v1783 = vld [vmem:[%s1770 + $0x30] sm:$0xf]
        %v1784 = vld [vmem:[%s1770 + $0x34] sm:$0x1]
        %v1785 = vld [vmem:[%s1770 + $0x38] sm:$0xf]
        %v1786 = vld [vmem:[%s1770 + $0x3c] sm:$0x1]
        %vm1787 = vsmask.f32 3328
        %vm1788 = vsmask.f32 7440
        %vm1789 = vmor %vm1787, %vm1788
        %v1791 = vshrl.u32 %v1771, 16
        %v1793 = vrot.slane %v1791, 4
        %v1794 = vshll.u32 %v1771, 16
        %v1796 = vrot.slane %v1794, 5
        %v1797 = vor.u32 %v1793, %v1796
        %v1798 = vrot.slane %v1797, 4
        %v1800 = vshll.u32 %v1772, 16
        %v1802 = vrot.slane %v1800, 5
        %v1803 = vsel %vm1789, %v1798, %v1802
        %v1805 = vshrl.u32 %v1773, 16
        %v1807 = vrot.slane %v1805, 4
        %v1808 = vshll.u32 %v1773, 16
        %v1810 = vrot.slane %v1808, 5
        %v1811 = vor.u32 %v1807, %v1810
        %v1812 = vrot.slane %v1811, 4
        %v1814 = vshll.u32 %v1774, 16
        %v1816 = vrot.slane %v1814, 5
        %v1817 = vsel %vm1789, %v1812, %v1816
        %v1819 = vshrl.u32 %v1775, 16
        %v1821 = vrot.slane %v1819, 4
        %v1822 = vshll.u32 %v1775, 16
        %v1824 = vrot.slane %v1822, 5
        %v1825 = vor.u32 %v1821, %v1824
        %v1826 = vrot.slane %v1825, 4
        %v1828 = vshll.u32 %v1776, 16
        %v1830 = vrot.slane %v1828, 5
        %v1831 = vsel %vm1789, %v1826, %v1830
        %v1833 = vshrl.u32 %v1777, 16
        %v1835 = vrot.slane %v1833, 4
        %v1836 = vshll.u32 %v1777, 16
        %v1838 = vrot.slane %v1836, 5
        %v1839 = vor.u32 %v1835, %v1838
        %v1840 = vrot.slane %v1839, 4
        %v1842 = vshll.u32 %v1778, 16
        %v1844 = vrot.slane %v1842, 5
        %v1845 = vsel %vm1789, %v1840, %v1844
        %v1847 = vshrl.u32 %v1779, 16
        %v1849 = vrot.slane %v1847, 4
        %v1850 = vshll.u32 %v1779, 16
        %v1852 = vrot.slane %v1850, 5
        %v1853 = vor.u32 %v1849, %v1852
        %v1854 = vrot.slane %v1853, 4
        %v1856 = vshll.u32 %v1780, 16
        %v1858 = vrot.slane %v1856, 5
        %v1859 = vsel %vm1789, %v1854, %v1858
        %v1861 = vshrl.u32 %v1781, 16
        %v1863 = vrot.slane %v1861, 4
        %v1864 = vshll.u32 %v1781, 16
        %v1866 = vrot.slane %v1864, 5
        %v1867 = vor.u32 %v1863, %v1866
        %v1868 = vrot.slane %v1867, 4
        %v1870 = vshll.u32 %v1782, 16
        %v1872 = vrot.slane %v1870, 5
        %v1873 = vsel %vm1789, %v1868, %v1872
        %v1875 = vshrl.u32 %v1783, 16
        %v1877 = vrot.slane %v1875, 4
        %v1878 = vshll.u32 %v1783, 16
        %v1880 = vrot.slane %v1878, 5
        %v1881 = vor.u32 %v1877, %v1880
        %v1882 = vrot.slane %v1881, 4
        %v1884 = vshll.u32 %v1784, 16
        %v1886 = vrot.slane %v1884, 5
        %v1887 = vsel %vm1789, %v1882, %v1886
        %v1889 = vshrl.u32 %v1785, 16
        %v1891 = vrot.slane %v1889, 4
        %v1892 = vshll.u32 %v1785, 16
        %v1894 = vrot.slane %v1892, 5
        %v1895 = vor.u32 %v1891, %v1894
        %v1896 = vrot.slane %v1895, 4
        %v1898 = vshll.u32 %v1786, 16
        %v1900 = vrot.slane %v1898, 5
        %v1901 = vsel %vm1789, %v1896, %v1900
        %s1902 = scalar_lea.vmem %s3, 64
        %v1903 = vld [vmem:[%s1902] sm:$0xf]
        %v1904 = vld [vmem:[%s1902 + $0x4] sm:$0xf]
        %v1905 = vld [vmem:[%s1902 + $0x8] sm:$0xf]
        %v1906 = vld [vmem:[%s1902 + $0xc] sm:$0xf]
        %v1907 = vld [vmem:[%s1902 + $0x10] sm:$0xf]
        %v1908 = vld [vmem:[%s1902 + $0x14] sm:$0xf]
        %v1909 = vld [vmem:[%s1902 + $0x18] sm:$0xf]
        %v1910 = vld [vmem:[%s1902 + $0x1c] sm:$0xf]
        %v1911 = vld [vmem:[%s1902 + $0x20] sm:$0xf]
        %v1912 = vld [vmem:[%s1902 + $0x24] sm:$0xf]
        %v1913 = vld [vmem:[%s1902 + $0x28] sm:$0xf]
        %v1914 = vld [vmem:[%s1902 + $0x2c] sm:$0xf]
        %v1915 = vld [vmem:[%s1902 + $0x30] sm:$0xf]
        %v1916 = vld [vmem:[%s1902 + $0x34] sm:$0xf]
        %v1917 = vld [vmem:[%s1902 + $0x38] sm:$0xf]
        %v1918 = vld [vmem:[%s1902 + $0x3c] sm:$0xf]
        %v1919 = vunpack.c.l.b16 %v1803
        %v1920 = vunpack.c.l.b16 %v1817
        %v1921 = vunpack.c.l.b16 %v1831
        %v1922 = vunpack.c.l.b16 %v1845
        %v1923 = vunpack.c.l.b16 %v1859
        %v1924 = vunpack.c.l.b16 %v1873
        %v1925 = vunpack.c.l.b16 %v1887
        %v1926 = vunpack.c.l.b16 %v1901
        %v1927 = vpack.c.b16 %v1920, %v1919
        %v1928 = vpack.c.b16 %v1922, %v1921
        %v1929 = vpack.c.b16 %v1924, %v1923
        %v1930 = vpack.c.b16 %v1926, %v1925
        %v1951 = vunpack.c.l.b16 %v1903
        %v1952 = vunpack.c.l.b16 %v1904
        %v1953 = vunpack.c.l.b16 %v1905
        %v1954 = vunpack.c.l.b16 %v1906
        %v1955 = vunpack.c.l.b16 %v1907
        %v1956 = vunpack.c.l.b16 %v1908
        %v1957 = vunpack.c.l.b16 %v1909
        %v1958 = vunpack.c.l.b16 %v1910
        %v1959 = vunpack.c.l.b16 %v1911
        %v1960 = vunpack.c.l.b16 %v1912
        %v1961 = vunpack.c.l.b16 %v1913
        %v1962 = vunpack.c.l.b16 %v1914
        %v1963 = vunpack.c.l.b16 %v1915
        %v1964 = vunpack.c.l.b16 %v1916
        %v1965 = vunpack.c.l.b16 %v1917
        %v1966 = vunpack.c.l.b16 %v1918
        %v1967 = vpack.c.b16 %v1952, %v1951
        %v1968 = vpack.c.b16 %v1954, %v1953
        %v1969 = vpack.c.b16 %v1956, %v1955
        %v1970 = vpack.c.b16 %v1958, %v1957
        %v1971 = vpack.c.b16 %v1960, %v1959
        %v1972 = vpack.c.b16 %v1962, %v1961
        %v1973 = vpack.c.b16 %v1964, %v1963
        %v1974 = vpack.c.b16 %v1966, %v1965
        %1983 = vmatprep.subr.bf16.mxu0 0
        %1984 = vmatpush1.bf16.msra.mxu0 %v1967
        %1985 = vmatprep.subr.bf16.mxu0 0
        %1986 = vmatpush1.bf16.msra.mxu0 %v1968
        %1987 = vmatprep.subr.bf16.mxu0 0
        %1988 = vmatpush1.bf16.msra.mxu0 %v1969
        %1989 = vmatprep.subr.bf16.mxu0 0
        %1990 = vmatpush1.bf16.msra.mxu0 %v1970
        %1991 = vmatprep.subr.bf16.mxu0 0
        %1992 = vmatpush1.bf16.msra.mxu0 %v1971
        %1993 = vmatprep.subr.bf16.mxu0 0
        %1994 = vmatpush1.bf16.msra.mxu0 %v1972
        %1995 = vmatprep.subr.bf16.mxu0 0
        %1996 = vmatpush1.bf16.msra.mxu0 %v1973
        %1997 = vmatprep.subr.bf16.mxu0 0
        %1998 = vmatpush1.bf16.msra.mxu0 %v1974
        %1999 = vmatprep.subr.bf16.mxu0 0
        %2000 = vmatpush1.bf16.msra.mxu0 0
        %2001 = vmatprep.subr.bf16.mxu0 0
        %2002 = vmatpush1.bf16.msra.mxu0 0
        %2003 = vmatprep.subr.bf16.mxu0 0
        %2004 = vmatpush1.bf16.msra.mxu0 0
        %2005 = vmatprep.subr.bf16.mxu0 0
        %2006 = vmatpush1.bf16.msra.mxu0 0
        %2007 = vmatprep.subr.bf16.mxu0 0
        %2008 = vmatpush1.bf16.msra.mxu0 0
        %2009 = vmatprep.subr.bf16.mxu0 0
        %2010 = vmatpush1.bf16.msra.mxu0 0
        %2011 = vmatprep.subr.bf16.mxu0 0
        %2012 = vmatpush1.bf16.msra.mxu0 0
        %2013 = vmatprep.subr.bf16.mxu0 0
        %2014 = vmatpush1.bf16.msra.mxu0 0
        %2015 = vmatprep.mubr.bf16.mxu0 0
        %2016 = vmatmul.mubr.bf16.gmra.mrb[0].mxu0 %v1927
        %v2017 = vpop.f32.mrb[0].mxu0
        %v2018 = vadd.f32 0.0, %v2017
        %v2019 = vpop.f32.mrb[0].mxu0
        %v2020 = vpop.f32.mrb[0].mxu0
        %v2021 = vadd.f32 0.0, %v2020
        %v2022 = vpop.f32.mrb[0].mxu0
        %2023 = vmatprep.mubr.bf16.mxu0 0
        %2024 = vmatmul.mubr.bf16.gmra.mrb[0].mxu0 %v1928
        %v2025 = vpop.f32.mrb[0].mxu0
        %v2026 = vadd.f32 0.0, %v2025
        %v2027 = vpop.f32.mrb[0].mxu0
        %v2028 = vpop.f32.mrb[0].mxu0
        %v2029 = vadd.f32 0.0, %v2028
        %v2030 = vpop.f32.mrb[0].mxu0
        %2031 = vmatprep.mubr.bf16.mxu0 0
        %2032 = vmatmul.mubr.bf16.gmra.mrb[0].mxu0 %v1929
        %v2033 = vpop.f32.mrb[0].mxu0
        %v2034 = vadd.f32 0.0, %v2033
        %v2035 = vpop.f32.mrb[0].mxu0
        %v2036 = vpop.f32.mrb[0].mxu0
        %v2037 = vadd.f32 0.0, %v2036
        %v2038 = vpop.f32.mrb[0].mxu0
        %2039 = vmatprep.mubr.bf16.mxu0 0
        %2040 = vmatmul.mubr.bf16.gmra.mrb[0].mxu0 %v1930
        %v2041 = vpop.f32.mrb[0].mxu0
        %v2042 = vadd.f32 0.0, %v2041
        %v2043 = vpop.f32.mrb[0].mxu0
        %v2044 = vpop.f32.mrb[0].mxu0
        %v2045 = vadd.f32 0.0, %v2044
        %v2046 = vpop.f32.mrb[0].mxu0
        %2047 = vdwg.mxu0
        %v2048 = vld [vmem:[#allocation3] sm:$0xff]
        %v2049 = vld [vmem:[#allocation3 + $0x8] sm:$0xff]
        %v2050 = vld [vmem:[#allocation3 + $0x10] sm:$0xff]
        %v2051 = vld [vmem:[#allocation3 + $0x18] sm:$0xff]
        %v2052 = vld [vmem:[#allocation3 + $0x20] sm:$0xff]
        %v2053 = vld [vmem:[#allocation3 + $0x28] sm:$0xff]
        %v2054 = vld [vmem:[#allocation3 + $0x30] sm:$0xff]
        %v2055 = vld [vmem:[#allocation3 + $0x38] sm:$0xff]
        %v2056 = vadd.f32 %v2048, %v2018
        %v2057 = vadd.f32 %v2049, %v2021
        %v2058 = vadd.f32 %v2050, %v2026
        %v2059 = vadd.f32 %v2051, %v2029
        %v2060 = vadd.f32 %v2052, %v2034
        %v2061 = vadd.f32 %v2053, %v2037
        %v2062 = vadd.f32 %v2054, %v2042
        %v2063 = vadd.f32 %v2055, %v2045
        %2064 = vst [vmem:[#allocation3] sm:$0xff] %v2056
        %2065 = vst [vmem:[#allocation3 + $0x8] sm:$0xff] %v2057
        %2066 = vst [vmem:[#allocation3 + $0x10] sm:$0xff] %v2058
        %2067 = vst [vmem:[#allocation3 + $0x18] sm:$0xff] %v2059
        %2068 = vst [vmem:[#allocation3 + $0x20] sm:$0xff] %v2060
        %2069 = vst [vmem:[#allocation3 + $0x28] sm:$0xff] %v2061
        %2070 = vst [vmem:[#allocation3 + $0x30] sm:$0xff] %v2062
        %2071 = vst [vmem:[#allocation3 + $0x38] sm:$0xff] %v2063
        %v2072 = vld [vmem:[%s1600] sm:$0xf]
        %v2073 = vld [vmem:[%s1600 + $0x4] sm:$0x1]
        %v2074 = vld [vmem:[%s1600 + $0x8] sm:$0xf]
        %v2075 = vld [vmem:[%s1600 + $0xc] sm:$0x1]
        %v2076 = vld [vmem:[%s1600 + $0x10] sm:$0xf]
        %v2077 = vld [vmem:[%s1600 + $0x14] sm:$0x1]
        %v2078 = vld [vmem:[%s1600 + $0x18] sm:$0xf]
        %v2079 = vld [vmem:[%s1600 + $0x1c] sm:$0x1]
        %v2080 = vld [vmem:[%s1600 + $0x20] sm:$0xf]
        %v2081 = vld [vmem:[%s1600 + $0x24] sm:$0x1]
        %v2082 = vld [vmem:[%s1600 + $0x28] sm:$0xf]
        %v2083 = vld [vmem:[%s1600 + $0x2c] sm:$0x1]
        %v2084 = vld [vmem:[%s1600 + $0x30] sm:$0xf]
        %v2085 = vld [vmem:[%s1600 + $0x34] sm:$0x1]
        %v2086 = vld [vmem:[%s1600 + $0x38] sm:$0xf]
        %v2087 = vld [vmem:[%s1600 + $0x3c] sm:$0x1]
        %v2089 = vshrl.u32 %v2072, 16
        %v2091 = vrot.slane %v2089, 4
        %v2092 = vshll.u32 %v2072, 16
        %v2094 = vrot.slane %v2092, 5
        %v2095 = vor.u32 %v2091, %v2094
        %v2096 = vrot.slane %v2095, 4
        %v2098 = vshll.u32 %v2073, 16
        %v2100 = vrot.slane %v2098, 5
        %v2101 = vsel %vm1789, %v2096, %v2100
        %v2103 = vshrl.u32 %v2074, 16
        %v2105 = vrot.slane %v2103, 4
        %v2106 = vshll.u32 %v2074, 16
        %v2108 = vrot.slane %v2106, 5
        %v2109 = vor.u32 %v2105, %v2108
        %v2110 = vrot.slane %v2109, 4
        %v2112 = vshll.u32 %v2075, 16
        %v2114 = vrot.slane %v2112, 5
        %v2115 = vsel %vm1789, %v2110, %v2114
        %v2117 = vshrl.u32 %v2076, 16
        %v2119 = vrot.slane %v2117, 4
        %v2120 = vshll.u32 %v2076, 16
        %v2122 = vrot.slane %v2120, 5
        %v2123 = vor.u32 %v2119, %v2122
        %v2124 = vrot.slane %v2123, 4
        %v2126 = vshll.u32 %v2077, 16
        %v2128 = vrot.slane %v2126, 5
        %v2129 = vsel %vm1789, %v2124, %v2128
        %v2131 = vshrl.u32 %v2078, 16
        %v2133 = vrot.slane %v2131, 4
        %v2134 = vshll.u32 %v2078, 16
        %v2136 = vrot.slane %v2134, 5
        %v2137 = vor.u32 %v2133, %v2136
        %v2138 = vrot.slane %v2137, 4
        %v2140 = vshll.u32 %v2079, 16
        %v2142 = vrot.slane %v2140, 5
        %v2143 = vsel %vm1789, %v2138, %v2142
        %v2145 = vshrl.u32 %v2080, 16
        %v2147 = vrot.slane %v2145, 4
        %v2148 = vshll.u32 %v2080, 16
        %v2150 = vrot.slane %v2148, 5
        %v2151 = vor.u32 %v2147, %v2150
        %v2152 = vrot.slane %v2151, 4
        %v2154 = vshll.u32 %v2081, 16
        %v2156 = vrot.slane %v2154, 5
        %v2157 = vsel %vm1789, %v2152, %v2156
        %v2159 = vshrl.u32 %v2082, 16
        %v2161 = vrot.slane %v2159, 4
        %v2162 = vshll.u32 %v2082, 16
        %v2164 = vrot.slane %v2162, 5
        %v2165 = vor.u32 %v2161, %v2164
        %v2166 = vrot.slane %v2165, 4
        %v2168 = vshll.u32 %v2083, 16
        %v2170 = vrot.slane %v2168, 5
        %v2171 = vsel %vm1789, %v2166, %v2170
        %v2173 = vshrl.u32 %v2084, 16
        %v2175 = vrot.slane %v2173, 4
        %v2176 = vshll.u32 %v2084, 16
        %v2178 = vrot.slane %v2176, 5
        %v2179 = vor.u32 %v2175, %v2178
        %v2180 = vrot.slane %v2179, 4
        %v2182 = vshll.u32 %v2085, 16
        %v2184 = vrot.slane %v2182, 5
        %v2185 = vsel %vm1789, %v2180, %v2184
        %v2187 = vshrl.u32 %v2086, 16
        %v2189 = vrot.slane %v2187, 4
        %v2190 = vshll.u32 %v2086, 16
        %v2192 = vrot.slane %v2190, 5
        %v2193 = vor.u32 %v2189, %v2192
        %v2194 = vrot.slane %v2193, 4
        %v2196 = vshll.u32 %v2087, 16
        %v2198 = vrot.slane %v2196, 5
        %v2199 = vsel %vm1789, %v2194, %v2198
        %s2200 = scalar_lea.vmem %s3, 128
        %v2201 = vld [vmem:[%s2200] sm:$0xf]
        %v2202 = vld [vmem:[%s2200 + $0x4] sm:$0xf]
        %v2203 = vld [vmem:[%s2200 + $0x8] sm:$0xf]
        %v2204 = vld [vmem:[%s2200 + $0xc] sm:$0xf]
        %v2205 = vld [vmem:[%s2200 + $0x10] sm:$0xf]
        %v2206 = vld [vmem:[%s2200 + $0x14] sm:$0xf]
        %v2207 = vld [vmem:[%s2200 + $0x18] sm:$0xf]
        %v2208 = vld [vmem:[%s2200 + $0x1c] sm:$0xf]
        %v2209 = vld [vmem:[%s2200 + $0x20] sm:$0xf]
        %v2210 = vld [vmem:[%s2200 + $0x24] sm:$0xf]
        %v2211 = vld [vmem:[%s2200 + $0x28] sm:$0xf]
        %v2212 = vld [vmem:[%s2200 + $0x2c] sm:$0xf]
        %v2213 = vld [vmem:[%s2200 + $0x30] sm:$0xf]
        %v2214 = vld [vmem:[%s2200 + $0x34] sm:$0xf]
        %v2215 = vld [vmem:[%s2200 + $0x38] sm:$0xf]
        %v2216 = vld [vmem:[%s2200 + $0x3c] sm:$0xf]
        %v2217 = vunpack.c.l.b16 %v2101
        %v2218 = vunpack.c.l.b16 %v2115
        %v2219 = vunpack.c.l.b16 %v2129
        %v2220 = vunpack.c.l.b16 %v2143
        %v2221 = vunpack.c.l.b16 %v2157
        %v2222 = vunpack.c.l.b16 %v2171
        %v2223 = vunpack.c.l.b16 %v2185
        %v2224 = vunpack.c.l.b16 %v2199
        %v2225 = vpack.c.b16 %v2218, %v2217
        %v2226 = vpack.c.b16 %v2220, %v2219
        %v2227 = vpack.c.b16 %v2222, %v2221
        %v2228 = vpack.c.b16 %v2224, %v2223
        %v2249 = vunpack.c.l.b16 %v2201
        %v2250 = vunpack.c.l.b16 %v2202
        %v2251 = vunpack.c.l.b16 %v2203
        %v2252 = vunpack.c.l.b16 %v2204
        %v2253 = vunpack.c.l.b16 %v2205
        %v2254 = vunpack.c.l.b16 %v2206
        %v2255 = vunpack.c.l.b16 %v2207
        %v2256 = vunpack.c.l.b16 %v2208
        %v2257 = vunpack.c.l.b16 %v2209
        %v2258 = vunpack.c.l.b16 %v2210
        %v2259 = vunpack.c.l.b16 %v2211
        %v2260 = vunpack.c.l.b16 %v2212
        %v2261 = vunpack.c.l.b16 %v2213
        %v2262 = vunpack.c.l.b16 %v2214
        %v2263 = vunpack.c.l.b16 %v2215
        %v2264 = vunpack.c.l.b16 %v2216
        %v2265 = vpack.c.b16 %v2250, %v2249
        %v2266 = vpack.c.b16 %v2252, %v2251
        %v2267 = vpack.c.b16 %v2254, %v2253
        %v2268 = vpack.c.b16 %v2256, %v2255
        %v2269 = vpack.c.b16 %v2258, %v2257
        %v2270 = vpack.c.b16 %v2260, %v2259
        %v2271 = vpack.c.b16 %v2262, %v2261
        %v2272 = vpack.c.b16 %v2264, %v2263
        %2281 = vmatprep.subr.bf16.mxu0 0
        %2282 = vmatpush1.bf16.msra.mxu0 %v2265
        %2283 = vmatprep.subr.bf16.mxu0 0
        %2284 = vmatpush1.bf16.msra.mxu0 %v2266
        %2285 = vmatprep.subr.bf16.mxu0 0
        %2286 = vmatpush1.bf16.msra.mxu0 %v2267
        %2287 = vmatprep.subr.bf16.mxu0 0
        %2288 = vmatpush1.bf16.msra.mxu0 %v2268
        %2289 = vmatprep.subr.bf16.mxu0 0
        %2290 = vmatpush1.bf16.msra.mxu0 %v2269
        %2291 = vmatprep.subr.bf16.mxu0 0
        %2292 = vmatpush1.bf16.msra.mxu0 %v2270
        %2293 = vmatprep.subr.bf16.mxu0 0
        %2294 = vmatpush1.bf16.msra.mxu0 %v2271
        %2295 = vmatprep.subr.bf16.mxu0 0
        %2296 = vmatpush1.bf16.msra.mxu0 %v2272
        %2297 = vmatprep.subr.bf16.mxu0 0
        %2298 = vmatpush1.bf16.msra.mxu0 0
        %2299 = vmatprep.subr.bf16.mxu0 0
        %2300 = vmatpush1.bf16.msra.mxu0 0
        %2301 = vmatprep.subr.bf16.mxu0 0
        %2302 = vmatpush1.bf16.msra.mxu0 0
        %2303 = vmatprep.subr.bf16.mxu0 0
        %2304 = vmatpush1.bf16.msra.mxu0 0
        %2305 = vmatprep.subr.bf16.mxu0 0
        %2306 = vmatpush1.bf16.msra.mxu0 0
        %2307 = vmatprep.subr.bf16.mxu0 0
        %2308 = vmatpush1.bf16.msra.mxu0 0
        %2309 = vmatprep.subr.bf16.mxu0 0
        %2310 = vmatpush1.bf16.msra.mxu0 0
        %2311 = vmatprep.subr.bf16.mxu0 0
        %2312 = vmatpush1.bf16.msra.mxu0 0
        %2313 = vmatprep.mubr.bf16.mxu0 0
        %2314 = vmatmul.mubr.bf16.gmra.mrb[0].mxu0 %v2225
        %v2315 = vpop.f32.mrb[0].mxu0
        %v2316 = vadd.f32 0.0, %v2315
        %v2317 = vpop.f32.mrb[0].mxu0
        %v2318 = vpop.f32.mrb[0].mxu0
        %v2319 = vadd.f32 0.0, %v2318
        %v2320 = vpop.f32.mrb[0].mxu0
        %2321 = vmatprep.mubr.bf16.mxu0 0
        %2322 = vmatmul.mubr.bf16.gmra.mrb[0].mxu0 %v2226
        %v2323 = vpop.f32.mrb[0].mxu0
        %v2324 = vadd.f32 0.0, %v2323
        %v2325 = vpop.f32.mrb[0].mxu0
        %v2326 = vpop.f32.mrb[0].mxu0
        %v2327 = vadd.f32 0.0, %v2326
        %v2328 = vpop.f32.mrb[0].mxu0
        %2329 = vmatprep.mubr.bf16.mxu0 0
        %2330 = vmatmul.mubr.bf16.gmra.mrb[0].mxu0 %v2227
        %v2331 = vpop.f32.mrb[0].mxu0
        %v2332 = vadd.f32 0.0, %v2331
        %v2333 = vpop.f32.mrb[0].mxu0
        %v2334 = vpop.f32.mrb[0].mxu0
        %v2335 = vadd.f32 0.0, %v2334
        %v2336 = vpop.f32.mrb[0].mxu0
        %2337 = vmatprep.mubr.bf16.mxu0 0
        %2338 = vmatmul.mubr.bf16.gmra.mrb[0].mxu0 %v2228
        %v2339 = vpop.f32.mrb[0].mxu0
        %v2340 = vadd.f32 0.0, %v2339
        %v2341 = vpop.f32.mrb[0].mxu0
        %v2342 = vpop.f32.mrb[0].mxu0
        %v2343 = vadd.f32 0.0, %v2342
        %v2344 = vpop.f32.mrb[0].mxu0
        %2345 = vdwg.mxu0
        %v2346 = vld [vmem:[#allocation3] sm:$0xff]
        %v2347 = vld [vmem:[#allocation3 + $0x8] sm:$0xff]
        %v2348 = vld [vmem:[#allocation3 + $0x10] sm:$0xff]
        %v2349 = vld [vmem:[#allocation3 + $0x18] sm:$0xff]
        %v2350 = vld [vmem:[#allocation3 + $0x20] sm:$0xff]
        %v2351 = vld [vmem:[#allocation3 + $0x28] sm:$0xff]
        %v2352 = vld [vmem:[#allocation3 + $0x30] sm:$0xff]
        %v2353 = vld [vmem:[#allocation3 + $0x38] sm:$0xff]
        %v2354 = vadd.f32 %v2346, %v2316
        %v2355 = vadd.f32 %v2347, %v2319
        %v2356 = vadd.f32 %v2348, %v2324
        %v2357 = vadd.f32 %v2349, %v2327
        %v2358 = vadd.f32 %v2350, %v2332
        %v2359 = vadd.f32 %v2351, %v2335
        %v2360 = vadd.f32 %v2352, %v2340
        %v2361 = vadd.f32 %v2353, %v2343
        %2362 = vst [vmem:[#allocation3] sm:$0xff] %v2354
        %2363 = vst [vmem:[#allocation3 + $0x8] sm:$0xff] %v2355
        %2364 = vst [vmem:[#allocation3 + $0x10] sm:$0xff] %v2356
        %2365 = vst [vmem:[#allocation3 + $0x18] sm:$0xff] %v2357
        %2366 = vst [vmem:[#allocation3 + $0x20] sm:$0xff] %v2358
        %2367 = vst [vmem:[#allocation3 + $0x28] sm:$0xff] %v2359
        %2368 = vst [vmem:[#allocation3 + $0x30] sm:$0xff] %v2360
        %2369 = vst [vmem:[#allocation3 + $0x38] sm:$0xff] %v2361
        %v2370 = vld [vmem:[%s1253] sm:$0xf]
        %v2371 = vld [vmem:[%s1253 + $0x8] sm:$0xf]
        %v2372 = vld [vmem:[%s1253 + $0x10] sm:$0xf]
        %v2373 = vld [vmem:[%s1253 + $0x18] sm:$0xf]
        %v2374 = vld [vmem:[%s1253 + $0x20] sm:$0xf]
        %v2375 = vld [vmem:[%s1253 + $0x28] sm:$0xf]
        %v2376 = vld [vmem:[%s1253 + $0x30] sm:$0xf]
        %v2377 = vld [vmem:[%s1253 + $0x38] sm:$0xf]
        %s2378 = scalar_lea.vmem %s3, 192
        %v2379 = vld [vmem:[%s2378] sm:$0xf]
        %v2380 = vld [vmem:[%s2378 + $0x4] sm:$0xf]
        %v2381 = vld [vmem:[%s2378 + $0x8] sm:$0xf]
        %v2382 = vld [vmem:[%s2378 + $0xc] sm:$0xf]
        %v2383 = vld [vmem:[%s2378 + $0x10] sm:$0xf]
        %v2384 = vld [vmem:[%s2378 + $0x14] sm:$0xf]
        %v2385 = vld [vmem:[%s2378 + $0x18] sm:$0xf]
        %v2386 = vld [vmem:[%s2378 + $0x1c] sm:$0xf]
        %v2387 = vld [vmem:[%s2378 + $0x20] sm:$0xf]
        %v2388 = vld [vmem:[%s2378 + $0x24] sm:$0xf]
        %v2389 = vld [vmem:[%s2378 + $0x28] sm:$0xf]
        %v2390 = vld [vmem:[%s2378 + $0x2c] sm:$0xf]
        %v2391 = vld [vmem:[%s2378 + $0x30] sm:$0xf]
        %v2392 = vld [vmem:[%s2378 + $0x34] sm:$0xf]
        %v2393 = vld [vmem:[%s2378 + $0x38] sm:$0xf]
        %v2394 = vld [vmem:[%s2378 + $0x3c] sm:$0xf]
        %v2403 = vunpack.c.l.b16 %v2370
        %v2404 = vunpack.c.l.b16 %v2371
        %v2405 = vunpack.c.l.b16 %v2372
        %v2406 = vunpack.c.l.b16 %v2373
        %v2407 = vunpack.c.l.b16 %v2374
        %v2408 = vunpack.c.l.b16 %v2375
        %v2409 = vunpack.c.l.b16 %v2376
        %v2410 = vunpack.c.l.b16 %v2377
        %v2411 = vpack.c.b16 %v2404, %v2403
        %v2412 = vpack.c.b16 %v2406, %v2405
        %v2413 = vpack.c.b16 %v2408, %v2407
        %v2414 = vpack.c.b16 %v2410, %v2409
        %v2435 = vunpack.c.l.b16 %v2379
        %v2436 = vunpack.c.l.b16 %v2380
        %v2437 = vunpack.c.l.b16 %v2381
        %v2438 = vunpack.c.l.b16 %v2382
        %v2439 = vunpack.c.l.b16 %v2383
        %v2440 = vunpack.c.l.b16 %v2384
        %v2441 = vunpack.c.l.b16 %v2385
        %v2442 = vunpack.c.l.b16 %v2386
        %v2443 = vunpack.c.l.b16 %v2387
        %v2444 = vunpack.c.l.b16 %v2388
        %v2445 = vunpack.c.l.b16 %v2389
        %v2446 = vunpack.c.l.b16 %v2390
        %v2447 = vunpack.c.l.b16 %v2391
        %v2448 = vunpack.c.l.b16 %v2392
        %v2449 = vunpack.c.l.b16 %v2393
        %v2450 = vunpack.c.l.b16 %v2394
        %v2451 = vpack.c.b16 %v2436, %v2435
        %v2452 = vpack.c.b16 %v2438, %v2437
        %v2453 = vpack.c.b16 %v2440, %v2439
        %v2454 = vpack.c.b16 %v2442, %v2441
        %v2455 = vpack.c.b16 %v2444, %v2443
        %v2456 = vpack.c.b16 %v2446, %v2445
        %v2457 = vpack.c.b16 %v2448, %v2447
        %v2458 = vpack.c.b16 %v2450, %v2449
        %2467 = vmatprep.subr.bf16.mxu0 0
        %2468 = vmatpush1.bf16.msra.mxu0 %v2451
        %2469 = vmatprep.subr.bf16.mxu0 0
        %2470 = vmatpush1.bf16.msra.mxu0 %v2452
        %2471 = vmatprep.subr.bf16.mxu0 0
        %2472 = vmatpush1.bf16.msra.mxu0 %v2453
        %2473 = vmatprep.subr.bf16.mxu0 0
        %2474 = vmatpush1.bf16.msra.mxu0 %v2454
        %2475 = vmatprep.subr.bf16.mxu0 0
        %2476 = vmatpush1.bf16.msra.mxu0 %v2455
        %2477 = vmatprep.subr.bf16.mxu0 0
        %2478 = vmatpush1.bf16.msra.mxu0 %v2456
        %2479 = vmatprep.subr.bf16.mxu0 0
        %2480 = vmatpush1.bf16.msra.mxu0 %v2457
        %2481 = vmatprep.subr.bf16.mxu0 0
        %2482 = vmatpush1.bf16.msra.mxu0 %v2458
        %2483 = vmatprep.subr.bf16.mxu0 0
        %2484 = vmatpush1.bf16.msra.mxu0 0
        %2485 = vmatprep.subr.bf16.mxu0 0
        %2486 = vmatpush1.bf16.msra.mxu0 0
        %2487 = vmatprep.subr.bf16.mxu0 0
        %2488 = vmatpush1.bf16.msra.mxu0 0
        %2489 = vmatprep.subr.bf16.mxu0 0
        %2490 = vmatpush1.bf16.msra.mxu0 0
        %2491 = vmatprep.subr.bf16.mxu0 0
        %2492 = vmatpush1.bf16.msra.mxu0 0
        %2493 = vmatprep.subr.bf16.mxu0 0
        %2494 = vmatpush1.bf16.msra.mxu0 0
        %2495 = vmatprep.subr.bf16.mxu0 0
        %2496 = vmatpush1.bf16.msra.mxu0 0
        %2497 = vmatprep.subr.bf16.mxu0 0
        %2498 = vmatpush1.bf16.msra.mxu0 0
        %2499 = vmatprep.mubr.bf16.mxu0 0
        %2500 = vmatmul.mubr.bf16.gmra.mrb[0].mxu0 %v2411
        %v2501 = vpop.f32.mrb[0].mxu0
        %v2502 = vadd.f32 0.0, %v2501
        %v2503 = vpop.f32.mrb[0].mxu0
        %v2504 = vpop.f32.mrb[0].mxu0
        %v2505 = vadd.f32 0.0, %v2504
        %v2506 = vpop.f32.mrb[0].mxu0
        %2507 = vmatprep.mubr.bf16.mxu0 0
        %2508 = vmatmul.mubr.bf16.gmra.mrb[0].mxu0 %v2412
        %v2509 = vpop.f32.mrb[0].mxu0
        %v2510 = vadd.f32 0.0, %v2509
        %v2511 = vpop.f32.mrb[0].mxu0
        %v2512 = vpop.f32.mrb[0].mxu0
        %v2513 = vadd.f32 0.0, %v2512
        %v2514 = vpop.f32.mrb[0].mxu0
        %2515 = vmatprep.mubr.bf16.mxu0 0
        %2516 = vmatmul.mubr.bf16.gmra.mrb[0].mxu0 %v2413
        %v2517 = vpop.f32.mrb[0].mxu0
        %v2518 = vadd.f32 0.0, %v2517
        %v2519 = vpop.f32.mrb[0].mxu0
        %v2520 = vpop.f32.mrb[0].mxu0
        %v2521 = vadd.f32 0.0, %v2520
        %v2522 = vpop.f32.mrb[0].mxu0
        %2523 = vmatprep.mubr.bf16.mxu0 0
        %2524 = vmatmul.mubr.bf16.gmra.mrb[0].mxu0 %v2414
        %v2525 = vpop.f32.mrb[0].mxu0
        %v2526 = vadd.f32 0.0, %v2525
        %v2527 = vpop.f32.mrb[0].mxu0
        %v2528 = vpop.f32.mrb[0].mxu0
        %v2529 = vadd.f32 0.0, %v2528
        %v2530 = vpop.f32.mrb[0].mxu0
        %2531 = vdwg.mxu0
        %v2532 = vld [vmem:[#allocation3] sm:$0xff]
        %v2533 = vld [vmem:[#allocation3 + $0x8] sm:$0xff]
        %v2534 = vld [vmem:[#allocation3 + $0x10] sm:$0xff]
        %v2535 = vld [vmem:[#allocation3 + $0x18] sm:$0xff]
        %v2536 = vld [vmem:[#allocation3 + $0x20] sm:$0xff]
        %v2537 = vld [vmem:[#allocation3 + $0x28] sm:$0xff]
        %v2538 = vld [vmem:[#allocation3 + $0x30] sm:$0xff]
        %v2539 = vld [vmem:[#allocation3 + $0x38] sm:$0xff]
        %v2540 = vadd.f32 %v2532, %v2502
        %v2541 = vadd.f32 %v2533, %v2505
        %v2542 = vadd.f32 %v2534, %v2510
        %v2543 = vadd.f32 %v2535, %v2513
        %v2544 = vadd.f32 %v2536, %v2518
        %v2545 = vadd.f32 %v2537, %v2521
        %v2546 = vadd.f32 %v2538, %v2526
        %v2547 = vadd.f32 %v2539, %v2529
        %2548 = vst [vmem:[#allocation3] sm:$0xff] %v2540
        %2549 = vst [vmem:[#allocation3 + $0x8] sm:$0xff] %v2541
        %2550 = vst [vmem:[#allocation3 + $0x10] sm:$0xff] %v2542
        %2551 = vst [vmem:[#allocation3 + $0x18] sm:$0xff] %v2543
        %2552 = vst [vmem:[#allocation3 + $0x20] sm:$0xff] %v2544
        %2553 = vst [vmem:[#allocation3 + $0x28] sm:$0xff] %v2545
        %2554 = vst [vmem:[#allocation3 + $0x30] sm:$0xff] %v2546
        %2555 = vst [vmem:[#allocation3 + $0x38] sm:$0xff] %v2547
        %v2556 = vld [vmem:[%s1102] sm:$0xf]
        %v2557 = vld [vmem:[%s1102 + $0x4] sm:$0x1]
        %v2558 = vld [vmem:[%s1102 + $0x8] sm:$0xf]
        %v2559 = vld [vmem:[%s1102 + $0xc] sm:$0x1]
        %v2560 = vld [vmem:[%s1102 + $0x10] sm:$0xf]
        %v2561 = vld [vmem:[%s1102 + $0x14] sm:$0x1]
        %v2562 = vld [vmem:[%s1102 + $0x18] sm:$0xf]
        %v2563 = vld [vmem:[%s1102 + $0x1c] sm:$0x1]
        %v2564 = vld [vmem:[%s1102 + $0x20] sm:$0xf]
        %v2565 = vld [vmem:[%s1102 + $0x24] sm:$0x1]
        %v2566 = vld [vmem:[%s1102 + $0x28] sm:$0xf]
        %v2567 = vld [vmem:[%s1102 + $0x2c] sm:$0x1]
        %v2568 = vld [vmem:[%s1102 + $0x30] sm:$0xf]
        %v2569 = vld [vmem:[%s1102 + $0x34] sm:$0x1]
        %v2570 = vld [vmem:[%s1102 + $0x38] sm:$0xf]
        %v2571 = vld [vmem:[%s1102 + $0x3c] sm:$0x1]
        %v2573 = vshrl.u32 %v2556, 16
        %v2575 = vrot.slane %v2573, 4
        %v2576 = vshll.u32 %v2556, 16
        %v2578 = vrot.slane %v2576, 5
        %v2579 = vor.u32 %v2575, %v2578
        %v2580 = vrot.slane %v2579, 4
        %v2582 = vshll.u32 %v2557, 16
        %v2584 = vrot.slane %v2582, 5
        %v2585 = vsel %vm1789, %v2580, %v2584
        %v2587 = vshrl.u32 %v2558, 16
        %v2589 = vrot.slane %v2587, 4
        %v2590 = vshll.u32 %v2558, 16
        %v2592 = vrot.slane %v2590, 5
        %v2593 = vor.u32 %v2589, %v2592
        %v2594 = vrot.slane %v2593, 4
        %v2596 = vshll.u32 %v2559, 16
        %v2598 = vrot.slane %v2596, 5
        %v2599 = vsel %vm1789, %v2594, %v2598
        %v2601 = vshrl.u32 %v2560, 16
        %v2603 = vrot.slane %v2601, 4
        %v2604 = vshll.u32 %v2560, 16
        %v2606 = vrot.slane %v2604, 5
        %v2607 = vor.u32 %v2603, %v2606
        %v2608 = vrot.slane %v2607, 4
        %v2610 = vshll.u32 %v2561, 16
        %v2612 = vrot.slane %v2610, 5
        %v2613 = vsel %vm1789, %v2608, %v2612
        %v2615 = vshrl.u32 %v2562, 16
        %v2617 = vrot.slane %v2615, 4
        %v2618 = vshll.u32 %v2562, 16
        %v2620 = vrot.slane %v2618, 5
        %v2621 = vor.u32 %v2617, %v2620
        %v2622 = vrot.slane %v2621, 4
        %v2624 = vshll.u32 %v2563, 16
        %v2626 = vrot.slane %v2624, 5
        %v2627 = vsel %vm1789, %v2622, %v2626
        %v2629 = vshrl.u32 %v2564, 16
        %v2631 = vrot.slane %v2629, 4
        %v2632 = vshll.u32 %v2564, 16
        %v2634 = vrot.slane %v2632, 5
        %v2635 = vor.u32 %v2631, %v2634
        %v2636 = vrot.slane %v2635, 4
        %v2638 = vshll.u32 %v2565, 16
        %v2640 = vrot.slane %v2638, 5
        %v2641 = vsel %vm1789, %v2636, %v2640
        %v2643 = vshrl.u32 %v2566, 16
        %v2645 = vrot.slane %v2643, 4
        %v2646 = vshll.u32 %v2566, 16
        %v2648 = vrot.slane %v2646, 5
        %v2649 = vor.u32 %v2645, %v2648
        %v2650 = vrot.slane %v2649, 4
        %v2652 = vshll.u32 %v2567, 16
        %v2654 = vrot.slane %v2652, 5
        %v2655 = vsel %vm1789, %v2650, %v2654
        %v2657 = vshrl.u32 %v2568, 16
        %v2659 = vrot.slane %v2657, 4
        %v2660 = vshll.u32 %v2568, 16
        %v2662 = vrot.slane %v2660, 5
        %v2663 = vor.u32 %v2659, %v2662
        %v2664 = vrot.slane %v2663, 4
        %v2666 = vshll.u32 %v2569, 16
        %v2668 = vrot.slane %v2666, 5
        %v2669 = vsel %vm1789, %v2664, %v2668
        %v2671 = vshrl.u32 %v2570, 16
        %v2673 = vrot.slane %v2671, 4
        %v2674 = vshll.u32 %v2570, 16
        %v2676 = vrot.slane %v2674, 5
        %v2677 = vor.u32 %v2673, %v2676
        %v2678 = vrot.slane %v2677, 4
        %v2680 = vshll.u32 %v2571, 16
        %v2682 = vrot.slane %v2680, 5
        %v2683 = vsel %vm1789, %v2678, %v2682
        %s2684 = scalar_lea.vmem %s3, 256
        %v2685 = vld [vmem:[%s2684] sm:$0xf]
        %v2686 = vld [vmem:[%s2684 + $0x4] sm:$0xf]
        %v2687 = vld [vmem:[%s2684 + $0x8] sm:$0xf]
        %v2688 = vld [vmem:[%s2684 + $0xc] sm:$0xf]
        %v2689 = vld [vmem:[%s2684 + $0x10] sm:$0xf]
        %v2690 = vld [vmem:[%s2684 + $0x14] sm:$0xf]
        %v2691 = vld [vmem:[%s2684 + $0x18] sm:$0xf]
        %v2692 = vld [vmem:[%s2684 + $0x1c] sm:$0xf]
        %v2693 = vld [vmem:[%s2684 + $0x20] sm:$0xf]
        %v2694 = vld [vmem:[%s2684 + $0x24] sm:$0xf]
        %v2695 = vld [vmem:[%s2684 + $0x28] sm:$0xf]
        %v2696 = vld [vmem:[%s2684 + $0x2c] sm:$0xf]
        %v2697 = vld [vmem:[%s2684 + $0x30] sm:$0xf]
        %v2698 = vld [vmem:[%s2684 + $0x34] sm:$0xf]
        %v2699 = vld [vmem:[%s2684 + $0x38] sm:$0xf]
        %v2700 = vld [vmem:[%s2684 + $0x3c] sm:$0xf]
        %v2701 = vunpack.c.l.b16 %v2585
        %v2702 = vunpack.c.l.b16 %v2599
        %v2703 = vunpack.c.l.b16 %v2613
        %v2704 = vunpack.c.l.b16 %v2627
        %v2705 = vunpack.c.l.b16 %v2641
        %v2706 = vunpack.c.l.b16 %v2655
        %v2707 = vunpack.c.l.b16 %v2669
        %v2708 = vunpack.c.l.b16 %v2683
        %v2709 = vpack.c.b16 %v2702, %v2701
        %v2710 = vpack.c.b16 %v2704, %v2703
        %v2711 = vpack.c.b16 %v2706, %v2705
        %v2712 = vpack.c.b16 %v2708, %v2707
        %v2733 = vunpack.c.l.b16 %v2685
        %v2734 = vunpack.c.l.b16 %v2686
        %v2735 = vunpack.c.l.b16 %v2687
        %v2736 = vunpack.c.l.b16 %v2688
        %v2737 = vunpack.c.l.b16 %v2689
        %v2738 = vunpack.c.l.b16 %v2690
        %v2739 = vunpack.c.l.b16 %v2691
        %v2740 = vunpack.c.l.b16 %v2692
        %v2741 = vunpack.c.l.b16 %v2693
        %v2742 = vunpack.c.l.b16 %v2694
        %v2743 = vunpack.c.l.b16 %v2695
        %v2744 = vunpack.c.l.b16 %v2696
        %v2745 = vunpack.c.l.b16 %v2697
        %v2746 = vunpack.c.l.b16 %v2698
        %v2747 = vunpack.c.l.b16 %v2699
        %v2748 = vunpack.c.l.b16 %v2700
        %v2749 = vpack.c.b16 %v2734, %v2733
        %v2750 = vpack.c.b16 %v2736, %v2735
        %v2751 = vpack.c.b16 %v2738, %v2737
        %v2752 = vpack.c.b16 %v2740, %v2739
        %v2753 = vpack.c.b16 %v2742, %v2741
        %v2754 = vpack.c.b16 %v2744, %v2743
        %v2755 = vpack.c.b16 %v2746, %v2745
        %v2756 = vpack.c.b16 %v2748, %v2747
        %2765 = vmatprep.subr.bf16.mxu0 0
        %2766 = vmatpush1.bf16.msra.mxu0 %v2749
        %2767 = vmatprep.subr.bf16.mxu0 0
        %2768 = vmatpush1.bf16.msra.mxu0 %v2750
        %2769 = vmatprep.subr.bf16.mxu0 0
        %2770 = vmatpush1.bf16.msra.mxu0 %v2751
        %2771 = vmatprep.subr.bf16.mxu0 0
        %2772 = vmatpush1.bf16.msra.mxu0 %v2752
        %2773 = vmatprep.subr.bf16.mxu0 0
        %2774 = vmatpush1.bf16.msra.mxu0 %v2753
        %2775 = vmatprep.subr.bf16.mxu0 0
        %2776 = vmatpush1.bf16.msra.mxu0 %v2754
        %2777 = vmatprep.subr.bf16.mxu0 0
        %2778 = vmatpush1.bf16.msra.mxu0 %v2755
        %2779 = vmatprep.subr.bf16.mxu0 0
        %2780 = vmatpush1.bf16.msra.mxu0 %v2756
        %2781 = vmatprep.subr.bf16.mxu0 0
        %2782 = vmatpush1.bf16.msra.mxu0 0
        %2783 = vmatprep.subr.bf16.mxu0 0
        %2784 = vmatpush1.bf16.msra.mxu0 0
        %2785 = vmatprep.subr.bf16.mxu0 0
        %2786 = vmatpush1.bf16.msra.mxu0 0
        %2787 = vmatprep.subr.bf16.mxu0 0
        %2788 = vmatpush1.bf16.msra.mxu0 0
        %2789 = vmatprep.subr.bf16.mxu0 0
        %2790 = vmatpush1.bf16.msra.mxu0 0
        %2791 = vmatprep.subr.bf16.mxu0 0
        %2792 = vmatpush1.bf16.msra.mxu0 0
        %2793 = vmatprep.subr.bf16.mxu0 0
        %2794 = vmatpush1.bf16.msra.mxu0 0
        %2795 = vmatprep.subr.bf16.mxu0 0
        %2796 = vmatpush1.bf16.msra.mxu0 0
        %2797 = vmatprep.mubr.bf16.mxu0 0
        %2798 = vmatmul.mubr.bf16.gmra.mrb[0].mxu0 %v2709
        %v2799 = vpop.f32.mrb[0].mxu0
        %v2800 = vadd.f32 0.0, %v2799
        %v2801 = vpop.f32.mrb[0].mxu0
        %v2802 = vpop.f32.mrb[0].mxu0
        %v2803 = vadd.f32 0.0, %v2802
        %v2804 = vpop.f32.mrb[0].mxu0
        %2805 = vmatprep.mubr.bf16.mxu0 0
        %2806 = vmatmul.mubr.bf16.gmra.mrb[0].mxu0 %v2710
        %v2807 = vpop.f32.mrb[0].mxu0
        %v2808 = vadd.f32 0.0, %v2807
        %v2809 = vpop.f32.mrb[0].mxu0
        %v2810 = vpop.f32.mrb[0].mxu0
        %v2811 = vadd.f32 0.0, %v2810
        %v2812 = vpop.f32.mrb[0].mxu0
        %2813 = vmatprep.mubr.bf16.mxu0 0
        %2814 = vmatmul.mubr.bf16.gmra.mrb[0].mxu0 %v2711
        %v2815 = vpop.f32.mrb[0].mxu0
        %v2816 = vadd.f32 0.0, %v2815
        %v2817 = vpop.f32.mrb[0].mxu0
        %v2818 = vpop.f32.mrb[0].mxu0
        %v2819 = vadd.f32 0.0, %v2818
        %v2820 = vpop.f32.mrb[0].mxu0
        %2821 = vmatprep.mubr.bf16.mxu0 0
        %2822 = vmatmul.mubr.bf16.gmra.mrb[0].mxu0 %v2712
        %v2823 = vpop.f32.mrb[0].mxu0
        %v2824 = vadd.f32 0.0, %v2823
        %v2825 = vpop.f32.mrb[0].mxu0
        %v2826 = vpop.f32.mrb[0].mxu0
        %v2827 = vadd.f32 0.0, %v2826
        %v2828 = vpop.f32.mrb[0].mxu0
        %2829 = vdwg.mxu0
        %v2830 = vld [vmem:[#allocation3] sm:$0xff]
        %v2831 = vld [vmem:[#allocation3 + $0x8] sm:$0xff]
        %v2832 = vld [vmem:[#allocation3 + $0x10] sm:$0xff]
        %v2833 = vld [vmem:[#allocation3 + $0x18] sm:$0xff]
        %v2834 = vld [vmem:[#allocation3 + $0x20] sm:$0xff]
        %v2835 = vld [vmem:[#allocation3 + $0x28] sm:$0xff]
        %v2836 = vld [vmem:[#allocation3 + $0x30] sm:$0xff]
        %v2837 = vld [vmem:[#allocation3 + $0x38] sm:$0xff]
        %v2838 = vadd.f32 %v2830, %v2800
        %v2839 = vadd.f32 %v2831, %v2803
        %v2840 = vadd.f32 %v2832, %v2808
        %v2841 = vadd.f32 %v2833, %v2811
        %v2842 = vadd.f32 %v2834, %v2816
        %v2843 = vadd.f32 %v2835, %v2819
        %v2844 = vadd.f32 %v2836, %v2824
        %v2845 = vadd.f32 %v2837, %v2827
        %2846 = vst [vmem:[#allocation3] sm:$0xff] %v2838
        %2847 = vst [vmem:[#allocation3 + $0x8] sm:$0xff] %v2839
        %2848 = vst [vmem:[#allocation3 + $0x10] sm:$0xff] %v2840
        %2849 = vst [vmem:[#allocation3 + $0x18] sm:$0xff] %v2841
        %2850 = vst [vmem:[#allocation3 + $0x20] sm:$0xff] %v2842
        %2851 = vst [vmem:[#allocation3 + $0x28] sm:$0xff] %v2843
        %2852 = vst [vmem:[#allocation3 + $0x30] sm:$0xff] %v2844
        %2853 = vst [vmem:[#allocation3 + $0x38] sm:$0xff] %v2845
        %v2854 = vld [vmem:[%s1253] sm:$0xf]
        %v2855 = vld [vmem:[%s1253 + $0x4] sm:$0x1]
        %v2856 = vld [vmem:[%s1253 + $0x8] sm:$0xf]
        %v2857 = vld [vmem:[%s1253 + $0xc] sm:$0x1]
        %v2858 = vld [vmem:[%s1253 + $0x10] sm:$0xf]
        %v2859 = vld [vmem:[%s1253 + $0x14] sm:$0x1]
        %v2860 = vld [vmem:[%s1253 + $0x18] sm:$0xf]
        %v2861 = vld [vmem:[%s1253 + $0x1c] sm:$0x1]
        %v2862 = vld [vmem:[%s1253 + $0x20] sm:$0xf]
        %v2863 = vld [vmem:[%s1253 + $0x24] sm:$0x1]
        %v2864 = vld [vmem:[%s1253 + $0x28] sm:$0xf]
        %v2865 = vld [vmem:[%s1253 + $0x2c] sm:$0x1]
        %v2866 = vld [vmem:[%s1253 + $0x30] sm:$0xf]
        %v2867 = vld [vmem:[%s1253 + $0x34] sm:$0x1]
        %v2868 = vld [vmem:[%s1253 + $0x38] sm:$0xf]
        %v2869 = vld [vmem:[%s1253 + $0x3c] sm:$0x1]
        %v2871 = vshrl.u32 %v2854, 16
        %v2873 = vrot.slane %v2871, 4
        %v2874 = vshll.u32 %v2854, 16
        %v2876 = vrot.slane %v2874, 5
        %v2877 = vor.u32 %v2873, %v2876
        %v2878 = vrot.slane %v2877, 4
        %v2880 = vshll.u32 %v2855, 16
        %v2882 = vrot.slane %v2880, 5
        %v2883 = vsel %vm1789, %v2878, %v2882
        %v2885 = vshrl.u32 %v2856, 16
        %v2887 = vrot.slane %v2885, 4
        %v2888 = vshll.u32 %v2856, 16
        %v2890 = vrot.slane %v2888, 5
        %v2891 = vor.u32 %v2887, %v2890
        %v2892 = vrot.slane %v2891, 4
        %v2894 = vshll.u32 %v2857, 16
        %v2896 = vrot.slane %v2894, 5
        %v2897 = vsel %vm1789, %v2892, %v2896
        %v2899 = vshrl.u32 %v2858, 16
        %v2901 = vrot.slane %v2899, 4
        %v2902 = vshll.u32 %v2858, 16
        %v2904 = vrot.slane %v2902, 5
        %v2905 = vor.u32 %v2901, %v2904
        %v2906 = vrot.slane %v2905, 4
        %v2908 = vshll.u32 %v2859, 16
        %v2910 = vrot.slane %v2908, 5
        %v2911 = vsel %vm1789, %v2906, %v2910
        %v2913 = vshrl.u32 %v2860, 16
        %v2915 = vrot.slane %v2913, 4
        %v2916 = vshll.u32 %v2860, 16
        %v2918 = vrot.slane %v2916, 5
        %v2919 = vor.u32 %v2915, %v2918
        %v2920 = vrot.slane %v2919, 4
        %v2922 = vshll.u32 %v2861, 16
        %v2924 = vrot.slane %v2922, 5
        %v2925 = vsel %vm1789, %v2920, %v2924
        %v2927 = vshrl.u32 %v2862, 16
        %v2929 = vrot.slane %v2927, 4
        %v2930 = vshll.u32 %v2862, 16
        %v2932 = vrot.slane %v2930, 5
        %v2933 = vor.u32 %v2929, %v2932
        %v2934 = vrot.slane %v2933, 4
        %v2936 = vshll.u32 %v2863, 16
        %v2938 = vrot.slane %v2936, 5
        %v2939 = vsel %vm1789, %v2934, %v2938
        %v2941 = vshrl.u32 %v2864, 16
        %v2943 = vrot.slane %v2941, 4
        %v2944 = vshll.u32 %v2864, 16
        %v2946 = vrot.slane %v2944, 5
        %v2947 = vor.u32 %v2943, %v2946
        %v2948 = vrot.slane %v2947, 4
        %v2950 = vshll.u32 %v2865, 16
        %v2952 = vrot.slane %v2950, 5
        %v2953 = vsel %vm1789, %v2948, %v2952
        %v2955 = vshrl.u32 %v2866, 16
        %v2957 = vrot.slane %v2955, 4
        %v2958 = vshll.u32 %v2866, 16
        %v2960 = vrot.slane %v2958, 5
        %v2961 = vor.u32 %v2957, %v2960
        %v2962 = vrot.slane %v2961, 4
        %v2964 = vshll.u32 %v2867, 16
        %v2966 = vrot.slane %v2964, 5
        %v2967 = vsel %vm1789, %v2962, %v2966
        %v2969 = vshrl.u32 %v2868, 16
        %v2971 = vrot.slane %v2969, 4
        %v2972 = vshll.u32 %v2868, 16
        %v2974 = vrot.slane %v2972, 5
        %v2975 = vor.u32 %v2971, %v2974
        %v2976 = vrot.slane %v2975, 4
        %v2978 = vshll.u32 %v2869, 16
        %v2980 = vrot.slane %v2978, 5
        %v2981 = vsel %vm1789, %v2976, %v2980
        %s2982 = scalar_lea.vmem %s3, 320
        %v2983 = vld [vmem:[%s2982] sm:$0xf]
        %v2984 = vld [vmem:[%s2982 + $0x4] sm:$0xf]
        %v2985 = vld [vmem:[%s2982 + $0x8] sm:$0xf]
        %v2986 = vld [vmem:[%s2982 + $0xc] sm:$0xf]
        %v2987 = vld [vmem:[%s2982 + $0x10] sm:$0xf]
        %v2988 = vld [vmem:[%s2982 + $0x14] sm:$0xf]
        %v2989 = vld [vmem:[%s2982 + $0x18] sm:$0xf]
        %v2990 = vld [vmem:[%s2982 + $0x1c] sm:$0xf]
        %v2991 = vld [vmem:[%s2982 + $0x20] sm:$0xf]
        %v2992 = vld [vmem:[%s2982 + $0x24] sm:$0xf]
        %v2993 = vld [vmem:[%s2982 + $0x28] sm:$0xf]
        %v2994 = vld [vmem:[%s2982 + $0x2c] sm:$0xf]
        %v2995 = vld [vmem:[%s2982 + $0x30] sm:$0xf]
        %v2996 = vld [vmem:[%s2982 + $0x34] sm:$0xf]
        %v2997 = vld [vmem:[%s2982 + $0x38] sm:$0xf]
        %v2998 = vld [vmem:[%s2982 + $0x3c] sm:$0xf]
        %v2999 = vunpack.c.l.b16 %v2883
        %v3000 = vunpack.c.l.b16 %v2897
        %v3001 = vunpack.c.l.b16 %v2911
        %v3002 = vunpack.c.l.b16 %v2925
        %v3003 = vunpack.c.l.b16 %v2939
        %v3004 = vunpack.c.l.b16 %v2953
        %v3005 = vunpack.c.l.b16 %v2967
        %v3006 = vunpack.c.l.b16 %v2981
        %v3007 = vpack.c.b16 %v3000, %v2999
        %v3008 = vpack.c.b16 %v3002, %v3001
        %v3009 = vpack.c.b16 %v3004, %v3003
        %v3010 = vpack.c.b16 %v3006, %v3005
        %v3031 = vunpack.c.l.b16 %v2983
        %v3032 = vunpack.c.l.b16 %v2984
        %v3033 = vunpack.c.l.b16 %v2985
        %v3034 = vunpack.c.l.b16 %v2986
        %v3035 = vunpack.c.l.b16 %v2987
        %v3036 = vunpack.c.l.b16 %v2988
        %v3037 = vunpack.c.l.b16 %v2989
        %v3038 = vunpack.c.l.b16 %v2990
        %v3039 = vunpack.c.l.b16 %v2991
        %v3040 = vunpack.c.l.b16 %v2992
        %v3041 = vunpack.c.l.b16 %v2993
        %v3042 = vunpack.c.l.b16 %v2994
        %v3043 = vunpack.c.l.b16 %v2995
        %v3044 = vunpack.c.l.b16 %v2996
        %v3045 = vunpack.c.l.b16 %v2997
        %v3046 = vunpack.c.l.b16 %v2998
        %v3047 = vpack.c.b16 %v3032, %v3031
        %v3048 = vpack.c.b16 %v3034, %v3033
        %v3049 = vpack.c.b16 %v3036, %v3035
        %v3050 = vpack.c.b16 %v3038, %v3037
        %v3051 = vpack.c.b16 %v3040, %v3039
        %v3052 = vpack.c.b16 %v3042, %v3041
        %v3053 = vpack.c.b16 %v3044, %v3043
        %v3054 = vpack.c.b16 %v3046, %v3045
        %3063 = vmatprep.subr.bf16.mxu0 0
        %3064 = vmatpush1.bf16.msra.mxu0 %v3047
        %3065 = vmatprep.subr.bf16.mxu0 0
        %3066 = vmatpush1.bf16.msra.mxu0 %v3048
        %3067 = vmatprep.subr.bf16.mxu0 0
        %3068 = vmatpush1.bf16.msra.mxu0 %v3049
        %3069 = vmatprep.subr.bf16.mxu0 0
        %3070 = vmatpush1.bf16.msra.mxu0 %v3050
        %3071 = vmatprep.subr.bf16.mxu0 0
        %3072 = vmatpush1.bf16.msra.mxu0 %v3051
        %3073 = vmatprep.subr.bf16.mxu0 0
        %3074 = vmatpush1.bf16.msra.mxu0 %v3052
        %3075 = vmatprep.subr.bf16.mxu0 0
        %3076 = vmatpush1.bf16.msra.mxu0 %v3053
        %3077 = vmatprep.subr.bf16.mxu0 0
        %3078 = vmatpush1.bf16.msra.mxu0 %v3054
        %3079 = vmatprep.subr.bf16.mxu0 0
        %3080 = vmatpush1.bf16.msra.mxu0 0
        %3081 = vmatprep.subr.bf16.mxu0 0
        %3082 = vmatpush1.bf16.msra.mxu0 0
        %3083 = vmatprep.subr.bf16.mxu0 0
        %3084 = vmatpush1.bf16.msra.mxu0 0
        %3085 = vmatprep.subr.bf16.mxu0 0
        %3086 = vmatpush1.bf16.msra.mxu0 0
        %3087 = vmatprep.subr.bf16.mxu0 0
        %3088 = vmatpush1.bf16.msra.mxu0 0
        %3089 = vmatprep.subr.bf16.mxu0 0
        %3090 = vmatpush1.bf16.msra.mxu0 0
        %3091 = vmatprep.subr.bf16.mxu0 0
        %3092 = vmatpush1.bf16.msra.mxu0 0
        %3093 = vmatprep.subr.bf16.mxu0 0
        %3094 = vmatpush1.bf16.msra.mxu0 0
        %3095 = vmatprep.mubr.bf16.mxu0 0
        %3096 = vmatmul.mubr.bf16.gmra.mrb[0].mxu0 %v3007
        %v3097 = vpop.f32.mrb[0].mxu0
        %v3098 = vadd.f32 0.0, %v3097
        %v3099 = vpop.f32.mrb[0].mxu0
        %v3100 = vpop.f32.mrb[0].mxu0
        %v3101 = vadd.f32 0.0, %v3100
        %v3102 = vpop.f32.mrb[0].mxu0
        %3103 = vmatprep.mubr.bf16.mxu0 0
        %3104 = vmatmul.mubr.bf16.gmra.mrb[0].mxu0 %v3008
        %v3105 = vpop.f32.mrb[0].mxu0
        %v3106 = vadd.f32 0.0, %v3105
        %v3107 = vpop.f32.mrb[0].mxu0
        %v3108 = vpop.f32.mrb[0].mxu0
        %v3109 = vadd.f32 0.0, %v3108
        %v3110 = vpop.f32.mrb[0].mxu0
        %3111 = vmatprep.mubr.bf16.mxu0 0
        %3112 = vmatmul.mubr.bf16.gmra.mrb[0].mxu0 %v3009
        %v3113 = vpop.f32.mrb[0].mxu0
        %v3114 = vadd.f32 0.0, %v3113
        %v3115 = vpop.f32.mrb[0].mxu0
        %v3116 = vpop.f32.mrb[0].mxu0
        %v3117 = vadd.f32 0.0, %v3116
        %v3118 = vpop.f32.mrb[0].mxu0
        %3119 = vmatprep.mubr.bf16.mxu0 0
        %3120 = vmatmul.mubr.bf16.gmra.mrb[0].mxu0 %v3010
        %v3121 = vpop.f32.mrb[0].mxu0
        %v3122 = vadd.f32 0.0, %v3121
        %v3123 = vpop.f32.mrb[0].mxu0
        %v3124 = vpop.f32.mrb[0].mxu0
        %v3125 = vadd.f32 0.0, %v3124
        %v3126 = vpop.f32.mrb[0].mxu0
        %3127 = vdwg.mxu0
        %v3128 = vld [vmem:[#allocation3] sm:$0xff]
        %v3129 = vld [vmem:[#allocation3 + $0x8] sm:$0xff]
        %v3130 = vld [vmem:[#allocation3 + $0x10] sm:$0xff]
        %v3131 = vld [vmem:[#allocation3 + $0x18] sm:$0xff]
        %v3132 = vld [vmem:[#allocation3 + $0x20] sm:$0xff]
        %v3133 = vld [vmem:[#allocation3 + $0x28] sm:$0xff]
        %v3134 = vld [vmem:[#allocation3 + $0x30] sm:$0xff]
        %v3135 = vld [vmem:[#allocation3 + $0x38] sm:$0xff]
        %v3136 = vadd.f32 %v3128, %v3098
        %v3137 = vadd.f32 %v3129, %v3101
        %v3138 = vadd.f32 %v3130, %v3106
        %v3139 = vadd.f32 %v3131, %v3109
        %v3140 = vadd.f32 %v3132, %v3114
        %v3141 = vadd.f32 %v3133, %v3117
        %v3142 = vadd.f32 %v3134, %v3122
        %v3143 = vadd.f32 %v3135, %v3125
        %3144 = vst [vmem:[#allocation3] sm:$0xff] %v3136
        %3145 = vst [vmem:[#allocation3 + $0x8] sm:$0xff] %v3137
        %3146 = vst [vmem:[#allocation3 + $0x10] sm:$0xff] %v3138
        %3147 = vst [vmem:[#allocation3 + $0x18] sm:$0xff] %v3139
        %3148 = vst [vmem:[#allocation3 + $0x20] sm:$0xff] %v3140
        %3149 = vst [vmem:[#allocation3 + $0x28] sm:$0xff] %v3141
        %3150 = vst [vmem:[#allocation3 + $0x30] sm:$0xff] %v3142
        %3151 = vst [vmem:[#allocation3 + $0x38] sm:$0xff] %v3143
        %v3152 = vld [vmem:[%s1551] sm:$0xf]
        %v3153 = vld [vmem:[%s1551 + $0x8] sm:$0xf]
        %v3154 = vld [vmem:[%s1551 + $0x10] sm:$0xf]
        %v3155 = vld [vmem:[%s1551 + $0x18] sm:$0xf]
        %v3156 = vld [vmem:[%s1551 + $0x20] sm:$0xf]
        %v3157 = vld [vmem:[%s1551 + $0x28] sm:$0xf]
        %v3158 = vld [vmem:[%s1551 + $0x30] sm:$0xf]
        %v3159 = vld [vmem:[%s1551 + $0x38] sm:$0xf]
        %s3160 = scalar_lea.vmem %s3, 384
        %v3161 = vld [vmem:[%s3160] sm:$0xf]
        %v3162 = vld [vmem:[%s3160 + $0x4] sm:$0xf]
        %v3163 = vld [vmem:[%s3160 + $0x8] sm:$0xf]
        %v3164 = vld [vmem:[%s3160 + $0xc] sm:$0xf]
        %v3165 = vld [vmem:[%s3160 + $0x10] sm:$0xf]
        %v3166 = vld [vmem:[%s3160 + $0x14] sm:$0xf]
        %v3167 = vld [vmem:[%s3160 + $0x18] sm:$0xf]
        %v3168 = vld [vmem:[%s3160 + $0x1c] sm:$0xf]
        %v3169 = vld [vmem:[%s3160 + $0x20] sm:$0xf]
        %v3170 = vld [vmem:[%s3160 + $0x24] sm:$0xf]
        %v3171 = vld [vmem:[%s3160 + $0x28] sm:$0xf]
        %v3172 = vld [vmem:[%s3160 + $0x2c] sm:$0xf]
        %v3173 = vld [vmem:[%s3160 + $0x30] sm:$0xf]
        %v3174 = vld [vmem:[%s3160 + $0x34] sm:$0xf]
        %v3175 = vld [vmem:[%s3160 + $0x38] sm:$0xf]
        %v3176 = vld [vmem:[%s3160 + $0x3c] sm:$0xf]
        %v3185 = vunpack.c.l.b16 %v3152
        %v3186 = vunpack.c.l.b16 %v3153
        %v3187 = vunpack.c.l.b16 %v3154
        %v3188 = vunpack.c.l.b16 %v3155
        %v3189 = vunpack.c.l.b16 %v3156
        %v3190 = vunpack.c.l.b16 %v3157
        %v3191 = vunpack.c.l.b16 %v3158
        %v3192 = vunpack.c.l.b16 %v3159
        %v3193 = vpack.c.b16 %v3186, %v3185
        %v3194 = vpack.c.b16 %v3188, %v3187
        %v3195 = vpack.c.b16 %v3190, %v3189
        %v3196 = vpack.c.b16 %v3192, %v3191
        %v3217 = vunpack.c.l.b16 %v3161
        %v3218 = vunpack.c.l.b16 %v3162
        %v3219 = vunpack.c.l.b16 %v3163
        %v3220 = vunpack.c.l.b16 %v3164
        %v3221 = vunpack.c.l.b16 %v3165
        %v3222 = vunpack.c.l.b16 %v3166
        %v3223 = vunpack.c.l.b16 %v3167
        %v3224 = vunpack.c.l.b16 %v3168
        %v3225 = vunpack.c.l.b16 %v3169
        %v3226 = vunpack.c.l.b16 %v3170
        %v3227 = vunpack.c.l.b16 %v3171
        %v3228 = vunpack.c.l.b16 %v3172
        %v3229 = vunpack.c.l.b16 %v3173
        %v3230 = vunpack.c.l.b16 %v3174
        %v3231 = vunpack.c.l.b16 %v3175
        %v3232 = vunpack.c.l.b16 %v3176
        %v3233 = vpack.c.b16 %v3218, %v3217
        %v3234 = vpack.c.b16 %v3220, %v3219
        %v3235 = vpack.c.b16 %v3222, %v3221
        %v3236 = vpack.c.b16 %v3224, %v3223
        %v3237 = vpack.c.b16 %v3226, %v3225
        %v3238 = vpack.c.b16 %v3228, %v3227
        %v3239 = vpack.c.b16 %v3230, %v3229
        %v3240 = vpack.c.b16 %v3232, %v3231
        %3249 = vmatprep.subr.bf16.mxu0 0
        %3250 = vmatpush1.bf16.msra.mxu0 %v3233
        %3251 = vmatprep.subr.bf16.mxu0 0
        %3252 = vmatpush1.bf16.msra.mxu0 %v3234
        %3253 = vmatprep.subr.bf16.mxu0 0
        %3254 = vmatpush1.bf16.msra.mxu0 %v3235
        %3255 = vmatprep.subr.bf16.mxu0 0
        %3256 = vmatpush1.bf16.msra.mxu0 %v3236
        %3257 = vmatprep.subr.bf16.mxu0 0
        %3258 = vmatpush1.bf16.msra.mxu0 %v3237
        %3259 = vmatprep.subr.bf16.mxu0 0
        %3260 = vmatpush1.bf16.msra.mxu0 %v3238
        %3261 = vmatprep.subr.bf16.mxu0 0
        %3262 = vmatpush1.bf16.msra.mxu0 %v3239
        %3263 = vmatprep.subr.bf16.mxu0 0
        %3264 = vmatpush1.bf16.msra.mxu0 %v3240
        %3265 = vmatprep.subr.bf16.mxu0 0
        %3266 = vmatpush1.bf16.msra.mxu0 0
        %3267 = vmatprep.subr.bf16.mxu0 0
        %3268 = vmatpush1.bf16.msra.mxu0 0
        %3269 = vmatprep.subr.bf16.mxu0 0
        %3270 = vmatpush1.bf16.msra.mxu0 0
        %3271 = vmatprep.subr.bf16.mxu0 0
        %3272 = vmatpush1.bf16.msra.mxu0 0
        %3273 = vmatprep.subr.bf16.mxu0 0
        %3274 = vmatpush1.bf16.msra.mxu0 0
        %3275 = vmatprep.subr.bf16.mxu0 0
        %3276 = vmatpush1.bf16.msra.mxu0 0
        %3277 = vmatprep.subr.bf16.mxu0 0
        %3278 = vmatpush1.bf16.msra.mxu0 0
        %3279 = vmatprep.subr.bf16.mxu0 0
        %3280 = vmatpush1.bf16.msra.mxu0 0
        %3281 = vmatprep.mubr.bf16.mxu0 0
        %3282 = vmatmul.mubr.bf16.gmra.mrb[0].mxu0 %v3193
        %v3283 = vpop.f32.mrb[0].mxu0
        %v3284 = vadd.f32 0.0, %v3283
        %v3285 = vpop.f32.mrb[0].mxu0
        %v3286 = vpop.f32.mrb[0].mxu0
        %v3287 = vadd.f32 0.0, %v3286
        %v3288 = vpop.f32.mrb[0].mxu0
        %3289 = vmatprep.mubr.bf16.mxu0 0
        %3290 = vmatmul.mubr.bf16.gmra.mrb[0].mxu0 %v3194
        %v3291 = vpop.f32.mrb[0].mxu0
        %v3292 = vadd.f32 0.0, %v3291
        %v3293 = vpop.f32.mrb[0].mxu0
        %v3294 = vpop.f32.mrb[0].mxu0
        %v3295 = vadd.f32 0.0, %v3294
        %v3296 = vpop.f32.mrb[0].mxu0
        %3297 = vmatprep.mubr.bf16.mxu0 0
        %3298 = vmatmul.mubr.bf16.gmra.mrb[0].mxu0 %v3195
        %v3299 = vpop.f32.mrb[0].mxu0
        %v3300 = vadd.f32 0.0, %v3299
        %v3301 = vpop.f32.mrb[0].mxu0
        %v3302 = vpop.f32.mrb[0].mxu0
        %v3303 = vadd.f32 0.0, %v3302
        %v3304 = vpop.f32.mrb[0].mxu0
        %3305 = vmatprep.mubr.bf16.mxu0 0
        %3306 = vmatmul.mubr.bf16.gmra.mrb[0].mxu0 %v3196
        %v3307 = vpop.f32.mrb[0].mxu0
        %v3308 = vadd.f32 0.0, %v3307
        %v3309 = vpop.f32.mrb[0].mxu0
        %v3310 = vpop.f32.mrb[0].mxu0
        %v3311 = vadd.f32 0.0, %v3310
        %v3312 = vpop.f32.mrb[0].mxu0
        %3313 = vdwg.mxu0
        %v3314 = vld [vmem:[#allocation3] sm:$0xff]
        %v3315 = vld [vmem:[#allocation3 + $0x8] sm:$0xff]
        %v3316 = vld [vmem:[#allocation3 + $0x10] sm:$0xff]
        %v3317 = vld [vmem:[#allocation3 + $0x18] sm:$0xff]
        %v3318 = vld [vmem:[#allocation3 + $0x20] sm:$0xff]
        %v3319 = vld [vmem:[#allocation3 + $0x28] sm:$0xff]
        %v3320 = vld [vmem:[#allocation3 + $0x30] sm:$0xff]
        %v3321 = vld [vmem:[#allocation3 + $0x38] sm:$0xff]
        %v3322 = vadd.f32 %v3314, %v3284
        %v3323 = vadd.f32 %v3315, %v3287
        %v3324 = vadd.f32 %v3316, %v3292
        %v3325 = vadd.f32 %v3317, %v3295
        %v3326 = vadd.f32 %v3318, %v3300
        %v3327 = vadd.f32 %v3319, %v3303
        %v3328 = vadd.f32 %v3320, %v3308
        %v3329 = vadd.f32 %v3321, %v3311
        %3330 = vst [vmem:[#allocation3] sm:$0xff] %v3322
        %3331 = vst [vmem:[#allocation3 + $0x8] sm:$0xff] %v3323
        %3332 = vst [vmem:[#allocation3 + $0x10] sm:$0xff] %v3324
        %3333 = vst [vmem:[#allocation3 + $0x18] sm:$0xff] %v3325
        %3334 = vst [vmem:[#allocation3 + $0x20] sm:$0xff] %v3326
        %3335 = vst [vmem:[#allocation3 + $0x28] sm:$0xff] %v3327
        %3336 = vst [vmem:[#allocation3 + $0x30] sm:$0xff] %v3328
        %3337 = vst [vmem:[#allocation3 + $0x38] sm:$0xff] %v3329
        %v3338 = vld [vmem:[%s1402] sm:$0xf]
        %v3339 = vld [vmem:[%s1402 + $0x4] sm:$0x1]
        %v3340 = vld [vmem:[%s1402 + $0x8] sm:$0xf]
        %v3341 = vld [vmem:[%s1402 + $0xc] sm:$0x1]
        %v3342 = vld [vmem:[%s1402 + $0x10] sm:$0xf]
        %v3343 = vld [vmem:[%s1402 + $0x14] sm:$0x1]
        %v3344 = vld [vmem:[%s1402 + $0x18] sm:$0xf]
        %v3345 = vld [vmem:[%s1402 + $0x1c] sm:$0x1]
        %v3346 = vld [vmem:[%s1402 + $0x20] sm:$0xf]
        %v3347 = vld [vmem:[%s1402 + $0x24] sm:$0x1]
        %v3348 = vld [vmem:[%s1402 + $0x28] sm:$0xf]
        %v3349 = vld [vmem:[%s1402 + $0x2c] sm:$0x1]
        %v3350 = vld [vmem:[%s1402 + $0x30] sm:$0xf]
        %v3351 = vld [vmem:[%s1402 + $0x34] sm:$0x1]
        %v3352 = vld [vmem:[%s1402 + $0x38] sm:$0xf]
        %v3353 = vld [vmem:[%s1402 + $0x3c] sm:$0x1]
        %v3355 = vshrl.u32 %v3338, 16
        %v3357 = vrot.slane %v3355, 4
        %v3358 = vshll.u32 %v3338, 16
        %v3360 = vrot.slane %v3358, 5
        %v3361 = vor.u32 %v3357, %v3360
        %v3362 = vrot.slane %v3361, 4
        %v3364 = vshll.u32 %v3339, 16
        %v3366 = vrot.slane %v3364, 5
        %v3367 = vsel %vm1789, %v3362, %v3366
        %v3369 = vshrl.u32 %v3340, 16
        %v3371 = vrot.slane %v3369, 4
        %v3372 = vshll.u32 %v3340, 16
        %v3374 = vrot.slane %v3372, 5
        %v3375 = vor.u32 %v3371, %v3374
        %v3376 = vrot.slane %v3375, 4
        %v3378 = vshll.u32 %v3341, 16
        %v3380 = vrot.slane %v3378, 5
        %v3381 = vsel %vm1789, %v3376, %v3380
        %v3383 = vshrl.u32 %v3342, 16
        %v3385 = vrot.slane %v3383, 4
        %v3386 = vshll.u32 %v3342, 16
        %v3388 = vrot.slane %v3386, 5
        %v3389 = vor.u32 %v3385, %v3388
        %v3390 = vrot.slane %v3389, 4
        %v3392 = vshll.u32 %v3343, 16
        %v3394 = vrot.slane %v3392, 5
        %v3395 = vsel %vm1789, %v3390, %v3394
        %v3397 = vshrl.u32 %v3344, 16
        %v3399 = vrot.slane %v3397, 4
        %v3400 = vshll.u32 %v3344, 16
        %v3402 = vrot.slane %v3400, 5
        %v3403 = vor.u32 %v3399, %v3402
        %v3404 = vrot.slane %v3403, 4
        %v3406 = vshll.u32 %v3345, 16
        %v3408 = vrot.slane %v3406, 5
        %v3409 = vsel %vm1789, %v3404, %v3408
        %v3411 = vshrl.u32 %v3346, 16
        %v3413 = vrot.slane %v3411, 4
        %v3414 = vshll.u32 %v3346, 16
        %v3416 = vrot.slane %v3414, 5
        %v3417 = vor.u32 %v3413, %v3416
        %v3418 = vrot.slane %v3417, 4
        %v3420 = vshll.u32 %v3347, 16
        %v3422 = vrot.slane %v3420, 5
        %v3423 = vsel %vm1789, %v3418, %v3422
        %v3425 = vshrl.u32 %v3348, 16
        %v3427 = vrot.slane %v3425, 4
        %v3428 = vshll.u32 %v3348, 16
        %v3430 = vrot.slane %v3428, 5
        %v3431 = vor.u32 %v3427, %v3430
        %v3432 = vrot.slane %v3431, 4
        %v3434 = vshll.u32 %v3349, 16
        %v3436 = vrot.slane %v3434, 5
        %v3437 = vsel %vm1789, %v3432, %v3436
        %v3439 = vshrl.u32 %v3350, 16
        %v3441 = vrot.slane %v3439, 4
        %v3442 = vshll.u32 %v3350, 16
        %v3444 = vrot.slane %v3442, 5
        %v3445 = vor.u32 %v3441, %v3444
        %v3446 = vrot.slane %v3445, 4
        %v3448 = vshll.u32 %v3351, 16
        %v3450 = vrot.slane %v3448, 5
        %v3451 = vsel %vm1789, %v3446, %v3450
        %v3453 = vshrl.u32 %v3352, 16
        %v3455 = vrot.slane %v3453, 4
        %v3456 = vshll.u32 %v3352, 16
        %v3458 = vrot.slane %v3456, 5
        %v3459 = vor.u32 %v3455, %v3458
        %v3460 = vrot.slane %v3459, 4
        %v3462 = vshll.u32 %v3353, 16
        %v3464 = vrot.slane %v3462, 5
        %v3465 = vsel %vm1789, %v3460, %v3464
        %s3466 = scalar_lea.vmem %s3, 448
        %v3467 = vld [vmem:[%s3466] sm:$0xf]
        %v3468 = vld [vmem:[%s3466 + $0x4] sm:$0xf]
        %v3469 = vld [vmem:[%s3466 + $0x8] sm:$0xf]
        %v3470 = vld [vmem:[%s3466 + $0xc] sm:$0xf]
        %v3471 = vld [vmem:[%s3466 + $0x10] sm:$0xf]
        %v3472 = vld [vmem:[%s3466 + $0x14] sm:$0xf]
        %v3473 = vld [vmem:[%s3466 + $0x18] sm:$0xf]
        %v3474 = vld [vmem:[%s3466 + $0x1c] sm:$0xf]
        %v3475 = vld [vmem:[%s3466 + $0x20] sm:$0xf]
        %v3476 = vld [vmem:[%s3466 + $0x24] sm:$0xf]
        %v3477 = vld [vmem:[%s3466 + $0x28] sm:$0xf]
        %v3478 = vld [vmem:[%s3466 + $0x2c] sm:$0xf]
        %v3479 = vld [vmem:[%s3466 + $0x30] sm:$0xf]
        %v3480 = vld [vmem:[%s3466 + $0x34] sm:$0xf]
        %v3481 = vld [vmem:[%s3466 + $0x38] sm:$0xf]
        %v3482 = vld [vmem:[%s3466 + $0x3c] sm:$0xf]
        %v3483 = vunpack.c.l.b16 %v3367
        %v3484 = vunpack.c.l.b16 %v3381
        %v3485 = vunpack.c.l.b16 %v3395
        %v3486 = vunpack.c.l.b16 %v3409
        %v3487 = vunpack.c.l.b16 %v3423
        %v3488 = vunpack.c.l.b16 %v3437
        %v3489 = vunpack.c.l.b16 %v3451
        %v3490 = vunpack.c.l.b16 %v3465
        %v3491 = vpack.c.b16 %v3484, %v3483
        %v3492 = vpack.c.b16 %v3486, %v3485
        %v3493 = vpack.c.b16 %v3488, %v3487
        %v3494 = vpack.c.b16 %v3490, %v3489
        %v3515 = vunpack.c.l.b16 %v3467
        %v3516 = vunpack.c.l.b16 %v3468
        %v3517 = vunpack.c.l.b16 %v3469
        %v3518 = vunpack.c.l.b16 %v3470
        %v3519 = vunpack.c.l.b16 %v3471
        %v3520 = vunpack.c.l.b16 %v3472
        %v3521 = vunpack.c.l.b16 %v3473
        %v3522 = vunpack.c.l.b16 %v3474
        %v3523 = vunpack.c.l.b16 %v3475
        %v3524 = vunpack.c.l.b16 %v3476
        %v3525 = vunpack.c.l.b16 %v3477
        %v3526 = vunpack.c.l.b16 %v3478
        %v3527 = vunpack.c.l.b16 %v3479
        %v3528 = vunpack.c.l.b16 %v3480
        %v3529 = vunpack.c.l.b16 %v3481
        %v3530 = vunpack.c.l.b16 %v3482
        %v3531 = vpack.c.b16 %v3516, %v3515
        %v3532 = vpack.c.b16 %v3518, %v3517
        %v3533 = vpack.c.b16 %v3520, %v3519
        %v3534 = vpack.c.b16 %v3522, %v3521
        %v3535 = vpack.c.b16 %v3524, %v3523
        %v3536 = vpack.c.b16 %v3526, %v3525
        %v3537 = vpack.c.b16 %v3528, %v3527
        %v3538 = vpack.c.b16 %v3530, %v3529
        %3547 = vmatprep.subr.bf16.mxu0 0
        %3548 = vmatpush1.bf16.msra.mxu0 %v3531
        %3549 = vmatprep.subr.bf16.mxu0 0
        %3550 = vmatpush1.bf16.msra.mxu0 %v3532
        %3551 = vmatprep.subr.bf16.mxu0 0
        %3552 = vmatpush1.bf16.msra.mxu0 %v3533
        %3553 = vmatprep.subr.bf16.mxu0 0
        %3554 = vmatpush1.bf16.msra.mxu0 %v3534
        %3555 = vmatprep.subr.bf16.mxu0 0
        %3556 = vmatpush1.bf16.msra.mxu0 %v3535
        %3557 = vmatprep.subr.bf16.mxu0 0
        %3558 = vmatpush1.bf16.msra.mxu0 %v3536
        %3559 = vmatprep.subr.bf16.mxu0 0
        %3560 = vmatpush1.bf16.msra.mxu0 %v3537
        %3561 = vmatprep.subr.bf16.mxu0 0
        %3562 = vmatpush1.bf16.msra.mxu0 %v3538
        %3563 = vmatprep.subr.bf16.mxu0 0
        %3564 = vmatpush1.bf16.msra.mxu0 0
        %3565 = vmatprep.subr.bf16.mxu0 0
        %3566 = vmatpush1.bf16.msra.mxu0 0
        %3567 = vmatprep.subr.bf16.mxu0 0
        %3568 = vmatpush1.bf16.msra.mxu0 0
        %3569 = vmatprep.subr.bf16.mxu0 0
        %3570 = vmatpush1.bf16.msra.mxu0 0
        %3571 = vmatprep.subr.bf16.mxu0 0
        %3572 = vmatpush1.bf16.msra.mxu0 0
        %3573 = vmatprep.subr.bf16.mxu0 0
        %3574 = vmatpush1.bf16.msra.mxu0 0
        %3575 = vmatprep.subr.bf16.mxu0 0
        %3576 = vmatpush1.bf16.msra.mxu0 0
        %3577 = vmatprep.subr.bf16.mxu0 0
        %3578 = vmatpush1.bf16.msra.mxu0 0
        %3579 = vmatprep.mubr.bf16.mxu0 0
        %3580 = vmatmul.mubr.bf16.gmra.mrb[0].mxu0 %v3491
        %v3581 = vpop.f32.mrb[0].mxu0
        %v3582 = vadd.f32 0.0, %v3581
        %v3583 = vpop.f32.mrb[0].mxu0
        %v3584 = vpop.f32.mrb[0].mxu0
        %v3585 = vadd.f32 0.0, %v3584
        %v3586 = vpop.f32.mrb[0].mxu0
        %3587 = vmatprep.mubr.bf16.mxu0 0
        %3588 = vmatmul.mubr.bf16.gmra.mrb[0].mxu0 %v3492
        %v3589 = vpop.f32.mrb[0].mxu0
        %v3590 = vadd.f32 0.0, %v3589
        %v3591 = vpop.f32.mrb[0].mxu0
        %v3592 = vpop.f32.mrb[0].mxu0
        %v3593 = vadd.f32 0.0, %v3592
        %v3594 = vpop.f32.mrb[0].mxu0
        %3595 = vmatprep.mubr.bf16.mxu0 0
        %3596 = vmatmul.mubr.bf16.gmra.mrb[0].mxu0 %v3493
        %v3597 = vpop.f32.mrb[0].mxu0
        %v3598 = vadd.f32 0.0, %v3597
        %v3599 = vpop.f32.mrb[0].mxu0
        %v3600 = vpop.f32.mrb[0].mxu0
        %v3601 = vadd.f32 0.0, %v3600
        %v3602 = vpop.f32.mrb[0].mxu0
        %3603 = vmatprep.mubr.bf16.mxu0 0
        %3604 = vmatmul.mubr.bf16.gmra.mrb[0].mxu0 %v3494
        %v3605 = vpop.f32.mrb[0].mxu0
        %v3606 = vadd.f32 0.0, %v3605
        %v3607 = vpop.f32.mrb[0].mxu0
        %v3608 = vpop.f32.mrb[0].mxu0
        %v3609 = vadd.f32 0.0, %v3608
        %v3610 = vpop.f32.mrb[0].mxu0
        %3611 = vdwg.mxu0
        %v3612 = vld [vmem:[#allocation3] sm:$0xff]
        %v3613 = vld [vmem:[#allocation3 + $0x8] sm:$0xff]
        %v3614 = vld [vmem:[#allocation3 + $0x10] sm:$0xff]
        %v3615 = vld [vmem:[#allocation3 + $0x18] sm:$0xff]
        %v3616 = vld [vmem:[#allocation3 + $0x20] sm:$0xff]
        %v3617 = vld [vmem:[#allocation3 + $0x28] sm:$0xff]
        %v3618 = vld [vmem:[#allocation3 + $0x30] sm:$0xff]
        %v3619 = vld [vmem:[#allocation3 + $0x38] sm:$0xff]
        %v3620 = vadd.f32 %v3612, %v3582
        %v3621 = vadd.f32 %v3613, %v3585
        %v3622 = vadd.f32 %v3614, %v3590
        %v3623 = vadd.f32 %v3615, %v3593
        %v3624 = vadd.f32 %v3616, %v3598
        %v3625 = vadd.f32 %v3617, %v3601
        %v3626 = vadd.f32 %v3618, %v3606
        %v3627 = vadd.f32 %v3619, %v3609
        %3628 = vst [vmem:[#allocation3] sm:$0xff] %v3620
        %3629 = vst [vmem:[#allocation3 + $0x8] sm:$0xff] %v3621
        %3630 = vst [vmem:[#allocation3 + $0x10] sm:$0xff] %v3622
        %3631 = vst [vmem:[#allocation3 + $0x18] sm:$0xff] %v3623
        %3632 = vst [vmem:[#allocation3 + $0x20] sm:$0xff] %v3624
        %3633 = vst [vmem:[#allocation3 + $0x28] sm:$0xff] %v3625
        %3634 = vst [vmem:[#allocation3 + $0x30] sm:$0xff] %v3626
        %3635 = vst [vmem:[#allocation3 + $0x38] sm:$0xff] %v3627
        %v3636 = vld [vmem:[%s1551] sm:$0xf]
        %v3637 = vld [vmem:[%s1551 + $0x4] sm:$0x1]
        %v3638 = vld [vmem:[%s1551 + $0x8] sm:$0xf]
        %v3639 = vld [vmem:[%s1551 + $0xc] sm:$0x1]
        %v3640 = vld [vmem:[%s1551 + $0x10] sm:$0xf]
        %v3641 = vld [vmem:[%s1551 + $0x14] sm:$0x1]
        %v3642 = vld [vmem:[%s1551 + $0x18] sm:$0xf]
        %v3643 = vld [vmem:[%s1551 + $0x1c] sm:$0x1]
        %v3644 = vld [vmem:[%s1551 + $0x20] sm:$0xf]
        %v3645 = vld [vmem:[%s1551 + $0x24] sm:$0x1]
        %v3646 = vld [vmem:[%s1551 + $0x28] sm:$0xf]
        %v3647 = vld [vmem:[%s1551 + $0x2c] sm:$0x1]
        %v3648 = vld [vmem:[%s1551 + $0x30] sm:$0xf]
        %v3649 = vld [vmem:[%s1551 + $0x34] sm:$0x1]
        %v3650 = vld [vmem:[%s1551 + $0x38] sm:$0xf]
        %v3651 = vld [vmem:[%s1551 + $0x3c] sm:$0x1]
        %v3653 = vshrl.u32 %v3636, 16
        %v3655 = vrot.slane %v3653, 4
        %v3656 = vshll.u32 %v3636, 16
        %v3658 = vrot.slane %v3656, 5
        %v3659 = vor.u32 %v3655, %v3658
        %v3660 = vrot.slane %v3659, 4
        %v3662 = vshll.u32 %v3637, 16
        %v3664 = vrot.slane %v3662, 5
        %v3665 = vsel %vm1789, %v3660, %v3664
        %v3667 = vshrl.u32 %v3638, 16
        %v3669 = vrot.slane %v3667, 4
        %v3670 = vshll.u32 %v3638, 16
        %v3672 = vrot.slane %v3670, 5
        %v3673 = vor.u32 %v3669, %v3672
        %v3674 = vrot.slane %v3673, 4
        %v3676 = vshll.u32 %v3639, 16
        %v3678 = vrot.slane %v3676, 5
        %v3679 = vsel %vm1789, %v3674, %v3678
        %v3681 = vshrl.u32 %v3640, 16
        %v3683 = vrot.slane %v3681, 4
        %v3684 = vshll.u32 %v3640, 16
        %v3686 = vrot.slane %v3684, 5
        %v3687 = vor.u32 %v3683, %v3686
        %v3688 = vrot.slane %v3687, 4
        %v3690 = vshll.u32 %v3641, 16
        %v3692 = vrot.slane %v3690, 5
        %v3693 = vsel %vm1789, %v3688, %v3692
        %v3695 = vshrl.u32 %v3642, 16
        %v3697 = vrot.slane %v3695, 4
        %v3698 = vshll.u32 %v3642, 16
        %v3700 = vrot.slane %v3698, 5
        %v3701 = vor.u32 %v3697, %v3700
        %v3702 = vrot.slane %v3701, 4
        %v3704 = vshll.u32 %v3643, 16
        %v3706 = vrot.slane %v3704, 5
        %v3707 = vsel %vm1789, %v3702, %v3706
        %v3709 = vshrl.u32 %v3644, 16
        %v3711 = vrot.slane %v3709, 4
        %v3712 = vshll.u32 %v3644, 16
        %v3714 = vrot.slane %v3712, 5
        %v3715 = vor.u32 %v3711, %v3714
        %v3716 = vrot.slane %v3715, 4
        %v3718 = vshll.u32 %v3645, 16
        %v3720 = vrot.slane %v3718, 5
        %v3721 = vsel %vm1789, %v3716, %v3720
        %v3723 = vshrl.u32 %v3646, 16
        %v3725 = vrot.slane %v3723, 4
        %v3726 = vshll.u32 %v3646, 16
        %v3728 = vrot.slane %v3726, 5
        %v3729 = vor.u32 %v3725, %v3728
        %v3730 = vrot.slane %v3729, 4
        %v3732 = vshll.u32 %v3647, 16
        %v3734 = vrot.slane %v3732, 5
        %v3735 = vsel %vm1789, %v3730, %v3734
        %v3737 = vshrl.u32 %v3648, 16
        %v3739 = vrot.slane %v3737, 4
        %v3740 = vshll.u32 %v3648, 16
        %v3742 = vrot.slane %v3740, 5
        %v3743 = vor.u32 %v3739, %v3742
        %v3744 = vrot.slane %v3743, 4
        %v3746 = vshll.u32 %v3649, 16
        %v3748 = vrot.slane %v3746, 5
        %v3749 = vsel %vm1789, %v3744, %v3748
        %v3751 = vshrl.u32 %v3650, 16
        %v3753 = vrot.slane %v3751, 4
        %v3754 = vshll.u32 %v3650, 16
        %v3756 = vrot.slane %v3754, 5
        %v3757 = vor.u32 %v3753, %v3756
        %v3758 = vrot.slane %v3757, 4
        %v3760 = vshll.u32 %v3651, 16
        %v3762 = vrot.slane %v3760, 5
        %v3763 = vsel %vm1789, %v3758, %v3762
        %s3764 = scalar_lea.vmem %s3, 512
        %v3765 = vld [vmem:[%s3764] sm:$0xf]
        %v3766 = vld [vmem:[%s3764 + $0x4] sm:$0xf]
        %v3767 = vld [vmem:[%s3764 + $0x8] sm:$0xf]
        %v3768 = vld [vmem:[%s3764 + $0xc] sm:$0xf]
        %v3769 = vld [vmem:[%s3764 + $0x10] sm:$0xf]
        %v3770 = vld [vmem:[%s3764 + $0x14] sm:$0xf]
        %v3771 = vld [vmem:[%s3764 + $0x18] sm:$0xf]
        %v3772 = vld [vmem:[%s3764 + $0x1c] sm:$0xf]
        %v3773 = vld [vmem:[%s3764 + $0x20] sm:$0xf]
        %v3774 = vld [vmem:[%s3764 + $0x24] sm:$0xf]
        %v3775 = vld [vmem:[%s3764 + $0x28] sm:$0xf]
        %v3776 = vld [vmem:[%s3764 + $0x2c] sm:$0xf]
        %v3777 = vld [vmem:[%s3764 + $0x30] sm:$0xf]
        %v3778 = vld [vmem:[%s3764 + $0x34] sm:$0xf]
        %v3779 = vld [vmem:[%s3764 + $0x38] sm:$0xf]
        %v3780 = vld [vmem:[%s3764 + $0x3c] sm:$0xf]
        %v3781 = vunpack.c.l.b16 %v3665
        %v3782 = vunpack.c.l.b16 %v3679
        %v3783 = vunpack.c.l.b16 %v3693
        %v3784 = vunpack.c.l.b16 %v3707
        %v3785 = vunpack.c.l.b16 %v3721
        %v3786 = vunpack.c.l.b16 %v3735
        %v3787 = vunpack.c.l.b16 %v3749
        %v3788 = vunpack.c.l.b16 %v3763
        %v3789 = vpack.c.b16 %v3782, %v3781
        %v3790 = vpack.c.b16 %v3784, %v3783
        %v3791 = vpack.c.b16 %v3786, %v3785
        %v3792 = vpack.c.b16 %v3788, %v3787
        %v3813 = vunpack.c.l.b16 %v3765
        %v3814 = vunpack.c.l.b16 %v3766
        %v3815 = vunpack.c.l.b16 %v3767
        %v3816 = vunpack.c.l.b16 %v3768
        %v3817 = vunpack.c.l.b16 %v3769
        %v3818 = vunpack.c.l.b16 %v3770
        %v3819 = vunpack.c.l.b16 %v3771
        %v3820 = vunpack.c.l.b16 %v3772
        %v3821 = vunpack.c.l.b16 %v3773
        %v3822 = vunpack.c.l.b16 %v3774
        %v3823 = vunpack.c.l.b16 %v3775
        %v3824 = vunpack.c.l.b16 %v3776
        %v3825 = vunpack.c.l.b16 %v3777
        %v3826 = vunpack.c.l.b16 %v3778
        %v3827 = vunpack.c.l.b16 %v3779
        %v3828 = vunpack.c.l.b16 %v3780
        %v3829 = vpack.c.b16 %v3814, %v3813
        %v3830 = vpack.c.b16 %v3816, %v3815
        %v3831 = vpack.c.b16 %v3818, %v3817
        %v3832 = vpack.c.b16 %v3820, %v3819
        %v3833 = vpack.c.b16 %v3822, %v3821
        %v3834 = vpack.c.b16 %v3824, %v3823
        %v3835 = vpack.c.b16 %v3826, %v3825
        %v3836 = vpack.c.b16 %v3828, %v3827
        %3845 = vmatprep.subr.bf16.mxu0 0
        %3846 = vmatpush1.bf16.msra.mxu0 %v3829
        %3847 = vmatprep.subr.bf16.mxu0 0
        %3848 = vmatpush1.bf16.msra.mxu0 %v3830
        %3849 = vmatprep.subr.bf16.mxu0 0
        %3850 = vmatpush1.bf16.msra.mxu0 %v3831
        %3851 = vmatprep.subr.bf16.mxu0 0
        %3852 = vmatpush1.bf16.msra.mxu0 %v3832
        %3853 = vmatprep.subr.bf16.mxu0 0
        %3854 = vmatpush1.bf16.msra.mxu0 %v3833
        %3855 = vmatprep.subr.bf16.mxu0 0
        %3856 = vmatpush1.bf16.msra.mxu0 %v3834
        %3857 = vmatprep.subr.bf16.mxu0 0
        %3858 = vmatpush1.bf16.msra.mxu0 %v3835
        %3859 = vmatprep.subr.bf16.mxu0 0
        %3860 = vmatpush1.bf16.msra.mxu0 %v3836
        %3861 = vmatprep.subr.bf16.mxu0 0
        %3862 = vmatpush1.bf16.msra.mxu0 0
        %3863 = vmatprep.subr.bf16.mxu0 0
        %3864 = vmatpush1.bf16.msra.mxu0 0
        %3865 = vmatprep.subr.bf16.mxu0 0
        %3866 = vmatpush1.bf16.msra.mxu0 0
        %3867 = vmatprep.subr.bf16.mxu0 0
        %3868 = vmatpush1.bf16.msra.mxu0 0
        %3869 = vmatprep.subr.bf16.mxu0 0
        %3870 = vmatpush1.bf16.msra.mxu0 0
        %3871 = vmatprep.subr.bf16.mxu0 0
        %3872 = vmatpush1.bf16.msra.mxu0 0
        %3873 = vmatprep.subr.bf16.mxu0 0
        %3874 = vmatpush1.bf16.msra.mxu0 0
        %3875 = vmatprep.subr.bf16.mxu0 0
        %3876 = vmatpush1.bf16.msra.mxu0 0
        %3877 = vmatprep.mubr.bf16.mxu0 0
        %3878 = vmatmul.mubr.bf16.gmra.mrb[0].mxu0 %v3789
        %v3879 = vpop.f32.mrb[0].mxu0
        %v3880 = vadd.f32 0.0, %v3879
        %v3881 = vpop.f32.mrb[0].mxu0
        %v3882 = vpop.f32.mrb[0].mxu0
        %v3883 = vadd.f32 0.0, %v3882
        %v3884 = vpop.f32.mrb[0].mxu0
        %3885 = vmatprep.mubr.bf16.mxu0 0
        %3886 = vmatmul.mubr.bf16.gmra.mrb[0].mxu0 %v3790
        %v3887 = vpop.f32.mrb[0].mxu0
        %v3888 = vadd.f32 0.0, %v3887
        %v3889 = vpop.f32.mrb[0].mxu0
        %v3890 = vpop.f32.mrb[0].mxu0
        %v3891 = vadd.f32 0.0, %v3890
        %v3892 = vpop.f32.mrb[0].mxu0
        %3893 = vmatprep.mubr.bf16.mxu0 0
        %3894 = vmatmul.mubr.bf16.gmra.mrb[0].mxu0 %v3791
        %v3895 = vpop.f32.mrb[0].mxu0
        %v3896 = vadd.f32 0.0, %v3895
        %v3897 = vpop.f32.mrb[0].mxu0
        %v3898 = vpop.f32.mrb[0].mxu0
        %v3899 = vadd.f32 0.0, %v3898
        %v3900 = vpop.f32.mrb[0].mxu0
        %3901 = vmatprep.mubr.bf16.mxu0 0
        %3902 = vmatmul.mubr.bf16.gmra.mrb[0].mxu0 %v3792
        %v3903 = vpop.f32.mrb[0].mxu0
        %v3904 = vadd.f32 0.0, %v3903
        %v3905 = vpop.f32.mrb[0].mxu0
        %v3906 = vpop.f32.mrb[0].mxu0
        %v3907 = vadd.f32 0.0, %v3906
        %v3908 = vpop.f32.mrb[0].mxu0
        %3909 = vdwg.mxu0
        %v3910 = vld [vmem:[#allocation3] sm:$0xff]
        %v3911 = vld [vmem:[#allocation3 + $0x8] sm:$0xff]
        %v3912 = vld [vmem:[#allocation3 + $0x10] sm:$0xff]
        %v3913 = vld [vmem:[#allocation3 + $0x18] sm:$0xff]
        %v3914 = vld [vmem:[#allocation3 + $0x20] sm:$0xff]
        %v3915 = vld [vmem:[#allocation3 + $0x28] sm:$0xff]
        %v3916 = vld [vmem:[#allocation3 + $0x30] sm:$0xff]
        %v3917 = vld [vmem:[#allocation3 + $0x38] sm:$0xff]
        %v3918 = vadd.f32 %v3910, %v3880
        %v3919 = vadd.f32 %v3911, %v3883
        %v3920 = vadd.f32 %v3912, %v3888
        %v3921 = vadd.f32 %v3913, %v3891
        %v3922 = vadd.f32 %v3914, %v3896
        %v3923 = vadd.f32 %v3915, %v3899
        %v3924 = vadd.f32 %v3916, %v3904
        %v3925 = vadd.f32 %v3917, %v3907
        %3926 = vst [vmem:[#allocation3] sm:$0xff] %v3918
        %3927 = vst [vmem:[#allocation3 + $0x8] sm:$0xff] %v3919
        %3928 = vst [vmem:[#allocation3 + $0x10] sm:$0xff] %v3920
        %3929 = vst [vmem:[#allocation3 + $0x18] sm:$0xff] %v3921
        %3930 = vst [vmem:[#allocation3 + $0x20] sm:$0xff] %v3922
        %3931 = vst [vmem:[#allocation3 + $0x28] sm:$0xff] %v3923
        %3932 = vst [vmem:[#allocation3 + $0x30] sm:$0xff] %v3924
        %3933 = vst [vmem:[#allocation3 + $0x38] sm:$0xff] %v3925
        %v3934 = vld [vmem:[#allocation3] sm:$0xff]
        %v3935 = vld [vmem:[#allocation3 + $0x8] sm:$0xff]
        %v3936 = vld [vmem:[#allocation3 + $0x10] sm:$0xff]
        %v3937 = vld [vmem:[#allocation3 + $0x18] sm:$0xff]
        %v3938 = vld [vmem:[#allocation3 + $0x20] sm:$0xff]
        %v3939 = vld [vmem:[#allocation3 + $0x28] sm:$0xff]
        %v3940 = vld [vmem:[#allocation3 + $0x30] sm:$0xff]
        %v3941 = vld [vmem:[#allocation3 + $0x38] sm:$0xff]
        %v3942 = vld [vmem:[%s4] sm:$0x1]
        %v3944 = vlaneseq
        %v3945 = vshrl.u32 %v3944, 7
        %v3946 = vsub.s32 0, %v3945
        %v3947 = vrot.slane %v3942, %v3946
        %v3949 = vadd.f32 %v3934, %v3947
        %v3950 = vadd.f32 %v3935, %v3947
        %v3951 = vadd.f32 %v3936, %v3947
        %v3952 = vadd.f32 %v3937, %v3947
        %v3953 = vadd.f32 %v3938, %v3947
        %v3954 = vadd.f32 %v3939, %v3947
        %v3955 = vadd.f32 %v3940, %v3947
        %v3956 = vadd.f32 %v3941, %v3947
        %v3957 = vmax.f32 %v3949, 0.0
        %v3958 = vmax.f32 %v3950, 0.0
        %v3959 = vmax.f32 %v3951, 0.0
        %v3960 = vmax.f32 %v3952, 0.0
        %v3961 = vmax.f32 %v3953, 0.0
        %v3962 = vmax.f32 %v3954, 0.0
        %v3963 = vmax.f32 %v3955, 0.0
        %v3964 = vmax.f32 %v3956, 0.0
        %v3965 = vpack.c.bf16 %v3958, %v3957
        %v3966 = vpack.c.bf16 %v3960, %v3959
        %v3967 = vpack.c.bf16 %v3962, %v3961
        %v3968 = vpack.c.bf16 %v3964, %v3963
        %v3969 = vld [vmem:[%s5] sm:$0xf]
        %v3970 = vld [vmem:[%s5 + $0x4] sm:$0xf]
        %v3971 = vld [vmem:[%s5 + $0x8] sm:$0xf]
        %v3972 = vld [vmem:[%s5 + $0xc] sm:$0xf]
        %v3973 = vld [vmem:[%s5 + $0x10] sm:$0xf]
        %v3974 = vld [vmem:[%s5 + $0x14] sm:$0xf]
        %v3975 = vld [vmem:[%s5 + $0x18] sm:$0xf]
        %v3976 = vld [vmem:[%s5 + $0x1c] sm:$0xf]
        %v3977 = vld [vmem:[%s5 + $0x20] sm:$0xf]
        %v3978 = vld [vmem:[%s5 + $0x24] sm:$0xf]
        %v3979 = vld [vmem:[%s5 + $0x28] sm:$0xf]
        %v3980 = vld [vmem:[%s5 + $0x2c] sm:$0xf]
        %v3981 = vld [vmem:[%s5 + $0x30] sm:$0xf]
        %v3982 = vld [vmem:[%s5 + $0x34] sm:$0xf]
        %v3983 = vld [vmem:[%s5 + $0x38] sm:$0xf]
        %v3984 = vld [vmem:[%s5 + $0x3c] sm:$0xf]
        %v3985 = vld [vmem:[%s6] sm:$0x1]
        %v3987 = vlaneseq
        %v3988 = vshrl.u32 %v3987, 7
        %v3989 = vsub.s32 0, %v3988
        %v3990 = vrot.slane %v3985, %v3989
        %v4008 = vunpack.c.l.b16 %v3969
        %v4009 = vunpack.c.l.b16 %v3970
        %v4010 = vunpack.c.l.b16 %v3971
        %v4011 = vunpack.c.l.b16 %v3972
        %v4012 = vunpack.c.l.b16 %v3973
        %v4013 = vunpack.c.l.b16 %v3974
        %v4014 = vunpack.c.l.b16 %v3975
        %v4015 = vunpack.c.l.b16 %v3976
        %v4016 = vunpack.c.l.b16 %v3977
        %v4017 = vunpack.c.l.b16 %v3978
        %v4018 = vunpack.c.l.b16 %v3979
        %v4019 = vunpack.c.l.b16 %v3980
        %v4020 = vunpack.c.l.b16 %v3981
        %v4021 = vunpack.c.l.b16 %v3982
        %v4022 = vunpack.c.l.b16 %v3983
        %v4023 = vunpack.c.l.b16 %v3984
        %v4024 = vpack.c.b16 %v4009, %v4008
        %v4025 = vpack.c.b16 %v4011, %v4010
        %v4026 = vpack.c.b16 %v4013, %v4012
        %v4027 = vpack.c.b16 %v4015, %v4014
        %v4028 = vpack.c.b16 %v4017, %v4016
        %v4029 = vpack.c.b16 %v4019, %v4018
        %v4030 = vpack.c.b16 %v4021, %v4020
        %v4031 = vpack.c.b16 %v4023, %v4022
        %4040 = vmatprep.subr.bf16.mxu0 0
        %4041 = vmatpush1.bf16.msra.mxu0 %v4024
        %4042 = vmatprep.subr.bf16.mxu0 0
        %4043 = vmatpush1.bf16.msra.mxu0 %v4025
        %4044 = vmatprep.subr.bf16.mxu0 0
        %4045 = vmatpush1.bf16.msra.mxu0 %v4026
        %4046 = vmatprep.subr.bf16.mxu0 0
        %4047 = vmatpush1.bf16.msra.mxu0 %v4027
        %4048 = vmatprep.subr.bf16.mxu0 0
        %4049 = vmatpush1.bf16.msra.mxu0 %v4028
        %4050 = vmatprep.subr.bf16.mxu0 0
        %4051 = vmatpush1.bf16.msra.mxu0 %v4029
        %4052 = vmatprep.subr.bf16.mxu0 0
        %4053 = vmatpush1.bf16.msra.mxu0 %v4030
        %4054 = vmatprep.subr.bf16.mxu0 0
        %4055 = vmatpush1.bf16.msra.mxu0 %v4031
        %4056 = vmatprep.subr.bf16.mxu0 0
        %4057 = vmatpush1.bf16.msra.mxu0 0
        %4058 = vmatprep.subr.bf16.mxu0 0
        %4059 = vmatpush1.bf16.msra.mxu0 0
        %4060 = vmatprep.subr.bf16.mxu0 0
        %4061 = vmatpush1.bf16.msra.mxu0 0
        %4062 = vmatprep.subr.bf16.mxu0 0
        %4063 = vmatpush1.bf16.msra.mxu0 0
        %4064 = vmatprep.subr.bf16.mxu0 0
        %4065 = vmatpush1.bf16.msra.mxu0 0
        %4066 = vmatprep.subr.bf16.mxu0 0
        %4067 = vmatpush1.bf16.msra.mxu0 0
        %4068 = vmatprep.subr.bf16.mxu0 0
        %4069 = vmatpush1.bf16.msra.mxu0 0
        %4070 = vmatprep.subr.bf16.mxu0 0
        %4071 = vmatpush1.bf16.msra.mxu0 0
        %4072 = vmatprep.mubr.bf16.mxu0 0
        %4073 = vmatmul.mubr.bf16.gmra.mrb[0].mxu0 %v3965
        %v4074 = vpop.f32.mrb[0].mxu0
        %v4075 = vadd.f32 %v3990, %v4074
        %v4076 = vpop.f32.mrb[0].mxu0
        %v4077 = vpop.f32.mrb[0].mxu0
        %v4078 = vadd.f32 %v3990, %v4077
        %v4079 = vpop.f32.mrb[0].mxu0
        %4080 = vmatprep.mubr.bf16.mxu0 0
        %4081 = vmatmul.mubr.bf16.gmra.mrb[0].mxu0 %v3966
        %v4082 = vpop.f32.mrb[0].mxu0
        %v4083 = vadd.f32 %v3990, %v4082
        %v4084 = vpop.f32.mrb[0].mxu0
        %v4085 = vpop.f32.mrb[0].mxu0
        %v4086 = vadd.f32 %v3990, %v4085
        %v4087 = vpop.f32.mrb[0].mxu0
        %4088 = vmatprep.mubr.bf16.mxu0 0
        %4089 = vmatmul.mubr.bf16.gmra.mrb[0].mxu0 %v3967
        %v4090 = vpop.f32.mrb[0].mxu0
        %v4091 = vadd.f32 %v3990, %v4090
        %v4092 = vpop.f32.mrb[0].mxu0
        %v4093 = vpop.f32.mrb[0].mxu0
        %v4094 = vadd.f32 %v3990, %v4093
        %v4095 = vpop.f32.mrb[0].mxu0
        %4096 = vmatprep.mubr.bf16.mxu0 0
        %4097 = vmatmul.mubr.bf16.gmra.mrb[0].mxu0 %v3968
        %v4098 = vpop.f32.mrb[0].mxu0
        %v4099 = vadd.f32 %v3990, %v4098
        %v4100 = vpop.f32.mrb[0].mxu0
        %v4101 = vpop.f32.mrb[0].mxu0
        %v4102 = vadd.f32 %v3990, %v4101
        %v4103 = vpop.f32.mrb[0].mxu0
        %4104 = vdwg.mxu0
        %v4105 = vld [vmem:[%s330] sm:$0xf]
        %v4106 = vld [vmem:[%s330 + $0x4] sm:$0xf]
        %v4107 = vld [vmem:[%s330 + $0x8] sm:$0xf]
        %v4108 = vld [vmem:[%s330 + $0xc] sm:$0xf]
        %v4109 = vld [vmem:[%s330 + $0x10] sm:$0xf]
        %v4110 = vld [vmem:[%s330 + $0x14] sm:$0xf]
        %v4111 = vld [vmem:[%s330 + $0x18] sm:$0xf]
        %v4112 = vld [vmem:[%s330 + $0x1c] sm:$0xf]
        %v4113 = vld [vmem:[%s7] sm:$0xf]
        %v4114 = vld [vmem:[%s7 + $0x4] sm:$0xf]
        %v4115 = vld [vmem:[%s7 + $0x8] sm:$0xf]
        %v4116 = vld [vmem:[%s7 + $0xc] sm:$0xf]
        %v4117 = vld [vmem:[%s7 + $0x10] sm:$0xf]
        %v4118 = vld [vmem:[%s7 + $0x14] sm:$0xf]
        %v4119 = vld [vmem:[%s7 + $0x18] sm:$0xf]
        %v4120 = vld [vmem:[%s7 + $0x1c] sm:$0xf]
        %v4121 = vld [vmem:[%s7 + $0x20] sm:$0xf]
        %v4122 = vld [vmem:[%s7 + $0x24] sm:$0xf]
        %v4123 = vld [vmem:[%s7 + $0x28] sm:$0xf]
        %v4124 = vld [vmem:[%s7 + $0x2c] sm:$0xf]
        %v4125 = vld [vmem:[%s7 + $0x30] sm:$0xf]
        %v4126 = vld [vmem:[%s7 + $0x34] sm:$0xf]
        %v4127 = vld [vmem:[%s7 + $0x38] sm:$0xf]
        %v4128 = vld [vmem:[%s7 + $0x3c] sm:$0xf]
        %v4129 = vld [vmem:[%s8] sm:$0x1]
        %v4131 = vlaneseq
        %v4132 = vshrl.u32 %v4131, 7
        %v4133 = vsub.s32 0, %v4132
        %v4134 = vrot.slane %v4129, %v4133
        %v4144 = vunpack.c.l.b16 %v4105
        %v4145 = vunpack.c.l.b16 %v4106
        %v4146 = vunpack.c.l.b16 %v4107
        %v4147 = vunpack.c.l.b16 %v4108
        %v4148 = vunpack.c.l.b16 %v4109
        %v4149 = vunpack.c.l.b16 %v4110
        %v4150 = vunpack.c.l.b16 %v4111
        %v4151 = vunpack.c.l.b16 %v4112
        %v4152 = vpack.c.b16 %v4145, %v4144
        %v4153 = vpack.c.b16 %v4147, %v4146
        %v4154 = vpack.c.b16 %v4149, %v4148
        %v4155 = vpack.c.b16 %v4151, %v4150
        %v4176 = vunpack.c.l.b16 %v4113
        %v4177 = vunpack.c.l.b16 %v4114
        %v4178 = vunpack.c.l.b16 %v4115
        %v4179 = vunpack.c.l.b16 %v4116
        %v4180 = vunpack.c.l.b16 %v4117
        %v4181 = vunpack.c.l.b16 %v4118
        %v4182 = vunpack.c.l.b16 %v4119
        %v4183 = vunpack.c.l.b16 %v4120
        %v4184 = vunpack.c.l.b16 %v4121
        %v4185 = vunpack.c.l.b16 %v4122
        %v4186 = vunpack.c.l.b16 %v4123
        %v4187 = vunpack.c.l.b16 %v4124
        %v4188 = vunpack.c.l.b16 %v4125
        %v4189 = vunpack.c.l.b16 %v4126
        %v4190 = vunpack.c.l.b16 %v4127
        %v4191 = vunpack.c.l.b16 %v4128
        %v4192 = vpack.c.b16 %v4177, %v4176
        %v4193 = vpack.c.b16 %v4179, %v4178
        %v4194 = vpack.c.b16 %v4181, %v4180
        %v4195 = vpack.c.b16 %v4183, %v4182
        %v4196 = vpack.c.b16 %v4185, %v4184
        %v4197 = vpack.c.b16 %v4187, %v4186
        %v4198 = vpack.c.b16 %v4189, %v4188
        %v4199 = vpack.c.b16 %v4191, %v4190
        %4208 = vmatprep.subr.bf16.mxu0 0
        %4209 = vmatpush1.bf16.msra.mxu0 %v4192
        %4210 = vmatprep.subr.bf16.mxu0 0
        %4211 = vmatpush1.bf16.msra.mxu0 %v4193
        %4212 = vmatprep.subr.bf16.mxu0 0
        %4213 = vmatpush1.bf16.msra.mxu0 %v4194
        %4214 = vmatprep.subr.bf16.mxu0 0
        %4215 = vmatpush1.bf16.msra.mxu0 %v4195
        %4216 = vmatprep.subr.bf16.mxu0 0
        %4217 = vmatpush1.bf16.msra.mxu0 %v4196
        %4218 = vmatprep.subr.bf16.mxu0 0
        %4219 = vmatpush1.bf16.msra.mxu0 %v4197
        %4220 = vmatprep.subr.bf16.mxu0 0
        %4221 = vmatpush1.bf16.msra.mxu0 %v4198
        %4222 = vmatprep.subr.bf16.mxu0 0
        %4223 = vmatpush1.bf16.msra.mxu0 %v4199
        %4224 = vmatprep.subr.bf16.mxu0 0
        %4225 = vmatpush1.bf16.msra.mxu0 0
        %4226 = vmatprep.subr.bf16.mxu0 0
        %4227 = vmatpush1.bf16.msra.mxu0 0
        %4228 = vmatprep.subr.bf16.mxu0 0
        %4229 = vmatpush1.bf16.msra.mxu0 0
        %4230 = vmatprep.subr.bf16.mxu0 0
        %4231 = vmatpush1.bf16.msra.mxu0 0
        %4232 = vmatprep.subr.bf16.mxu0 0
        %4233 = vmatpush1.bf16.msra.mxu0 0
        %4234 = vmatprep.subr.bf16.mxu0 0
        %4235 = vmatpush1.bf16.msra.mxu0 0
        %4236 = vmatprep.subr.bf16.mxu0 0
        %4237 = vmatpush1.bf16.msra.mxu0 0
        %4238 = vmatprep.subr.bf16.mxu0 0
        %4239 = vmatpush1.bf16.msra.mxu0 0
        %4240 = vmatprep.mubr.bf16.mxu0 0
        %4241 = vmatmul.mubr.bf16.gmra.mrb[0].mxu0 %v4152
        %v4242 = vpop.f32.mrb[0].mxu0
        %v4243 = vadd.f32 %v4134, %v4242
        %v4244 = vpop.f32.mrb[0].mxu0
        %v4245 = vpop.f32.mrb[0].mxu0
        %v4246 = vadd.f32 %v4134, %v4245
        %v4247 = vpop.f32.mrb[0].mxu0
        %4248 = vmatprep.mubr.bf16.mxu0 0
        %4249 = vmatmul.mubr.bf16.gmra.mrb[0].mxu0 %v4153
        %v4250 = vpop.f32.mrb[0].mxu0
        %v4251 = vadd.f32 %v4134, %v4250
        %v4252 = vpop.f32.mrb[0].mxu0
        %v4253 = vpop.f32.mrb[0].mxu0
        %v4254 = vadd.f32 %v4134, %v4253
        %v4255 = vpop.f32.mrb[0].mxu0
        %4256 = vmatprep.mubr.bf16.mxu0 0
        %4257 = vmatmul.mubr.bf16.gmra.mrb[0].mxu0 %v4154
        %v4258 = vpop.f32.mrb[0].mxu0
        %v4259 = vadd.f32 %v4134, %v4258
        %v4260 = vpop.f32.mrb[0].mxu0
        %v4261 = vpop.f32.mrb[0].mxu0
        %v4262 = vadd.f32 %v4134, %v4261
        %v4263 = vpop.f32.mrb[0].mxu0
        %4264 = vmatprep.mubr.bf16.mxu0 0
        %4265 = vmatmul.mubr.bf16.gmra.mrb[0].mxu0 %v4155
        %v4266 = vpop.f32.mrb[0].mxu0
        %v4267 = vadd.f32 %v4134, %v4266
        %v4268 = vpop.f32.mrb[0].mxu0
        %v4269 = vpop.f32.mrb[0].mxu0
        %v4270 = vadd.f32 %v4134, %v4269
        %v4271 = vpop.f32.mrb[0].mxu0
        %4272 = vdwg.mxu0
        %v4273 = vadd.f32 %v4075, %v4243
        %v4274 = vadd.f32 %v4078, %v4246
        %v4275 = vadd.f32 %v4083, %v4251
        %v4276 = vadd.f32 %v4086, %v4254
        %v4277 = vadd.f32 %v4091, %v4259
        %v4278 = vadd.f32 %v4094, %v4262
        %v4279 = vadd.f32 %v4099, %v4267
        %v4280 = vadd.f32 %v4102, %v4270
        %v4281 = vmax.f32 %v4273, 0.0
        %v4282 = vmax.f32 %v4274, 0.0
        %v4283 = vmax.f32 %v4275, 0.0
        %v4284 = vmax.f32 %v4276, 0.0
        %v4285 = vmax.f32 %v4277, 0.0
        %v4286 = vmax.f32 %v4278, 0.0
        %v4287 = vmax.f32 %v4279, 0.0
        %v4288 = vmax.f32 %v4280, 0.0
        %v4289 = vpack.c.bf16 %v4281, %v4281
        %v4290 = vpack.c.bf16 %v4282, %v4282
        %v4291 = vpack.c.bf16 %v4283, %v4283
        %v4292 = vpack.c.bf16 %v4284, %v4284
        %v4293 = vpack.c.bf16 %v4285, %v4285
        %v4294 = vpack.c.bf16 %v4286, %v4286
        %v4295 = vpack.c.bf16 %v4287, %v4287
        %v4296 = vpack.c.bf16 %v4288, %v4288
        %4297 = vst [vmem:[%s325] sm:$0xf] %v4289
        %4298 = vst [vmem:[%s325 + $0x4] sm:$0xf] %v4290
        %4299 = vst [vmem:[%s325 + $0x8] sm:$0xf] %v4291
        %4300 = vst [vmem:[%s325 + $0xc] sm:$0xf] %v4292
        %4301 = vst [vmem:[%s325 + $0x10] sm:$0xf] %v4293
        %4302 = vst [vmem:[%s325 + $0x14] sm:$0xf] %v4294
        %4303 = vst [vmem:[%s325 + $0x18] sm:$0xf] %v4295
        %4304 = vst [vmem:[%s325 + $0x1c] sm:$0xf] %v4296
        %s4305 = sand.u32 %s225, 1
        %s4306 = scalar_lea.sflag [#allocation5], %s4305
        %s4307 = sand.u32 %s225, 1
        %s4308 = smul.addr %s4307, 32
        %s4309 = scalar_lea.vmem [#allocation4], %s4308
        // Predicated region
        $region57: #{bottleneck_apply_nhwc.1} parent=55 // pred_check
          %p4310 = pneg %p235
        $region58: #{bottleneck_apply_nhwc.1} parent=55 // pred_check_branch
          %4312 = sbr.rel (%p4310) target = $region60
        $region59: #{bottleneck_apply_nhwc.1} parent=55 // pred_region
          %s4314 = ssub.s32 512, 512
          %4315 = vsyncadd %s4306, %s4314
          %s4316 = smul.addr %s23, 8
          %s4317 = smul.addr %s4316, 64
          %s4318 = scalar_lea.hbm %s9, %s4317
          %s4319 = sshll.u32 %s4309, 4
          %s4320 = int_to_ptr.vmem [resolvable:$true] %s4319
          %4325 = dma.vmem_to_hbm [thread:$0]  %s4320, 512, %s4318, %s4306, 64, 64, 4
        $region60: #{bottleneck_apply_nhwc.1} parent=55 // pred_fallthru
          _
      $region56: #{bottleneck_apply_nhwc.1} parent=5 // pred_fallthru
        _
      %p4326 = scmp.le.s32.totalorder 2, %s18
      // Predicated region
      $region61: #{bottleneck_apply_nhwc.1} parent=5 // pred_check
        %p4327 = pneg %p4326
      $region62: #{bottleneck_apply_nhwc.1} parent=5 // pred_check_branch
        %4329 = sbr.rel (%p4327) target = $region64
      $region63: #{bottleneck_apply_nhwc.1} parent=5 // pred_region
        %s4330 = ssub.s32 %s18, 2
        // Predicated region
        $region65: #{bottleneck_apply_nhwc.1} parent=63 // pred_check
          %p4331 = pneg %p241
        $region66: #{bottleneck_apply_nhwc.1} parent=63 // pred_check_branch
          %4333 = sbr.rel (%p4331) target = $region68
        $region67: #{bottleneck_apply_nhwc.1} parent=63 // pred_region
          %s4334 = sand.u32 %s226, 1
          %s4335 = scalar_lea.sflag [#allocation5], %s4334
          %s4336 = sand.u32 %s226, 1
          %s4337 = smul.addr %s4336, 32
          %s4338 = scalar_lea.vmem [#allocation4], %s4337
          %4339 = dma.done %s4335, 512
        $region68: #{bottleneck_apply_nhwc.1} parent=63 // pred_fallthru
          _
      $region64: #{bottleneck_apply_nhwc.1} parent=5 // pred_fallthru
        _
    $region6: #{bottleneck_apply_nhwc.1} parent=1 // loop_footer
      %s22 = sadd.s32 1, %s18
    $region7: #{bottleneck_apply_nhwc.1} parent=1 // loop_footer_branch
      %17 = sbr.rel target = $region3
    $region8: #{bottleneck_apply_nhwc.1} parent=1 // loop_exit
      _
    %4340 = vsyncpa [#allocation5], 1
    %s4341 = scalar_lea.sflag [#allocation5], 1
    %4342 = vsyncpa %s4341, 1

</llo_original>
